<compile_context>
chip_gen: v6e
topology: v6e:2x2x1
jax: 0.10.0
libtpu: 0.0.40
codegen_flags: <defaults>
</compile_context>

<pallas_src>
import functools

import jax
import jax.numpy as jnp
import numpy as np
from jax import lax
from jax.experimental import pallas as pl
from jax.experimental.pallas import tpu as pltpu


def _block_1w1a_kernel(x_ref, wdw_ref, wpw_ref, t1_ref, sgn1_ref, s2_ref, b2_ref,
                       o_ref, *, stride, ho, wo, use_mxu, mac_dtype):
    bt = x_ref.shape[0]
    cin = x_ref.shape[3]
    cout = o_ref.shape[3]

    # ---- depthwise 3x3 (groups == Cin): 9 ref-sliced taps, VPU MAC ----
    # x_ref already holds sign(x) in {-1,0,+1} bf16 (wrapper pre-signed), so each tap
    # is a plain VMEM load; accumulation is exact (integer partial sums, |acc| <= 9).
    wdw = wdw_ref[...].astype(mac_dtype)                       # (3, 3, cin), +-1
    acc = jnp.zeros((bt, ho, wo, cin), mac_dtype)
    for kh in range(3):
        for kw in range(3):
            if stride == 1:
                tap = x_ref[:, kh:kh + ho, kw:kw + wo, :]      # static ref slice
            else:
                tap = x_ref[:, pl.ds(kh, ho, stride), pl.ds(kw, wo, stride), :]
            acc = acc + tap.astype(mac_dtype) * wdw[kh, kw, :].reshape(1, 1, 1, cin)

    # ---- BN1 + re-binarize as a per-channel threshold compare ----
    # sign(acc*scale1 + shift1) == sgn1 * sign(acc - t1); edge cases (scale==0, ties)
    # are encoded in t1 (+-inf / nan) by the wrapper. Compare in f32 (acc is integral).
    m = bt * ho * wo
    accf = acc.reshape(m, cin).astype(jnp.float32)             # leading-dim collapse
    t1 = t1_ref[...]                                           # (1, cin) f32
    h1b = ((accf > t1).astype(jnp.bfloat16) -
           (accf < t1).astype(jnp.bfloat16)) * sgn1_ref[...]   # (m, cin) in {-1,0,+1}

    # ---- pointwise 1x1 binary conv ----
    if use_mxu:
        # bf16 x bf16 -> f32 accumulate on the MXU; exact for +-1/0 inputs.
        y = jnp.dot(h1b, wpw_ref[...], preferred_element_type=jnp.float32)
    else:
        # Tiny Cin: VPU broadcast-MAC over Cin (MXU would be >90% zero padding).
        wpw = wpw_ref[...].astype(jnp.float32)                 # (cin, cout)
        y = jnp.zeros((m, cout), jnp.float32)
        for c in range(cin):
            y = y + h1b[:, c:c + 1].astype(jnp.float32) * wpw[c:c + 1, :]

    # ---- BN2 (folded inference scale/shift) ----
    y = y * s2_ref[...] + b2_ref[...]
    o_ref[...] = y.reshape(bt, ho, wo, cout).astype(o_ref.dtype)


def block_1w1a_forward(x_nchw, w_dw, w_pw, bn1, bn2, *, stride=1, eps=1e-5):
    """x_nchw: (N, Cin, H, W); w_dw: (Cin, 1, 3, 3); w_pw: (Cout, Cin, 1, 1).
    bn1/bn2 = (gamma, beta, running_mean, running_var). Returns NCHW f32 output."""
    n, cin, h, w = x_nchw.shape
    cout = w_pw.shape[0]
    ho = (h + 2 - 3) // stride + 1
    wo = (w + 2 - 3) // stride + 1
    hp, wp = h + 2, w + 2

    # ---- hardware probe (generation-dependent sizing / dtypes) ----
    try:
        vmem_phys = int(pltpu.get_tpu_info().vmem_capacity_bytes)
    except Exception:
        vmem_phys = 0
    if vmem_phys <= 0:
        vmem_phys = 64 << 20                      # v7x-safe fallback
    try:
        kind = jax.devices()[0].device_kind.lower()
    except Exception:
        kind = ""
    # v5e and older have no bf16 VALU -> accumulate the depthwise MAC in f32 explicitly.
    mac_f32 = any(t in kind for t in ("v5 lite", "v5e", "v5litepod", "v4", "v3", "v2"))
    mac_dtype = jnp.float32 if mac_f32 else jnp.bfloat16
    mac_bytes = 4 if mac_f32 else 2

    # ---- glue (one fused XLA pass over x): sign in f32, NHWC, halo pad, bf16 ----
    xs = jnp.sign(jnp.transpose(x_nchw, (0, 2, 3, 1))).astype(jnp.bfloat16)  # +-1 exact

    wdw = jnp.sign(jnp.transpose(w_dw[:, 0, :, :], (1, 2, 0))).astype(jnp.bfloat16)
    wpw = jnp.sign(jnp.transpose(w_pw[:, :, 0, 0], (1, 0))).astype(jnp.bfloat16)

    # BN1 folded into a per-channel sign threshold: sign(a*s + b) == sgn * sign(a - t)
    g1, be1, m1, v1 = bn1
    s1 = (g1 / jnp.sqrt(v1 + eps)).astype(jnp.float32)
    sh1 = (be1 - m1 * s1).astype(jnp.float32)
    t1 = jnp.where(s1 != 0,
                   -sh1 / jnp.where(s1 != 0, s1, 1.0),
                   jnp.where(sh1 > 0, -jnp.inf,
                             jnp.where(sh1 < 0, jnp.inf, jnp.nan)))
    sgn1 = jnp.where(s1 != 0, jnp.sign(s1), 1.0).astype(jnp.bfloat16)
    t1 = t1.astype(jnp.float32)[None, :]          # (1, cin)
    sgn1 = sgn1[None, :]                          # (1, cin)

    # BN2 folded inference scale/shift (unpadded: exactly cout channels)
    g2, be2, m2, v2 = bn2
    s2 = (g2 / jnp.sqrt(v2 + eps)).astype(jnp.float32)
    sh2 = (be2 - m2 * s2).astype(jnp.float32)
    s2 = s2[None, :]                              # (1, cout)
    sh2 = sh2[None, :]

    # ---- batch tiling: VMEM-honest sizing, >=2 grid steps, no divisibility req ----
    in_bytes = hp * wp * cin * 2                  # bf16 input tile per batch element
    out_bytes = ho * wo * cout * 4                # f32 output tile per batch element
    tmp_bytes = ho * wo * (cin * (2 * mac_bytes + 4 + 2) + cout * 8)   # acc/taps/h1b/y
    per_elem = 2 * in_bytes + 2 * out_bytes + tmp_bytes                # x2 = dbl buffer
    fixed = 2 * ((9 * cin + cin * cout) * 2 + 2 * (cin + cout) * 4) + (2 << 20)

    budget = min(vmem_phys // 3, 24 << 20)        # v7x: ~21 MiB, v5e/v6e: 24 MiB
    target_steps = 4 if n >= 4 else (2 if n >= 2 else 1)
    b_cap = max(1, -(-n // target_steps))         # keep >= target_steps grid steps
    b_tile = 1
    for b in range(1, min(n, b_cap) + 1):
        if b * per_elem + fixed <= budget:
            b_tile = b
    n_pad = -(-n // b_tile) * b_tile              # batch padded; no divisor constraint
    grid = (n_pad // b_tile,)

    x_pad = jnp.pad(xs, ((0, n_pad - n), (1, 1), (1, 1), (0, 0)))   # halo + batch pad

    need = b_tile * per_elem + fixed
    vmem_limit = int(min(vmem_phys * 3 // 4, max(need + (8 << 20), 32 << 20)))

    use_mxu = cin >= 32                           # lowered threshold (review feedback)
    kernel = functools.partial(_block_1w1a_kernel, stride=stride, ho=ho, wo=wo,
                               use_mxu=use_mxu, mac_dtype=mac_dtype)

    out_nhwc = pl.pallas_call(
        kernel,
        out_shape=jax.ShapeDtypeStruct((n_pad, ho, wo, cout), jnp.float32),
        grid_spec=pltpu.PrefetchScalarGridSpec(
            num_scalar_prefetch=0,
            grid=grid,                                               # batch blocks
            in_specs=[
                pl.BlockSpec((b_tile, hp, wp, cin), lambda i: (i, 0, 0, 0)),
                pl.BlockSpec((3, 3, cin), lambda i: (0, 0, 0)),
                pl.BlockSpec((cin, cout), lambda i: (0, 0)),
                pl.BlockSpec((1, cin), lambda i: (0, 0)),
                pl.BlockSpec((1, cin), lambda i: (0, 0)),
                pl.BlockSpec((1, cout), lambda i: (0, 0)),
                pl.BlockSpec((1, cout), lambda i: (0, 0)),
            ],
            out_specs=pl.BlockSpec((b_tile, ho, wo, cout), lambda i: (i, 0, 0, 0)),
        ),
        compiler_params=pltpu.CompilerParams(
            dimension_semantics=("parallel",),    # batch axis independent -> megacore
            vmem_limit_bytes=vmem_limit,
        ),
    )(x_pad, wdw, wpw, t1, sgn1, s2, sh2)

    out_nhwc = out_nhwc[:n]                       # drop batch padding
    return jnp.transpose(out_nhwc, (0, 3, 1, 2))  # back to NCHW


def _ref_forward(x, w_dw, w_pw, bn1, bn2, *, stride=1, eps=1e-5):
    """Pure-JAX reference (matches the PyTorch module in eval mode)."""
    cin = x.shape[1]

    def bn(z, p):
        g, b, m, v = p
        return ((z - m[None, :, None, None]) / jnp.sqrt(v + eps)[None, :, None, None]
                * g[None, :, None, None] + b[None, :, None, None])

    out = lax.conv_general_dilated(jnp.sign(x), jnp.sign(w_dw), (stride, stride),
                                   ((1, 1), (1, 1)),
                                   dimension_numbers=('NCHW', 'OIHW', 'NCHW'),
                                   feature_group_count=cin)
    out = bn(out, bn1)
    out = lax.conv_general_dilated(jnp.sign(out), jnp.sign(w_pw), (1, 1),
                                   ((0, 0), (0, 0)),
                                   dimension_numbers=('NCHW', 'OIHW', 'NCHW'))
    out = bn(out, bn2)
    return out


if __name__ == "__main__":
    key = jax.random.PRNGKey(0)
    ks = jax.random.split(key, 12)

    N, Cin, Cout, H, W = 2, 8, 16, 16, 16
    stride = 1

    x = jax.random.normal(ks[0], (N, Cin, H, W), jnp.float32)
    w_dw = jax.random.normal(ks[1], (Cin, 1, 3, 3), jnp.float32)     # conv1 (depthwise)
    w_pw = jax.random.normal(ks[2], (Cout, Cin, 1, 1), jnp.float32)  # conv2 (pointwise)

    bn1 = (1.0 + 0.1 * jax.random.normal(ks[3], (Cin,), jnp.float32),   # gamma
           0.1 * jax.random.normal(ks[4], (Cin,), jnp.float32),         # beta
           0.1 * jax.random.normal(ks[5], (Cin,), jnp.float32),         # running_mean
           1.0 + 0.1 * jnp.abs(jax.random.normal(ks[6], (Cin,), jnp.float32)))  # var
    bn2 = (1.0 + 0.1 * jax.random.normal(ks[7], (Cout,), jnp.float32),
           0.1 * jax.random.normal(ks[8], (Cout,), jnp.float32),
           0.1 * jax.random.normal(ks[9], (Cout,), jnp.float32),
           1.0 + 0.1 * jnp.abs(jax.random.normal(ks[10], (Cout,), jnp.float32)))

    out = block_1w1a_forward(x, w_dw, w_pw, bn1, bn2, stride=stride)
    out = jax.block_until_ready(out)

    ref = _ref_forward(x, w_dw, w_pw, bn1, bn2, stride=stride)
    np.testing.assert_allclose(np.asarray(out), np.asarray(ref), rtol=1e-4, atol=1e-4)

    print("KERNEL_OK")
</pallas_src>

<mosaic_0001>
module attributes {stable_mosaic.version = 11 : i64} {
  func.func @_block_1w1a_kernel(%arg0: i32, %arg1: memref<1x18x18x8xbf16, #tpu.memory_space<vmem>>, %arg2: memref<3x3x8xbf16, #tpu.memory_space<vmem>>, %arg3: memref<8x16xbf16, #tpu.memory_space<vmem>>, %arg4: memref<1x8xf32, #tpu.memory_space<vmem>>, %arg5: memref<1x8xbf16, #tpu.memory_space<vmem>>, %arg6: memref<1x16xf32, #tpu.memory_space<vmem>>, %arg7: memref<1x16xf32, #tpu.memory_space<vmem>>, %arg8: memref<1x16x16x16xf32, #tpu.memory_space<vmem>>) attributes {dimension_semantics = [#tpu.dimension_semantics<parallel>], iteration_bounds = array<i64: 2>, scalar_prefetch = 0 : i64, scratch_operands = 0 : i64, tpu.core_type = #tpu.core_type<tc>, window_params = [{transform_indices = @transform_0, window_bounds = array<i64: 1, 18, 18, 8>}, {pipeline_mode = #tpu.pipeline_mode<synchronous>, transform_indices = @transform_1, window_bounds = array<i64: 3, 3, 8>}, {pipeline_mode = #tpu.pipeline_mode<synchronous>, transform_indices = @transform_2, window_bounds = array<i64: 8, 16>}, {pipeline_mode = #tpu.pipeline_mode<synchronous>, transform_indices = @transform_3, window_bounds = array<i64: 1, 8>}, {pipeline_mode = #tpu.pipeline_mode<synchronous>, transform_indices = @transform_4, window_bounds = array<i64: 1, 8>}, {pipeline_mode = #tpu.pipeline_mode<synchronous>, transform_indices = @transform_5, window_bounds = array<i64: 1, 16>}, {pipeline_mode = #tpu.pipeline_mode<synchronous>, transform_indices = @transform_6, window_bounds = array<i64: 1, 16>}, {transform_indices = @transform_7, window_bounds = array<i64: 1, 16, 16, 16>}]} {
    %c0 = arith.constant 0 : index
    %c0_0 = arith.constant 0 : index
    %c0_1 = arith.constant 0 : index
    %0 = vector.load %arg2[%c0, %c0_0, %c0_1] : memref<3x3x8xbf16, #tpu.memory_space<vmem>>, vector<3x3x8xbf16>
    %cst = arith.constant 0.000000e+00 : bf16
    %1 = vector.broadcast %cst : bf16 to vector<1x16x16x8xbf16>
    %c0_2 = arith.constant 0 : index
    %c0_3 = arith.constant 0 : index
    %c0_4 = arith.constant 0 : index
    %c0_5 = arith.constant 0 : index
    %2 = vector.load %arg1[%c0_2, %c0_3, %c0_4, %c0_5] : memref<1x18x18x8xbf16, #tpu.memory_space<vmem>>, vector<1x16x16x8xbf16>
    %3 = vector.extract_strided_slice %0 {offsets = [0, 0, 0], sizes = [1, 1, 8], strides = [1, 1, 1]} : vector<3x3x8xbf16> to vector<1x1x8xbf16>
    %4 = vector.shape_cast %3 : vector<1x1x8xbf16> to vector<8xbf16>
    %5 = vector.shape_cast %4 : vector<8xbf16> to vector<1x1x1x8xbf16>
    %6 = vector.broadcast %5 : vector<1x1x1x8xbf16> to vector<1x16x16x8xbf16>
    %7 = arith.mulf %2, %6 : vector<1x16x16x8xbf16>
    %8 = arith.addf %1, %7 : vector<1x16x16x8xbf16>
    %c0_6 = arith.constant 0 : index
    %c0_7 = arith.constant 0 : index
    %c1 = arith.constant 1 : index
    %c0_8 = arith.constant 0 : index
    %9 = vector.load %arg1[%c0_6, %c0_7, %c1, %c0_8] : memref<1x18x18x8xbf16, #tpu.memory_space<vmem>>, vector<1x16x16x8xbf16>
    %10 = vector.extract_strided_slice %0 {offsets = [0, 1, 0], sizes = [1, 1, 8], strides = [1, 1, 1]} : vector<3x3x8xbf16> to vector<1x1x8xbf16>
    %11 = vector.shape_cast %10 : vector<1x1x8xbf16> to vector<8xbf16>
    %12 = vector.shape_cast %11 : vector<8xbf16> to vector<1x1x1x8xbf16>
    %13 = vector.broadcast %12 : vector<1x1x1x8xbf16> to vector<1x16x16x8xbf16>
    %14 = arith.mulf %9, %13 : vector<1x16x16x8xbf16>
    %15 = arith.addf %8, %14 : vector<1x16x16x8xbf16>
    %c0_9 = arith.constant 0 : index
    %c0_10 = arith.constant 0 : index
    %c2 = arith.constant 2 : index
    %c0_11 = arith.constant 0 : index
    %16 = vector.load %arg1[%c0_9, %c0_10, %c2, %c0_11] : memref<1x18x18x8xbf16, #tpu.memory_space<vmem>>, vector<1x16x16x8xbf16>
    %17 = vector.extract_strided_slice %0 {offsets = [0, 2, 0], sizes = [1, 1, 8], strides = [1, 1, 1]} : vector<3x3x8xbf16> to vector<1x1x8xbf16>
    %18 = vector.shape_cast %17 : vector<1x1x8xbf16> to vector<8xbf16>
    %19 = vector.shape_cast %18 : vector<8xbf16> to vector<1x1x1x8xbf16>
    %20 = vector.broadcast %19 : vector<1x1x1x8xbf16> to vector<1x16x16x8xbf16>
    %21 = arith.mulf %16, %20 : vector<1x16x16x8xbf16>
    %22 = arith.addf %15, %21 : vector<1x16x16x8xbf16>
    %c0_12 = arith.constant 0 : index
    %c1_13 = arith.constant 1 : index
    %c0_14 = arith.constant 0 : index
    %c0_15 = arith.constant 0 : index
    %23 = vector.load %arg1[%c0_12, %c1_13, %c0_14, %c0_15] : memref<1x18x18x8xbf16, #tpu.memory_space<vmem>>, vector<1x16x16x8xbf16>
    %24 = vector.extract_strided_slice %0 {offsets = [1, 0, 0], sizes = [1, 1, 8], strides = [1, 1, 1]} : vector<3x3x8xbf16> to vector<1x1x8xbf16>
    %25 = vector.shape_cast %24 : vector<1x1x8xbf16> to vector<8xbf16>
    %26 = vector.shape_cast %25 : vector<8xbf16> to vector<1x1x1x8xbf16>
    %27 = vector.broadcast %26 : vector<1x1x1x8xbf16> to vector<1x16x16x8xbf16>
    %28 = arith.mulf %23, %27 : vector<1x16x16x8xbf16>
    %29 = arith.addf %22, %28 : vector<1x16x16x8xbf16>
    %c0_16 = arith.constant 0 : index
    %c1_17 = arith.constant 1 : index
    %c1_18 = arith.constant 1 : index
    %c0_19 = arith.constant 0 : index
    %30 = vector.load %arg1[%c0_16, %c1_17, %c1_18, %c0_19] : memref<1x18x18x8xbf16, #tpu.memory_space<vmem>>, vector<1x16x16x8xbf16>
    %31 = vector.extract_strided_slice %0 {offsets = [1, 1, 0], sizes = [1, 1, 8], strides = [1, 1, 1]} : vector<3x3x8xbf16> to vector<1x1x8xbf16>
    %32 = vector.shape_cast %31 : vector<1x1x8xbf16> to vector<8xbf16>
    %33 = vector.shape_cast %32 : vector<8xbf16> to vector<1x1x1x8xbf16>
    %34 = vector.broadcast %33 : vector<1x1x1x8xbf16> to vector<1x16x16x8xbf16>
    %35 = arith.mulf %30, %34 : vector<1x16x16x8xbf16>
    %36 = arith.addf %29, %35 : vector<1x16x16x8xbf16>
    %c0_20 = arith.constant 0 : index
    %c1_21 = arith.constant 1 : index
    %c2_22 = arith.constant 2 : index
    %c0_23 = arith.constant 0 : index
    %37 = vector.load %arg1[%c0_20, %c1_21, %c2_22, %c0_23] : memref<1x18x18x8xbf16, #tpu.memory_space<vmem>>, vector<1x16x16x8xbf16>
    %38 = vector.extract_strided_slice %0 {offsets = [1, 2, 0], sizes = [1, 1, 8], strides = [1, 1, 1]} : vector<3x3x8xbf16> to vector<1x1x8xbf16>
    %39 = vector.shape_cast %38 : vector<1x1x8xbf16> to vector<8xbf16>
    %40 = vector.shape_cast %39 : vector<8xbf16> to vector<1x1x1x8xbf16>
    %41 = vector.broadcast %40 : vector<1x1x1x8xbf16> to vector<1x16x16x8xbf16>
    %42 = arith.mulf %37, %41 : vector<1x16x16x8xbf16>
    %43 = arith.addf %36, %42 : vector<1x16x16x8xbf16>
    %c0_24 = arith.constant 0 : index
    %c2_25 = arith.constant 2 : index
    %c0_26 = arith.constant 0 : index
    %c0_27 = arith.constant 0 : index
    %44 = vector.load %arg1[%c0_24, %c2_25, %c0_26, %c0_27] : memref<1x18x18x8xbf16, #tpu.memory_space<vmem>>, vector<1x16x16x8xbf16>
    %45 = vector.extract_strided_slice %0 {offsets = [2, 0, 0], sizes = [1, 1, 8], strides = [1, 1, 1]} : vector<3x3x8xbf16> to vector<1x1x8xbf16>
    %46 = vector.shape_cast %45 : vector<1x1x8xbf16> to vector<8xbf16>
    %47 = vector.shape_cast %46 : vector<8xbf16> to vector<1x1x1x8xbf16>
    %48 = vector.broadcast %47 : vector<1x1x1x8xbf16> to vector<1x16x16x8xbf16>
    %49 = arith.mulf %44, %48 : vector<1x16x16x8xbf16>
    %50 = arith.addf %43, %49 : vector<1x16x16x8xbf16>
    %c0_28 = arith.constant 0 : index
    %c2_29 = arith.constant 2 : index
    %c1_30 = arith.constant 1 : index
    %c0_31 = arith.constant 0 : index
    %51 = vector.load %arg1[%c0_28, %c2_29, %c1_30, %c0_31] : memref<1x18x18x8xbf16, #tpu.memory_space<vmem>>, vector<1x16x16x8xbf16>
    %52 = vector.extract_strided_slice %0 {offsets = [2, 1, 0], sizes = [1, 1, 8], strides = [1, 1, 1]} : vector<3x3x8xbf16> to vector<1x1x8xbf16>
    %53 = vector.shape_cast %52 : vector<1x1x8xbf16> to vector<8xbf16>
    %54 = vector.shape_cast %53 : vector<8xbf16> to vector<1x1x1x8xbf16>
    %55 = vector.broadcast %54 : vector<1x1x1x8xbf16> to vector<1x16x16x8xbf16>
    %56 = arith.mulf %51, %55 : vector<1x16x16x8xbf16>
    %57 = arith.addf %50, %56 : vector<1x16x16x8xbf16>
    %c0_32 = arith.constant 0 : index
    %c2_33 = arith.constant 2 : index
    %c2_34 = arith.constant 2 : index
    %c0_35 = arith.constant 0 : index
    %58 = vector.load %arg1[%c0_32, %c2_33, %c2_34, %c0_35] : memref<1x18x18x8xbf16, #tpu.memory_space<vmem>>, vector<1x16x16x8xbf16>
    %59 = vector.extract_strided_slice %0 {offsets = [2, 2, 0], sizes = [1, 1, 8], strides = [1, 1, 1]} : vector<3x3x8xbf16> to vector<1x1x8xbf16>
    %60 = vector.shape_cast %59 : vector<1x1x8xbf16> to vector<8xbf16>
    %61 = vector.shape_cast %60 : vector<8xbf16> to vector<1x1x1x8xbf16>
    %62 = vector.broadcast %61 : vector<1x1x1x8xbf16> to vector<1x16x16x8xbf16>
    %63 = arith.mulf %58, %62 : vector<1x16x16x8xbf16>
    %64 = arith.addf %57, %63 : vector<1x16x16x8xbf16>
    %65 = vector.shape_cast %64 : vector<1x16x16x8xbf16> to vector<256x8xbf16>
    %66 = arith.extf %65 : vector<256x8xbf16> to vector<256x8xf32>
    %c0_36 = arith.constant 0 : index
    %c0_37 = arith.constant 0 : index
    %67 = vector.load %arg4[%c0_36, %c0_37] : memref<1x8xf32, #tpu.memory_space<vmem>>, vector<1x8xf32>
    %68 = vector.broadcast %67 : vector<1x8xf32> to vector<256x8xf32>
    %69 = arith.cmpf ogt, %66, %68 : vector<256x8xf32>
    %70 = arith.extui %69 : vector<256x8xi1> to vector<256x8xi32>
    %71 = arith.sitofp %70 : vector<256x8xi32> to vector<256x8xf32>
    %72 = arith.truncf %71 : vector<256x8xf32> to vector<256x8xbf16>
    %73 = vector.broadcast %67 : vector<1x8xf32> to vector<256x8xf32>
    %74 = arith.cmpf olt, %66, %73 : vector<256x8xf32>
    %75 = arith.extui %74 : vector<256x8xi1> to vector<256x8xi32>
    %76 = arith.sitofp %75 : vector<256x8xi32> to vector<256x8xf32>
    %77 = arith.truncf %76 : vector<256x8xf32> to vector<256x8xbf16>
    %78 = arith.subf %72, %77 : vector<256x8xbf16>
    %c0_38 = arith.constant 0 : index
    %c0_39 = arith.constant 0 : index
    %79 = vector.load %arg5[%c0_38, %c0_39] : memref<1x8xbf16, #tpu.memory_space<vmem>>, vector<1x8xbf16>
    %80 = vector.broadcast %79 : vector<1x8xbf16> to vector<256x8xbf16>
    %81 = arith.mulf %78, %80 : vector<256x8xbf16>
    %c0_40 = arith.constant 0 : index
    %c0_41 = arith.constant 0 : index
    %82 = vector.load %arg3[%c0_40, %c0_41] : memref<8x16xbf16, #tpu.memory_space<vmem>>, vector<8x16xbf16>
    %83 = arith.extf %82 : vector<8x16xbf16> to vector<8x16xf32>
    %cst_42 = arith.constant 0.000000e+00 : f32
    %84 = vector.broadcast %cst_42 : f32 to vector<256x16xf32>
    %85 = vector.extract_strided_slice %81 {offsets = [0, 0], sizes = [256, 1], strides = [1, 1]} : vector<256x8xbf16> to vector<256x1xbf16>
    %86 = arith.extf %85 : vector<256x1xbf16> to vector<256x1xf32>
    %87 = vector.extract_strided_slice %83 {offsets = [0, 0], sizes = [1, 16], strides = [1, 1]} : vector<8x16xf32> to vector<1x16xf32>
    %88 = vector.broadcast %86 : vector<256x1xf32> to vector<256x16xf32>
    %89 = vector.broadcast %87 : vector<1x16xf32> to vector<256x16xf32>
    %90 = arith.mulf %88, %89 : vector<256x16xf32>
    %91 = arith.addf %84, %90 : vector<256x16xf32>
    %92 = vector.extract_strided_slice %81 {offsets = [0, 1], sizes = [256, 1], strides = [1, 1]} : vector<256x8xbf16> to vector<256x1xbf16>
    %93 = arith.extf %92 : vector<256x1xbf16> to vector<256x1xf32>
    %94 = vector.extract_strided_slice %83 {offsets = [1, 0], sizes = [1, 16], strides = [1, 1]} : vector<8x16xf32> to vector<1x16xf32>
    %95 = vector.broadcast %93 : vector<256x1xf32> to vector<256x16xf32>
    %96 = vector.broadcast %94 : vector<1x16xf32> to vector<256x16xf32>
    %97 = arith.mulf %95, %96 : vector<256x16xf32>
    %98 = arith.addf %91, %97 : vector<256x16xf32>
    %99 = vector.extract_strided_slice %81 {offsets = [0, 2], sizes = [256, 1], strides = [1, 1]} : vector<256x8xbf16> to vector<256x1xbf16>
    %100 = arith.extf %99 : vector<256x1xbf16> to vector<256x1xf32>
    %101 = vector.extract_strided_slice %83 {offsets = [2, 0], sizes = [1, 16], strides = [1, 1]} : vector<8x16xf32> to vector<1x16xf32>
    %102 = vector.broadcast %100 : vector<256x1xf32> to vector<256x16xf32>
    %103 = vector.broadcast %101 : vector<1x16xf32> to vector<256x16xf32>
    %104 = arith.mulf %102, %103 : vector<256x16xf32>
    %105 = arith.addf %98, %104 : vector<256x16xf32>
    %106 = vector.extract_strided_slice %81 {offsets = [0, 3], sizes = [256, 1], strides = [1, 1]} : vector<256x8xbf16> to vector<256x1xbf16>
    %107 = arith.extf %106 : vector<256x1xbf16> to vector<256x1xf32>
    %108 = vector.extract_strided_slice %83 {offsets = [3, 0], sizes = [1, 16], strides = [1, 1]} : vector<8x16xf32> to vector<1x16xf32>
    %109 = vector.broadcast %107 : vector<256x1xf32> to vector<256x16xf32>
    %110 = vector.broadcast %108 : vector<1x16xf32> to vector<256x16xf32>
    %111 = arith.mulf %109, %110 : vector<256x16xf32>
    %112 = arith.addf %105, %111 : vector<256x16xf32>
    %113 = vector.extract_strided_slice %81 {offsets = [0, 4], sizes = [256, 1], strides = [1, 1]} : vector<256x8xbf16> to vector<256x1xbf16>
    %114 = arith.extf %113 : vector<256x1xbf16> to vector<256x1xf32>
    %115 = vector.extract_strided_slice %83 {offsets = [4, 0], sizes = [1, 16], strides = [1, 1]} : vector<8x16xf32> to vector<1x16xf32>
    %116 = vector.broadcast %114 : vector<256x1xf32> to vector<256x16xf32>
    %117 = vector.broadcast %115 : vector<1x16xf32> to vector<256x16xf32>
    %118 = arith.mulf %116, %117 : vector<256x16xf32>
    %119 = arith.addf %112, %118 : vector<256x16xf32>
    %120 = vector.extract_strided_slice %81 {offsets = [0, 5], sizes = [256, 1], strides = [1, 1]} : vector<256x8xbf16> to vector<256x1xbf16>
    %121 = arith.extf %120 : vector<256x1xbf16> to vector<256x1xf32>
    %122 = vector.extract_strided_slice %83 {offsets = [5, 0], sizes = [1, 16], strides = [1, 1]} : vector<8x16xf32> to vector<1x16xf32>
    %123 = vector.broadcast %121 : vector<256x1xf32> to vector<256x16xf32>
    %124 = vector.broadcast %122 : vector<1x16xf32> to vector<256x16xf32>
    %125 = arith.mulf %123, %124 : vector<256x16xf32>
    %126 = arith.addf %119, %125 : vector<256x16xf32>
    %127 = vector.extract_strided_slice %81 {offsets = [0, 6], sizes = [256, 1], strides = [1, 1]} : vector<256x8xbf16> to vector<256x1xbf16>
    %128 = arith.extf %127 : vector<256x1xbf16> to vector<256x1xf32>
    %129 = vector.extract_strided_slice %83 {offsets = [6, 0], sizes = [1, 16], strides = [1, 1]} : vector<8x16xf32> to vector<1x16xf32>
    %130 = vector.broadcast %128 : vector<256x1xf32> to vector<256x16xf32>
    %131 = vector.broadcast %129 : vector<1x16xf32> to vector<256x16xf32>
    %132 = arith.mulf %130, %131 : vector<256x16xf32>
    %133 = arith.addf %126, %132 : vector<256x16xf32>
    %134 = vector.extract_strided_slice %81 {offsets = [0, 7], sizes = [256, 1], strides = [1, 1]} : vector<256x8xbf16> to vector<256x1xbf16>
    %135 = arith.extf %134 : vector<256x1xbf16> to vector<256x1xf32>
    %136 = vector.extract_strided_slice %83 {offsets = [7, 0], sizes = [1, 16], strides = [1, 1]} : vector<8x16xf32> to vector<1x16xf32>
    %137 = vector.broadcast %135 : vector<256x1xf32> to vector<256x16xf32>
    %138 = vector.broadcast %136 : vector<1x16xf32> to vector<256x16xf32>
    %139 = arith.mulf %137, %138 : vector<256x16xf32>
    %140 = arith.addf %133, %139 : vector<256x16xf32>
    %c0_43 = arith.constant 0 : index
    %c0_44 = arith.constant 0 : index
    %141 = vector.load %arg6[%c0_43, %c0_44] : memref<1x16xf32, #tpu.memory_space<vmem>>, vector<1x16xf32>
    %142 = vector.broadcast %141 : vector<1x16xf32> to vector<256x16xf32>
    %143 = arith.mulf %140, %142 : vector<256x16xf32>
    %c0_45 = arith.constant 0 : index
    %c0_46 = arith.constant 0 : index
    %144 = vector.load %arg7[%c0_45, %c0_46] : memref<1x16xf32, #tpu.memory_space<vmem>>, vector<1x16xf32>
    %145 = vector.broadcast %144 : vector<1x16xf32> to vector<256x16xf32>
    %146 = arith.addf %143, %145 : vector<256x16xf32>
    %147 = vector.shape_cast %146 : vector<256x16xf32> to vector<1x16x16x16xf32>
    %c0_47 = arith.constant 0 : index
    %c0_48 = arith.constant 0 : index
    %c0_49 = arith.constant 0 : index
    %c0_50 = arith.constant 0 : index
    %148 = vector.load %arg8[%c0_47, %c0_48, %c0_49, %c0_50] : memref<1x16x16x16xf32, #tpu.memory_space<vmem>>, vector<1x16x16x16xf32>
    tpu.vector_store %arg8[%c0_47, %c0_48, %c0_49, %c0_50], %147 {strides = array<i32>} : memref<1x16x16x16xf32, #tpu.memory_space<vmem>>, vector<1x16x16x16xf32>,
    return
  }
  func.func @transform_0(%arg0: i32) -> (i32, i32, i32, i32) {
    %c0_i32 = arith.constant 0 : i32
    %c0_i32_0 = arith.constant 0 : i32
    %c0_i32_1 = arith.constant 0 : i32
    %c0_i32_2 = arith.constant 0 : i32
    return %arg0, %c0_i32, %c0_i32_0, %c0_i32_1 : i32, i32, i32, i32
  }
  func.func @transform_1(%arg0: i32) -> (i32, i32, i32) {
    %c0_i32 = arith.constant 0 : i32
    %c0_i32_0 = arith.constant 0 : i32
    %c0_i32_1 = arith.constant 0 : i32
    %c0_i32_2 = arith.constant 0 : i32
    return %c0_i32, %c0_i32_0, %c0_i32_1 : i32, i32, i32
  }
  func.func @transform_2(%arg0: i32) -> (i32, i32) {
    %c0_i32 = arith.constant 0 : i32
    %c0_i32_0 = arith.constant 0 : i32
    %c0_i32_1 = arith.constant 0 : i32
    return %c0_i32, %c0_i32_0 : i32, i32
  }
  func.func @transform_3(%arg0: i32) -> (i32, i32) {
    %c0_i32 = arith.constant 0 : i32
    %c0_i32_0 = arith.constant 0 : i32
    %c0_i32_1 = arith.constant 0 : i32
    return %c0_i32, %c0_i32_0 : i32, i32
  }
  func.func @transform_4(%arg0: i32) -> (i32, i32) {
    %c0_i32 = arith.constant 0 : i32
    %c0_i32_0 = arith.constant 0 : i32
    %c0_i32_1 = arith.constant 0 : i32
    return %c0_i32, %c0_i32_0 : i32, i32
  }
  func.func @transform_5(%arg0: i32) -> (i32, i32) {
    %c0_i32 = arith.constant 0 : i32
    %c0_i32_0 = arith.constant 0 : i32
    %c0_i32_1 = arith.constant 0 : i32
    return %c0_i32, %c0_i32_0 : i32, i32
  }
  func.func @transform_6(%arg0: i32) -> (i32, i32) {
    %c0_i32 = arith.constant 0 : i32
    %c0_i32_0 = arith.constant 0 : i32
    %c0_i32_1 = arith.constant 0 : i32
    return %c0_i32, %c0_i32_0 : i32, i32
  }
  func.func @transform_7(%arg0: i32) -> (i32, i32, i32, i32) {
    %c0_i32 = arith.constant 0 : i32
    %c0_i32_0 = arith.constant 0 : i32
    %c0_i32_1 = arith.constant 0 : i32
    %c0_i32_2 = arith.constant 0 : i32
    return %arg0, %c0_i32, %c0_i32_0, %c0_i32_1 : i32, i32, i32, i32
  }
}

</mosaic_0001>

<llo_original>
// kernel: tpu_custom_call.1
$region0: #{tpu_custom_call.1}
  #allocation0 [shape = 'u32[]', space=smem, size = 0x4, offset = 0x4, fixed_abs, tag = 'smem constant byte address 0x4 - core index']
  #allocation1 [shape = 'u32[144,128]{1,0:T(1,128)}', space=vmem, size = 0x12000, scoped, tag = 'internal scratch']
  %s0 = inlined_call_operand.vmem [shape: bf16[2,18,18,8], index: 0, kind: input, shape index: {}]
  %s1 = inlined_call_operand.vmem [shape: bf16[3,3,8], index: 1, kind: input, shape index: {}]
  %s2 = inlined_call_operand.vmem [shape: bf16[8,16], index: 2, kind: input, shape index: {}]
  %s3 = inlined_call_operand.vmem [shape: f32[1,8], index: 3, kind: input, shape index: {}]
  %s4 = inlined_call_operand.vmem [shape: bf16[1,8], index: 4, kind: input, shape index: {}]
  %s5 = inlined_call_operand.vmem [shape: f32[1,16], index: 5, kind: input, shape index: {}]
  %s6 = inlined_call_operand.vmem [shape: f32[1,16], index: 6, kind: input, shape index: {}]
  %s7 = inlined_call_operand.hbm [shape: f32[2,16,16,16], index: 7, kind: output, shape index: {}]
  %s8 = sld [smem:[#allocation0]]
  $region61: #{tpu_custom_call.1} parent=0
    _
  %s10 = ssub.s32 1, %s8
  %s11 = scalar_select 0, %s10, %s8
  $region1: #{tpu_custom_call.1} parent=0
    #allocation2 [shape = 'u8[262144]{0}', space=vmem, size = 0x40000, scoped, tag = 'output window, operand 0']
    #allocation3 [shape = 's32[2]{0}', space=sflag, size = 0x8, scoped, tag = 'scoped memory for tpu_custom_call.1']
    %12 = vsyncpa [#allocation3], 0
    %s13 = scalar_lea.sflag [#allocation3], 1
    %14 = vsyncpa %s13, 0
    loop: start=0, step=1, limit=4
    $region2: #{tpu_custom_call.1} parent=1 // loop_pre_header
      _
    $region3: #{tpu_custom_call.1} parent=1 // loop_header
      %s16 = sphi 0, %s20
      %p17 = scmp.ge.s32.totalorder %s16, 4
      %s26 = sphi 0, %s28
      %s29 = sphi 0, %s26
      %s30 = sphi 0, %s29
      %s46 = sphi 0, %s30
      %s50 = sphi 0, %s50
      %s52 = sphi 0, %s50
      %s53 = sphi 0, %s52
      %s67 = sphi 0, %s53
      %s71 = sphi 0, %s71
      %s73 = sphi 0, %s71
      %s74 = sphi 0, %s73
      %s88 = sphi 0, %s74
      %s92 = sphi 0, %s92
      %s94 = sphi 0, %s92
      %s95 = sphi 0, %s94
      %s109 = sphi 0, %s95
      %s113 = sphi 0, %s113
      %s115 = sphi 0, %s113
      %s116 = sphi 0, %s115
      %s130 = sphi 0, %s116
      %s134 = sphi 0, %s134
      %s136 = sphi 0, %s134
      %s137 = sphi 0, %s136
      %s151 = sphi 0, %s137
      %s155 = sphi 0, %s155
      %s157 = sphi 0, %s155
      %s158 = sphi 0, %s157
      %s172 = sphi 0, %s158
      %s178 = sphi 0, %s180
      %s181 = sphi 0, %s178
      %s182 = sphi 0, %s181
      %s198 = sphi 0, %s182
    $region4: #{tpu_custom_call.1} parent=1 // loop_header_branch
      %19 = sbr.rel (%p17) target = $region8
    $region5: #{tpu_custom_call.1} parent=1 // loop_body
      %s21 = ssub.s32 %s16, 1
      %s22 = ssub.s32 %s16, 2
      %s23 = sadd.s32 %s16, 1
      %s24 = ssub.s32 %s16, %s23
      %p25 = scmp.eq.s32.totalorder %s24, 0
      %s27 = sadd.s32 %s26, 1
      %s28 = scalar_select %p25, %s26, %s27
      %p31 = pneg %p25
      %p32 = scmp.eq.s32.totalorder %s16, 1
      %p33 = por %p31, %p32
      %p34 = scmp.ne.s32.totalorder %s26, %s29
      %p35 = scmp.eq.s32.totalorder %s16, 0
      %p36 = por %p34, %p35
      %p37 = scmp.ne.s32.totalorder %s26, %s29
      %p38 = scmp.eq.s32.totalorder %s21, 1
      %p39 = por %p37, %p38
      %p40 = scmp.ne.s32.totalorder %s29, %s30
      %p41 = scmp.eq.s32.totalorder %s21, 0
      %p42 = por %p40, %p41
      %p43 = scmp.ne.s32.totalorder %s29, %s30
      %p44 = scmp.eq.s32.totalorder %s22, 1
      %p45 = por %p43, %p44
      %p47 = scmp.ne.s32.totalorder %s30, %s46
      %p48 = scmp.eq.s32.totalorder %s22, 0
      %p49 = por %p47, %p48
      %s51 = sadd.s32 %s50, 1
      %p54 = scmp.eq.s32.totalorder %s16, 1
      %p55 = scmp.ne.s32.totalorder %s50, %s52
      %p56 = scmp.eq.s32.totalorder %s16, 0
      %p57 = por %p55, %p56
      %p58 = scmp.ne.s32.totalorder %s50, %s52
      %p59 = scmp.eq.s32.totalorder %s21, 1
      %p60 = por %p58, %p59
      %p61 = scmp.ne.s32.totalorder %s52, %s53
      %p62 = scmp.eq.s32.totalorder %s21, 0
      %p63 = por %p61, %p62
      %p64 = scmp.ne.s32.totalorder %s52, %s53
      %p65 = scmp.eq.s32.totalorder %s22, 1
      %p66 = por %p64, %p65
      %p68 = scmp.ne.s32.totalorder %s53, %s67
      %p69 = scmp.eq.s32.totalorder %s22, 0
      %p70 = por %p68, %p69
      %s72 = sadd.s32 %s71, 1
      %p75 = scmp.eq.s32.totalorder %s16, 1
      %p76 = scmp.ne.s32.totalorder %s71, %s73
      %p77 = scmp.eq.s32.totalorder %s16, 0
      %p78 = por %p76, %p77
      %p79 = scmp.ne.s32.totalorder %s71, %s73
      %p80 = scmp.eq.s32.totalorder %s21, 1
      %p81 = por %p79, %p80
      %p82 = scmp.ne.s32.totalorder %s73, %s74
      %p83 = scmp.eq.s32.totalorder %s21, 0
      %p84 = por %p82, %p83
      %p85 = scmp.ne.s32.totalorder %s73, %s74
      %p86 = scmp.eq.s32.totalorder %s22, 1
      %p87 = por %p85, %p86
      %p89 = scmp.ne.s32.totalorder %s74, %s88
      %p90 = scmp.eq.s32.totalorder %s22, 0
      %p91 = por %p89, %p90
      %s93 = sadd.s32 %s92, 1
      %p96 = scmp.eq.s32.totalorder %s16, 1
      %p97 = scmp.ne.s32.totalorder %s92, %s94
      %p98 = scmp.eq.s32.totalorder %s16, 0
      %p99 = por %p97, %p98
      %p100 = scmp.ne.s32.totalorder %s92, %s94
      %p101 = scmp.eq.s32.totalorder %s21, 1
      %p102 = por %p100, %p101
      %p103 = scmp.ne.s32.totalorder %s94, %s95
      %p104 = scmp.eq.s32.totalorder %s21, 0
      %p105 = por %p103, %p104
      %p106 = scmp.ne.s32.totalorder %s94, %s95
      %p107 = scmp.eq.s32.totalorder %s22, 1
      %p108 = por %p106, %p107
      %p110 = scmp.ne.s32.totalorder %s95, %s109
      %p111 = scmp.eq.s32.totalorder %s22, 0
      %p112 = por %p110, %p111
      %s114 = sadd.s32 %s113, 1
      %p117 = scmp.eq.s32.totalorder %s16, 1
      %p118 = scmp.ne.s32.totalorder %s113, %s115
      %p119 = scmp.eq.s32.totalorder %s16, 0
      %p120 = por %p118, %p119
      %p121 = scmp.ne.s32.totalorder %s113, %s115
      %p122 = scmp.eq.s32.totalorder %s21, 1
      %p123 = por %p121, %p122
      %p124 = scmp.ne.s32.totalorder %s115, %s116
      %p125 = scmp.eq.s32.totalorder %s21, 0
      %p126 = por %p124, %p125
      %p127 = scmp.ne.s32.totalorder %s115, %s116
      %p128 = scmp.eq.s32.totalorder %s22, 1
      %p129 = por %p127, %p128
      %p131 = scmp.ne.s32.totalorder %s116, %s130
      %p132 = scmp.eq.s32.totalorder %s22, 0
      %p133 = por %p131, %p132
      %s135 = sadd.s32 %s134, 1
      %p138 = scmp.eq.s32.totalorder %s16, 1
      %p139 = scmp.ne.s32.totalorder %s134, %s136
      %p140 = scmp.eq.s32.totalorder %s16, 0
      %p141 = por %p139, %p140
      %p142 = scmp.ne.s32.totalorder %s134, %s136
      %p143 = scmp.eq.s32.totalorder %s21, 1
      %p144 = por %p142, %p143
      %p145 = scmp.ne.s32.totalorder %s136, %s137
      %p146 = scmp.eq.s32.totalorder %s21, 0
      %p147 = por %p145, %p146
      %p148 = scmp.ne.s32.totalorder %s136, %s137
      %p149 = scmp.eq.s32.totalorder %s22, 1
      %p150 = por %p148, %p149
      %p152 = scmp.ne.s32.totalorder %s137, %s151
      %p153 = scmp.eq.s32.totalorder %s22, 0
      %p154 = por %p152, %p153
      %s156 = sadd.s32 %s155, 1
      %p159 = scmp.eq.s32.totalorder %s16, 1
      %p160 = scmp.ne.s32.totalorder %s155, %s157
      %p161 = scmp.eq.s32.totalorder %s16, 0
      %p162 = por %p160, %p161
      %p163 = scmp.ne.s32.totalorder %s155, %s157
      %p164 = scmp.eq.s32.totalorder %s21, 1
      %p165 = por %p163, %p164
      %p166 = scmp.ne.s32.totalorder %s157, %s158
      %p167 = scmp.eq.s32.totalorder %s21, 0
      %p168 = por %p166, %p167
      %p169 = scmp.ne.s32.totalorder %s157, %s158
      %p170 = scmp.eq.s32.totalorder %s22, 1
      %p171 = por %p169, %p170
      %p173 = scmp.ne.s32.totalorder %s158, %s172
      %p174 = scmp.eq.s32.totalorder %s22, 0
      %p175 = por %p173, %p174
      %s176 = ssub.s32 %s16, %s23
      %p177 = scmp.eq.s32.totalorder %s176, 0
      %s179 = sadd.s32 %s178, 1
      %s180 = scalar_select %p177, %s178, %s179
      %p183 = pneg %p177
      %p184 = scmp.eq.s32.totalorder %s16, 1
      %p185 = por %p183, %p184
      %p186 = scmp.ne.s32.totalorder %s178, %s181
      %p187 = scmp.eq.s32.totalorder %s16, 0
      %p188 = por %p186, %p187
      %p189 = scmp.ne.s32.totalorder %s178, %s181
      %p190 = scmp.eq.s32.totalorder %s21, 1
      %p191 = por %p189, %p190
      %p192 = scmp.ne.s32.totalorder %s181, %s182
      %p193 = scmp.eq.s32.totalorder %s21, 0
      %p194 = por %p192, %p193
      %p195 = scmp.ne.s32.totalorder %s181, %s182
      %p196 = scmp.eq.s32.totalorder %s22, 1
      %p197 = por %p195, %p196
      %p199 = scmp.ne.s32.totalorder %s182, %s198
      %p200 = scmp.eq.s32.totalorder %s22, 0
      %p201 = por %p199, %p200
      %p202 = scmp.le.s32.totalorder 1, %s16
      %p203 = scmp.lt.s32.totalorder %s16, 3
      %p204 = pnand %p202, %p203
      %p205 = pneg %p204
      // Predicated region
      $region9: #{tpu_custom_call.1} parent=5 // pred_check
        _
      $region10: #{tpu_custom_call.1} parent=5 // pred_check_branch
        %207 = sbr.rel (%p204) target = $region12
      $region11: #{tpu_custom_call.1} parent=5 // pred_region
        %s208 = ssub.s32 %s16, 1
        // Predicated region
        $region13: #{tpu_custom_call.1} parent=11 // pred_check
          %p209 = pneg %p63
        $region14: #{tpu_custom_call.1} parent=11 // pred_check_branch
          %211 = sbr.rel (%p209) target = $region16
        $region15: #{tpu_custom_call.1} parent=11 // pred_region
          _
        $region16: #{tpu_custom_call.1} parent=11 // pred_fallthru
          _
        // Predicated region
        $region17: #{tpu_custom_call.1} parent=11 // pred_check
          %p212 = pneg %p84
        $region18: #{tpu_custom_call.1} parent=11 // pred_check_branch
          %214 = sbr.rel (%p212) target = $region20
        $region19: #{tpu_custom_call.1} parent=11 // pred_region
          _
        $region20: #{tpu_custom_call.1} parent=11 // pred_fallthru
          _
        // Predicated region
        $region21: #{tpu_custom_call.1} parent=11 // pred_check
          %p215 = pneg %p105
        $region22: #{tpu_custom_call.1} parent=11 // pred_check_branch
          %217 = sbr.rel (%p215) target = $region24
        $region23: #{tpu_custom_call.1} parent=11 // pred_region
          _
        $region24: #{tpu_custom_call.1} parent=11 // pred_fallthru
          _
        // Predicated region
        $region25: #{tpu_custom_call.1} parent=11 // pred_check
          %p218 = pneg %p126
        $region26: #{tpu_custom_call.1} parent=11 // pred_check_branch
          %220 = sbr.rel (%p218) target = $region28
        $region27: #{tpu_custom_call.1} parent=11 // pred_region
          _
        $region28: #{tpu_custom_call.1} parent=11 // pred_fallthru
          _
        // Predicated region
        $region29: #{tpu_custom_call.1} parent=11 // pred_check
          %p221 = pneg %p147
        $region30: #{tpu_custom_call.1} parent=11 // pred_check_branch
          %223 = sbr.rel (%p221) target = $region32
        $region31: #{tpu_custom_call.1} parent=11 // pred_region
          _
        $region32: #{tpu_custom_call.1} parent=11 // pred_fallthru
          _
        // Predicated region
        $region33: #{tpu_custom_call.1} parent=11 // pred_check
          %p224 = pneg %p168
        $region34: #{tpu_custom_call.1} parent=11 // pred_check_branch
          %226 = sbr.rel (%p224) target = $region36
        $region35: #{tpu_custom_call.1} parent=11 // pred_region
          _
        $region36: #{tpu_custom_call.1} parent=11 // pred_fallthru
          _
      $region12: #{tpu_custom_call.1} parent=5 // pred_fallthru
        _
      %p227 = scmp.lt.s32.totalorder %s16, 2
      // Predicated region
      $region37: #{tpu_custom_call.1} parent=5 // pred_check
        %p228 = pneg %p227
      $region38: #{tpu_custom_call.1} parent=5 // pred_check_branch
        %230 = sbr.rel (%p228) target = $region40
      $region39: #{tpu_custom_call.1} parent=5 // pred_region
        // Predicated region
        $region41: #{tpu_custom_call.1} parent=39 // pred_check
          %p231 = pneg %p36
        $region42: #{tpu_custom_call.1} parent=39 // pred_check_branch
          %233 = sbr.rel (%p231) target = $region44
        $region43: #{tpu_custom_call.1} parent=39 // pred_region
          %p234 = scmp.lt.s32.totalorder %s16, 1
          %s235 = scalar_select %p234, %s16, 1
          %s236 = smul.addr %s235, 54
          %s237 = smul.addr %s236, 4
          %s238 = scalar_lea.vmem %s0, %s237
        $region44: #{tpu_custom_call.1} parent=39 // pred_fallthru
          _
      $region40: #{tpu_custom_call.1} parent=5 // pred_fallthru
        _
      %p239 = scmp.le.s32.totalorder 1, %s16
      %p240 = scmp.lt.s32.totalorder %s16, 3
      %p241 = pnand %p239, %p240
      %p242 = pneg %p241
      // Predicated region
      $region45: #{tpu_custom_call.1} parent=5 // pred_check
        _
      $region46: #{tpu_custom_call.1} parent=5 // pred_check_branch
        %244 = sbr.rel (%p241) target = $region48
      $region47: #{tpu_custom_call.1} parent=5 // pred_region
        %s245 = ssub.s32 %s16, 1
        %p246 = scmp.lt.s32.totalorder %s21, 1
        %s247 = scalar_select %p246, %s21, 1
        %s248 = smul.addr %s247, 54
        %s249 = smul.addr %s248, 4
        %s250 = scalar_lea.vmem %s0, %s249
        %p251 = pneg %p42
        %p252 = pneg %p39
        %p253 = pneg %p63
        %p254 = pneg %p60
        %p255 = pneg %p84
        %p256 = pneg %p81
        %p257 = pneg %p105
        %p258 = pneg %p102
        %p259 = pneg %p126
        %p260 = pneg %p123
        %p261 = pneg %p147
        %p262 = pneg %p144
        %p263 = pneg %p168
        %p264 = pneg %p165
        %p265 = pneg %p194
        %p266 = pneg %p191
        %s267 = sand.u32 %s181, 1
        %s268 = scalar_lea.sflag [#allocation3], %s267
        %s269 = sand.u32 %s181, 1
        %s270 = smul.addr %s269, 256
        %s271 = scalar_lea.vmem [#allocation2], %s270
        %p272 = scmp.lt.s32.totalorder %s21, 1
        %s273 = scalar_select %p272, %s21, 1
        %s274 = smul.addr %s273, 54
        %s275 = smul.addr %s274, 4
        %s276 = scalar_lea.vmem %s0, %s275
        %v278 = vld [vmem:[%s1] sm:$0x3]
        %v279 = vld [vmem:[%s1 + $0x2] sm:$0x3]
        %v280 = vld [vmem:[%s1 + $0x4] sm:$0x3]
        %v281 = vld [vmem:[%s276] sm:$0xf]
        %v282 = vld [vmem:[%s276 + $0x4] sm:$0xf]
        %v283 = vld [vmem:[%s276 + $0xc] sm:$0xf]
        %v284 = vld [vmem:[%s276 + $0x10] sm:$0xf]
        %v285 = vld [vmem:[%s276 + $0x18] sm:$0xf]
        %v286 = vld [vmem:[%s276 + $0x1c] sm:$0xf]
        %v287 = vld [vmem:[%s276 + $0x24] sm:$0xf]
        %v288 = vld [vmem:[%s276 + $0x28] sm:$0xf]
        %v289 = vld [vmem:[%s276 + $0x30] sm:$0xf]
        %v290 = vld [vmem:[%s276 + $0x34] sm:$0xf]
        %v291 = vld [vmem:[%s276 + $0x3c] sm:$0xf]
        %v292 = vld [vmem:[%s276 + $0x40] sm:$0xf]
        %v293 = vld [vmem:[%s276 + $0x48] sm:$0xf]
        %v294 = vld [vmem:[%s276 + $0x4c] sm:$0xf]
        %v295 = vld [vmem:[%s276 + $0x54] sm:$0xf]
        %v296 = vld [vmem:[%s276 + $0x58] sm:$0xf]
        %v297 = vld [vmem:[%s276 + $0x60] sm:$0xf]
        %v298 = vld [vmem:[%s276 + $0x64] sm:$0xf]
        %v299 = vld [vmem:[%s276 + $0x6c] sm:$0xf]
        %v300 = vld [vmem:[%s276 + $0x70] sm:$0xf]
        %v301 = vld [vmem:[%s276 + $0x78] sm:$0xf]
        %v302 = vld [vmem:[%s276 + $0x7c] sm:$0xf]
        %v303 = vld [vmem:[%s276 + $0x84] sm:$0xf]
        %v304 = vld [vmem:[%s276 + $0x88] sm:$0xf]
        %v305 = vld [vmem:[%s276 + $0x90] sm:$0xf]
        %v306 = vld [vmem:[%s276 + $0x94] sm:$0xf]
        %v307 = vld [vmem:[%s276 + $0x9c] sm:$0xf]
        %v308 = vld [vmem:[%s276 + $0xa0] sm:$0xf]
        %v309 = vld [vmem:[%s276 + $0xa8] sm:$0xf]
        %v310 = vld [vmem:[%s276 + $0xac] sm:$0xf]
        %v311 = vld [vmem:[%s276 + $0xb4] sm:$0xf]
        %v312 = vld [vmem:[%s276 + $0xb8] sm:$0xf]
        %v314 = vpack.i.b16 %v278, %v278
        %v316 = vlaneseq
        %v317 = vshrl.u32 %v316, 7
        %v318 = vsub.s32 0, %v317
        %v319 = vrot.slane %v314, %v318
        %v321 = vunpack.c.l.b16 %v319
        %v322 = vpack.c.b16 %v321, %v321
        %v324 = vmul.bf16 %v281, %v322
        %v325 = vmul.bf16 %v282, %v322
        %v326 = vmul.bf16 %v283, %v322
        %v327 = vmul.bf16 %v284, %v322
        %v328 = vmul.bf16 %v285, %v322
        %v329 = vmul.bf16 %v286, %v322
        %v330 = vmul.bf16 %v287, %v322
        %v331 = vmul.bf16 %v288, %v322
        %v332 = vmul.bf16 %v289, %v322
        %v333 = vmul.bf16 %v290, %v322
        %v334 = vmul.bf16 %v291, %v322
        %v335 = vmul.bf16 %v292, %v322
        %v336 = vmul.bf16 %v293, %v322
        %v337 = vmul.bf16 %v294, %v322
        %v338 = vmul.bf16 %v295, %v322
        %v339 = vmul.bf16 %v296, %v322
        %v340 = vmul.bf16 %v297, %v322
        %v341 = vmul.bf16 %v298, %v322
        %v342 = vmul.bf16 %v299, %v322
        %v343 = vmul.bf16 %v300, %v322
        %v344 = vmul.bf16 %v301, %v322
        %v345 = vmul.bf16 %v302, %v322
        %v346 = vmul.bf16 %v303, %v322
        %v347 = vmul.bf16 %v304, %v322
        %v348 = vmul.bf16 %v305, %v322
        %v349 = vmul.bf16 %v306, %v322
        %v350 = vmul.bf16 %v307, %v322
        %v351 = vmul.bf16 %v308, %v322
        %v352 = vmul.bf16 %v309, %v322
        %v353 = vmul.bf16 %v310, %v322
        %v354 = vmul.bf16 %v311, %v322
        %v355 = vmul.bf16 %v312, %v322
        %v356 = vadd.bf16 %v324, 0
        %v357 = vadd.bf16 %v325, 0
        %v358 = vadd.bf16 %v326, 0
        %v359 = vadd.bf16 %v327, 0
        %v360 = vadd.bf16 %v328, 0
        %v361 = vadd.bf16 %v329, 0
        %v362 = vadd.bf16 %v330, 0
        %v363 = vadd.bf16 %v331, 0
        %v364 = vadd.bf16 %v332, 0
        %v365 = vadd.bf16 %v333, 0
        %v366 = vadd.bf16 %v334, 0
        %v367 = vadd.bf16 %v335, 0
        %v368 = vadd.bf16 %v336, 0
        %v369 = vadd.bf16 %v337, 0
        %v370 = vadd.bf16 %v338, 0
        %v371 = vadd.bf16 %v339, 0
        %v372 = vadd.bf16 %v340, 0
        %v373 = vadd.bf16 %v341, 0
        %v374 = vadd.bf16 %v342, 0
        %v375 = vadd.bf16 %v343, 0
        %v376 = vadd.bf16 %v344, 0
        %v377 = vadd.bf16 %v345, 0
        %v378 = vadd.bf16 %v346, 0
        %v379 = vadd.bf16 %v347, 0
        %v380 = vadd.bf16 %v348, 0
        %v381 = vadd.bf16 %v349, 0
        %v382 = vadd.bf16 %v350, 0
        %v383 = vadd.bf16 %v351, 0
        %v384 = vadd.bf16 %v352, 0
        %v385 = vadd.bf16 %v353, 0
        %v386 = vadd.bf16 %v354, 0
        %v387 = vadd.bf16 %v355, 0
        %v388 = vld [vmem:[%s276 + $0x8] sm:$0x1]
        %v389 = vld [vmem:[%s276 + $0x14] sm:$0x1]
        %v390 = vld [vmem:[%s276 + $0x20] sm:$0x1]
        %v391 = vld [vmem:[%s276 + $0x2c] sm:$0x1]
        %v392 = vld [vmem:[%s276 + $0x38] sm:$0x1]
        %v393 = vld [vmem:[%s276 + $0x44] sm:$0x1]
        %v394 = vld [vmem:[%s276 + $0x50] sm:$0x1]
        %v395 = vld [vmem:[%s276 + $0x5c] sm:$0x1]
        %v396 = vld [vmem:[%s276 + $0x68] sm:$0x1]
        %v397 = vld [vmem:[%s276 + $0x74] sm:$0x1]
        %v398 = vld [vmem:[%s276 + $0x80] sm:$0x1]
        %v399 = vld [vmem:[%s276 + $0x8c] sm:$0x1]
        %v400 = vld [vmem:[%s276 + $0x98] sm:$0x1]
        %v401 = vld [vmem:[%s276 + $0xa4] sm:$0x1]
        %v402 = vld [vmem:[%s276 + $0xb0] sm:$0x1]
        %v403 = vld [vmem:[%s276 + $0xbc] sm:$0x1]
        %v404 = vshrl.u32 %v278, 16
        %v405 = vpack.i.b16 %v404, %v404
        %v407 = vlaneseq
        %v408 = vshrl.u32 %v407, 7
        %v409 = vsub.s32 0, %v408
        %v410 = vrot.slane %v405, %v409
        %v412 = vunpack.c.l.b16 %v410
        %v413 = vpack.c.b16 %v412, %v412
        %v415 = vmul.bf16 %v281, %v413
        %v416 = vmul.bf16 %v282, %v413
        %v417 = vmul.bf16 %v388, %v413
        %v418 = vmul.bf16 %v283, %v413
        %v419 = vmul.bf16 %v284, %v413
        %v420 = vmul.bf16 %v389, %v413
        %v421 = vmul.bf16 %v285, %v413
        %v422 = vmul.bf16 %v286, %v413
        %v423 = vmul.bf16 %v390, %v413
        %v424 = vmul.bf16 %v287, %v413
        %v425 = vmul.bf16 %v288, %v413
        %v426 = vmul.bf16 %v391, %v413
        %v427 = vmul.bf16 %v289, %v413
        %v428 = vmul.bf16 %v290, %v413
        %v429 = vmul.bf16 %v392, %v413
        %v430 = vmul.bf16 %v291, %v413
        %v431 = vmul.bf16 %v292, %v413
        %v432 = vmul.bf16 %v393, %v413
        %v433 = vmul.bf16 %v293, %v413
        %v434 = vmul.bf16 %v294, %v413
        %v435 = vmul.bf16 %v394, %v413
        %v436 = vmul.bf16 %v295, %v413
        %v437 = vmul.bf16 %v296, %v413
        %v438 = vmul.bf16 %v395, %v413
        %v439 = vmul.bf16 %v297, %v413
        %v440 = vmul.bf16 %v298, %v413
        %v441 = vmul.bf16 %v396, %v413
        %v442 = vmul.bf16 %v299, %v413
        %v443 = vmul.bf16 %v300, %v413
        %v444 = vmul.bf16 %v397, %v413
        %v445 = vmul.bf16 %v301, %v413
        %v446 = vmul.bf16 %v302, %v413
        %v447 = vmul.bf16 %v398, %v413
        %v448 = vmul.bf16 %v303, %v413
        %v449 = vmul.bf16 %v304, %v413
        %v450 = vmul.bf16 %v399, %v413
        %v451 = vmul.bf16 %v305, %v413
        %v452 = vmul.bf16 %v306, %v413
        %v453 = vmul.bf16 %v400, %v413
        %v454 = vmul.bf16 %v307, %v413
        %v455 = vmul.bf16 %v308, %v413
        %v456 = vmul.bf16 %v401, %v413
        %v457 = vmul.bf16 %v309, %v413
        %v458 = vmul.bf16 %v310, %v413
        %v459 = vmul.bf16 %v402, %v413
        %v460 = vmul.bf16 %v311, %v413
        %v461 = vmul.bf16 %v312, %v413
        %v462 = vmul.bf16 %v403, %v413
        %vm463 = vsmask.f32 3328
        %vm464 = vsmask.f32 7440
        %vm465 = vmor %vm463, %vm464
        %v467 = vshrl.u32 %v415, 16
        %v469 = vrot.slane %v467, 4
        %v470 = vshll.u32 %v415, 16
        %v472 = vrot.slane %v470, 5
        %v473 = vor.u32 %v469, %v472
        %v474 = vrot.slane %v473, 4
        %v476 = vshll.u32 %v416, 16
        %v478 = vrot.slane %v476, 5
        %v479 = vsel %vm465, %v474, %v478
        %v480 = vshrl.u32 %v416, 16
        %v482 = vrot.slane %v480, 4
        %v483 = vor.u32 %v482, %v478
        %v484 = vrot.slane %v483, 4
        %v486 = vshll.u32 %v417, 16
        %v488 = vrot.slane %v486, 5
        %v489 = vsel %vm465, %v484, %v488
        %v491 = vshrl.u32 %v418, 16
        %v493 = vrot.slane %v491, 4
        %v494 = vshll.u32 %v418, 16
        %v496 = vrot.slane %v494, 5
        %v497 = vor.u32 %v493, %v496
        %v498 = vrot.slane %v497, 4
        %v500 = vshll.u32 %v419, 16
        %v502 = vrot.slane %v500, 5
        %v503 = vsel %vm465, %v498, %v502
        %v504 = vshrl.u32 %v419, 16
        %v506 = vrot.slane %v504, 4
        %v507 = vor.u32 %v506, %v502
        %v508 = vrot.slane %v507, 4
        %v510 = vshll.u32 %v420, 16
        %v512 = vrot.slane %v510, 5
        %v513 = vsel %vm465, %v508, %v512
        %v515 = vshrl.u32 %v421, 16
        %v517 = vrot.slane %v515, 4
        %v518 = vshll.u32 %v421, 16
        %v520 = vrot.slane %v518, 5
        %v521 = vor.u32 %v517, %v520
        %v522 = vrot.slane %v521, 4
        %v524 = vshll.u32 %v422, 16
        %v526 = vrot.slane %v524, 5
        %v527 = vsel %vm465, %v522, %v526
        %v528 = vshrl.u32 %v422, 16
        %v530 = vrot.slane %v528, 4
        %v531 = vor.u32 %v530, %v526
        %v532 = vrot.slane %v531, 4
        %v534 = vshll.u32 %v423, 16
        %v536 = vrot.slane %v534, 5
        %v537 = vsel %vm465, %v532, %v536
        %v539 = vshrl.u32 %v424, 16
        %v541 = vrot.slane %v539, 4
        %v542 = vshll.u32 %v424, 16
        %v544 = vrot.slane %v542, 5
        %v545 = vor.u32 %v541, %v544
        %v546 = vrot.slane %v545, 4
        %v548 = vshll.u32 %v425, 16
        %v550 = vrot.slane %v548, 5
        %v551 = vsel %vm465, %v546, %v550
        %v552 = vshrl.u32 %v425, 16
        %v554 = vrot.slane %v552, 4
        %v555 = vor.u32 %v554, %v550
        %v556 = vrot.slane %v555, 4
        %v558 = vshll.u32 %v426, 16
        %v560 = vrot.slane %v558, 5
        %v561 = vsel %vm465, %v556, %v560
        %v563 = vshrl.u32 %v427, 16
        %v565 = vrot.slane %v563, 4
        %v566 = vshll.u32 %v427, 16
        %v568 = vrot.slane %v566, 5
        %v569 = vor.u32 %v565, %v568
        %v570 = vrot.slane %v569, 4
        %v572 = vshll.u32 %v428, 16
        %v574 = vrot.slane %v572, 5
        %v575 = vsel %vm465, %v570, %v574
        %v576 = vshrl.u32 %v428, 16
        %v578 = vrot.slane %v576, 4
        %v579 = vor.u32 %v578, %v574
        %v580 = vrot.slane %v579, 4
        %v582 = vshll.u32 %v429, 16
        %v584 = vrot.slane %v582, 5
        %v585 = vsel %vm465, %v580, %v584
        %v587 = vshrl.u32 %v430, 16
        %v589 = vrot.slane %v587, 4
        %v590 = vshll.u32 %v430, 16
        %v592 = vrot.slane %v590, 5
        %v593 = vor.u32 %v589, %v592
        %v594 = vrot.slane %v593, 4
        %v596 = vshll.u32 %v431, 16
        %v598 = vrot.slane %v596, 5
        %v599 = vsel %vm465, %v594, %v598
        %v600 = vshrl.u32 %v431, 16
        %v602 = vrot.slane %v600, 4
        %v603 = vor.u32 %v602, %v598
        %v604 = vrot.slane %v603, 4
        %v606 = vshll.u32 %v432, 16
        %v608 = vrot.slane %v606, 5
        %v609 = vsel %vm465, %v604, %v608
        %v611 = vshrl.u32 %v433, 16
        %v613 = vrot.slane %v611, 4
        %v614 = vshll.u32 %v433, 16
        %v616 = vrot.slane %v614, 5
        %v617 = vor.u32 %v613, %v616
        %v618 = vrot.slane %v617, 4
        %v620 = vshll.u32 %v434, 16
        %v622 = vrot.slane %v620, 5
        %v623 = vsel %vm465, %v618, %v622
        %v624 = vshrl.u32 %v434, 16
        %v626 = vrot.slane %v624, 4
        %v627 = vor.u32 %v626, %v622
        %v628 = vrot.slane %v627, 4
        %v630 = vshll.u32 %v435, 16
        %v632 = vrot.slane %v630, 5
        %v633 = vsel %vm465, %v628, %v632
        %v635 = vshrl.u32 %v436, 16
        %v637 = vrot.slane %v635, 4
        %v638 = vshll.u32 %v436, 16
        %v640 = vrot.slane %v638, 5
        %v641 = vor.u32 %v637, %v640
        %v642 = vrot.slane %v641, 4
        %v644 = vshll.u32 %v437, 16
        %v646 = vrot.slane %v644, 5
        %v647 = vsel %vm465, %v642, %v646
        %v648 = vshrl.u32 %v437, 16
        %v650 = vrot.slane %v648, 4
        %v651 = vor.u32 %v650, %v646
        %v652 = vrot.slane %v651, 4
        %v654 = vshll.u32 %v438, 16
        %v656 = vrot.slane %v654, 5
        %v657 = vsel %vm465, %v652, %v656
        %v659 = vshrl.u32 %v439, 16
        %v661 = vrot.slane %v659, 4
        %v662 = vshll.u32 %v439, 16
        %v664 = vrot.slane %v662, 5
        %v665 = vor.u32 %v661, %v664
        %v666 = vrot.slane %v665, 4
        %v668 = vshll.u32 %v440, 16
        %v670 = vrot.slane %v668, 5
        %v671 = vsel %vm465, %v666, %v670
        %v672 = vshrl.u32 %v440, 16
        %v674 = vrot.slane %v672, 4
        %v675 = vor.u32 %v674, %v670
        %v676 = vrot.slane %v675, 4
        %v678 = vshll.u32 %v441, 16
        %v680 = vrot.slane %v678, 5
        %v681 = vsel %vm465, %v676, %v680
        %v683 = vshrl.u32 %v442, 16
        %v685 = vrot.slane %v683, 4
        %v686 = vshll.u32 %v442, 16
        %v688 = vrot.slane %v686, 5
        %v689 = vor.u32 %v685, %v688
        %v690 = vrot.slane %v689, 4
        %v692 = vshll.u32 %v443, 16
        %v694 = vrot.slane %v692, 5
        %v695 = vsel %vm465, %v690, %v694
        %v696 = vshrl.u32 %v443, 16
        %v698 = vrot.slane %v696, 4
        %v699 = vor.u32 %v698, %v694
        %v700 = vrot.slane %v699, 4
        %v702 = vshll.u32 %v444, 16
        %v704 = vrot.slane %v702, 5
        %v705 = vsel %vm465, %v700, %v704
        %v707 = vshrl.u32 %v445, 16
        %v709 = vrot.slane %v707, 4
        %v710 = vshll.u32 %v445, 16
        %v712 = vrot.slane %v710, 5
        %v713 = vor.u32 %v709, %v712
        %v714 = vrot.slane %v713, 4
        %v716 = vshll.u32 %v446, 16
        %v718 = vrot.slane %v716, 5
        %v719 = vsel %vm465, %v714, %v718
        %v720 = vshrl.u32 %v446, 16
        %v722 = vrot.slane %v720, 4
        %v723 = vor.u32 %v722, %v718
        %v724 = vrot.slane %v723, 4
        %v726 = vshll.u32 %v447, 16
        %v728 = vrot.slane %v726, 5
        %v729 = vsel %vm465, %v724, %v728
        %v731 = vshrl.u32 %v448, 16
        %v733 = vrot.slane %v731, 4
        %v734 = vshll.u32 %v448, 16
        %v736 = vrot.slane %v734, 5
        %v737 = vor.u32 %v733, %v736
        %v738 = vrot.slane %v737, 4
        %v740 = vshll.u32 %v449, 16
        %v742 = vrot.slane %v740, 5
        %v743 = vsel %vm465, %v738, %v742
        %v744 = vshrl.u32 %v449, 16
        %v746 = vrot.slane %v744, 4
        %v747 = vor.u32 %v746, %v742
        %v748 = vrot.slane %v747, 4
        %v750 = vshll.u32 %v450, 16
        %v752 = vrot.slane %v750, 5
        %v753 = vsel %vm465, %v748, %v752
        %v755 = vshrl.u32 %v451, 16
        %v757 = vrot.slane %v755, 4
        %v758 = vshll.u32 %v451, 16
        %v760 = vrot.slane %v758, 5
        %v761 = vor.u32 %v757, %v760
        %v762 = vrot.slane %v761, 4
        %v764 = vshll.u32 %v452, 16
        %v766 = vrot.slane %v764, 5
        %v767 = vsel %vm465, %v762, %v766
        %v768 = vshrl.u32 %v452, 16
        %v770 = vrot.slane %v768, 4
        %v771 = vor.u32 %v770, %v766
        %v772 = vrot.slane %v771, 4
        %v774 = vshll.u32 %v453, 16
        %v776 = vrot.slane %v774, 5
        %v777 = vsel %vm465, %v772, %v776
        %v779 = vshrl.u32 %v454, 16
        %v781 = vrot.slane %v779, 4
        %v782 = vshll.u32 %v454, 16
        %v784 = vrot.slane %v782, 5
        %v785 = vor.u32 %v781, %v784
        %v786 = vrot.slane %v785, 4
        %v788 = vshll.u32 %v455, 16
        %v790 = vrot.slane %v788, 5
        %v791 = vsel %vm465, %v786, %v790
        %v792 = vshrl.u32 %v455, 16
        %v794 = vrot.slane %v792, 4
        %v795 = vor.u32 %v794, %v790
        %v796 = vrot.slane %v795, 4
        %v798 = vshll.u32 %v456, 16
        %v800 = vrot.slane %v798, 5
        %v801 = vsel %vm465, %v796, %v800
        %v803 = vshrl.u32 %v457, 16
        %v805 = vrot.slane %v803, 4
        %v806 = vshll.u32 %v457, 16
        %v808 = vrot.slane %v806, 5
        %v809 = vor.u32 %v805, %v808
        %v810 = vrot.slane %v809, 4
        %v812 = vshll.u32 %v458, 16
        %v814 = vrot.slane %v812, 5
        %v815 = vsel %vm465, %v810, %v814
        %v816 = vshrl.u32 %v458, 16
        %v818 = vrot.slane %v816, 4
        %v819 = vor.u32 %v818, %v814
        %v820 = vrot.slane %v819, 4
        %v822 = vshll.u32 %v459, 16
        %v824 = vrot.slane %v822, 5
        %v825 = vsel %vm465, %v820, %v824
        %v827 = vshrl.u32 %v460, 16
        %v829 = vrot.slane %v827, 4
        %v830 = vshll.u32 %v460, 16
        %v832 = vrot.slane %v830, 5
        %v833 = vor.u32 %v829, %v832
        %v834 = vrot.slane %v833, 4
        %v836 = vshll.u32 %v461, 16
        %v838 = vrot.slane %v836, 5
        %v839 = vsel %vm465, %v834, %v838
        %v840 = vshrl.u32 %v461, 16
        %v842 = vrot.slane %v840, 4
        %v843 = vor.u32 %v842, %v838
        %v844 = vrot.slane %v843, 4
        %v846 = vshll.u32 %v462, 16
        %v848 = vrot.slane %v846, 5
        %v849 = vsel %vm465, %v844, %v848
        %v882 = vadd.bf16 %v356, %v479
        %v883 = vadd.bf16 %v357, %v489
        %v884 = vadd.bf16 %v358, %v503
        %v885 = vadd.bf16 %v359, %v513
        %v886 = vadd.bf16 %v360, %v527
        %v887 = vadd.bf16 %v361, %v537
        %v888 = vadd.bf16 %v362, %v551
        %v889 = vadd.bf16 %v363, %v561
        %v890 = vadd.bf16 %v364, %v575
        %v891 = vadd.bf16 %v365, %v585
        %v892 = vadd.bf16 %v366, %v599
        %v893 = vadd.bf16 %v367, %v609
        %v894 = vadd.bf16 %v368, %v623
        %v895 = vadd.bf16 %v369, %v633
        %v896 = vadd.bf16 %v370, %v647
        %v897 = vadd.bf16 %v371, %v657
        %v898 = vadd.bf16 %v372, %v671
        %v899 = vadd.bf16 %v373, %v681
        %v900 = vadd.bf16 %v374, %v695
        %v901 = vadd.bf16 %v375, %v705
        %v902 = vadd.bf16 %v376, %v719
        %v903 = vadd.bf16 %v377, %v729
        %v904 = vadd.bf16 %v378, %v743
        %v905 = vadd.bf16 %v379, %v753
        %v906 = vadd.bf16 %v380, %v767
        %v907 = vadd.bf16 %v381, %v777
        %v908 = vadd.bf16 %v382, %v791
        %v909 = vadd.bf16 %v383, %v801
        %v910 = vadd.bf16 %v384, %v815
        %v911 = vadd.bf16 %v385, %v825
        %v912 = vadd.bf16 %v386, %v839
        %v913 = vadd.bf16 %v387, %v849
        %v914 = vld [vmem:[%s276] sm:$0xe]
        %v915 = vld [vmem:[%s276 + $0xc] sm:$0xe]
        %v916 = vld [vmem:[%s276 + $0x18] sm:$0xe]
        %v917 = vld [vmem:[%s276 + $0x24] sm:$0xe]
        %v918 = vld [vmem:[%s276 + $0x30] sm:$0xe]
        %v919 = vld [vmem:[%s276 + $0x3c] sm:$0xe]
        %v920 = vld [vmem:[%s276 + $0x48] sm:$0xe]
        %v921 = vld [vmem:[%s276 + $0x54] sm:$0xe]
        %v922 = vld [vmem:[%s276 + $0x60] sm:$0xe]
        %v923 = vld [vmem:[%s276 + $0x6c] sm:$0xe]
        %v924 = vld [vmem:[%s276 + $0x78] sm:$0xe]
        %v925 = vld [vmem:[%s276 + $0x84] sm:$0xe]
        %v926 = vld [vmem:[%s276 + $0x90] sm:$0xe]
        %v927 = vld [vmem:[%s276 + $0x9c] sm:$0xe]
        %v928 = vld [vmem:[%s276 + $0xa8] sm:$0xe]
        %v929 = vld [vmem:[%s276 + $0xb4] sm:$0xe]
        %v930 = vlaneseq
        %v931 = vshrl.u32 %v930, 7
        %v932 = vsub.s32 1, %v931
        %v933 = vrot.slane %v314, %v932
        %v935 = vunpack.c.l.b16 %v933
        %v936 = vpack.c.b16 %v935, %v935
        %v938 = vmul.bf16 %v914, %v936
        %v939 = vmul.bf16 %v282, %v936
        %v940 = vmul.bf16 %v388, %v936
        %v941 = vmul.bf16 %v915, %v936
        %v942 = vmul.bf16 %v284, %v936
        %v943 = vmul.bf16 %v389, %v936
        %v944 = vmul.bf16 %v916, %v936
        %v945 = vmul.bf16 %v286, %v936
        %v946 = vmul.bf16 %v390, %v936
        %v947 = vmul.bf16 %v917, %v936
        %v948 = vmul.bf16 %v288, %v936
        %v949 = vmul.bf16 %v391, %v936
        %v950 = vmul.bf16 %v918, %v936
        %v951 = vmul.bf16 %v290, %v936
        %v952 = vmul.bf16 %v392, %v936
        %v953 = vmul.bf16 %v919, %v936
        %v954 = vmul.bf16 %v292, %v936
        %v955 = vmul.bf16 %v393, %v936
        %v956 = vmul.bf16 %v920, %v936
        %v957 = vmul.bf16 %v294, %v936
        %v958 = vmul.bf16 %v394, %v936
        %v959 = vmul.bf16 %v921, %v936
        %v960 = vmul.bf16 %v296, %v936
        %v961 = vmul.bf16 %v395, %v936
        %v962 = vmul.bf16 %v922, %v936
        %v963 = vmul.bf16 %v298, %v936
        %v964 = vmul.bf16 %v396, %v936
        %v965 = vmul.bf16 %v923, %v936
        %v966 = vmul.bf16 %v300, %v936
        %v967 = vmul.bf16 %v397, %v936
        %v968 = vmul.bf16 %v924, %v936
        %v969 = vmul.bf16 %v302, %v936
        %v970 = vmul.bf16 %v398, %v936
        %v971 = vmul.bf16 %v925, %v936
        %v972 = vmul.bf16 %v304, %v936
        %v973 = vmul.bf16 %v399, %v936
        %v974 = vmul.bf16 %v926, %v936
        %v975 = vmul.bf16 %v306, %v936
        %v976 = vmul.bf16 %v400, %v936
        %v977 = vmul.bf16 %v927, %v936
        %v978 = vmul.bf16 %v308, %v936
        %v979 = vmul.bf16 %v401, %v936
        %v980 = vmul.bf16 %v928, %v936
        %v981 = vmul.bf16 %v310, %v936
        %v982 = vmul.bf16 %v402, %v936
        %v983 = vmul.bf16 %v929, %v936
        %v984 = vmul.bf16 %v312, %v936
        %v985 = vmul.bf16 %v403, %v936
        %vm1034 = vcmask 1042432
        %vm1035 = vcmask 1046532
        %vm1036 = vmor %vm1034, %vm1035
        %v1037 = vrot.slane %v938, 5
        %v1038 = vrot.slane %v1037, 4
        %v1039 = vrot.slane %v939, 5
        %v1040 = vsel %vm1036, %v1038, %v1039
        %v1041 = vrot.slane %v1039, 4
        %v1042 = vrot.slane %v940, 5
        %v1043 = vsel %vm1036, %v1041, %v1042
        %v1044 = vrot.slane %v941, 5
        %v1045 = vrot.slane %v1044, 4
        %v1046 = vrot.slane %v942, 5
        %v1047 = vsel %vm1036, %v1045, %v1046
        %v1048 = vrot.slane %v1046, 4
        %v1049 = vrot.slane %v943, 5
        %v1050 = vsel %vm1036, %v1048, %v1049
        %v1051 = vrot.slane %v944, 5
        %v1052 = vrot.slane %v1051, 4
        %v1053 = vrot.slane %v945, 5
        %v1054 = vsel %vm1036, %v1052, %v1053
        %v1055 = vrot.slane %v1053, 4
        %v1056 = vrot.slane %v946, 5
        %v1057 = vsel %vm1036, %v1055, %v1056
        %v1058 = vrot.slane %v947, 5
        %v1059 = vrot.slane %v1058, 4
        %v1060 = vrot.slane %v948, 5
        %v1061 = vsel %vm1036, %v1059, %v1060
        %v1062 = vrot.slane %v1060, 4
        %v1063 = vrot.slane %v949, 5
        %v1064 = vsel %vm1036, %v1062, %v1063
        %v1065 = vrot.slane %v950, 5
        %v1066 = vrot.slane %v1065, 4
        %v1067 = vrot.slane %v951, 5
        %v1068 = vsel %vm1036, %v1066, %v1067
        %v1069 = vrot.slane %v1067, 4
        %v1070 = vrot.slane %v952, 5
        %v1071 = vsel %vm1036, %v1069, %v1070
        %v1072 = vrot.slane %v953, 5
        %v1073 = vrot.slane %v1072, 4
        %v1074 = vrot.slane %v954, 5
        %v1075 = vsel %vm1036, %v1073, %v1074
        %v1076 = vrot.slane %v1074, 4
        %v1077 = vrot.slane %v955, 5
        %v1078 = vsel %vm1036, %v1076, %v1077
        %v1079 = vrot.slane %v956, 5
        %v1080 = vrot.slane %v1079, 4
        %v1081 = vrot.slane %v957, 5
        %v1082 = vsel %vm1036, %v1080, %v1081
        %v1083 = vrot.slane %v1081, 4
        %v1084 = vrot.slane %v958, 5
        %v1085 = vsel %vm1036, %v1083, %v1084
        %v1086 = vrot.slane %v959, 5
        %v1087 = vrot.slane %v1086, 4
        %v1088 = vrot.slane %v960, 5
        %v1089 = vsel %vm1036, %v1087, %v1088
        %v1090 = vrot.slane %v1088, 4
        %v1091 = vrot.slane %v961, 5
        %v1092 = vsel %vm1036, %v1090, %v1091
        %v1093 = vrot.slane %v962, 5
        %v1094 = vrot.slane %v1093, 4
        %v1095 = vrot.slane %v963, 5
        %v1096 = vsel %vm1036, %v1094, %v1095
        %v1097 = vrot.slane %v1095, 4
        %v1098 = vrot.slane %v964, 5
        %v1099 = vsel %vm1036, %v1097, %v1098
        %v1100 = vrot.slane %v965, 5
        %v1101 = vrot.slane %v1100, 4
        %v1102 = vrot.slane %v966, 5
        %v1103 = vsel %vm1036, %v1101, %v1102
        %v1104 = vrot.slane %v1102, 4
        %v1105 = vrot.slane %v967, 5
        %v1106 = vsel %vm1036, %v1104, %v1105
        %v1107 = vrot.slane %v968, 5
        %v1108 = vrot.slane %v1107, 4
        %v1109 = vrot.slane %v969, 5
        %v1110 = vsel %vm1036, %v1108, %v1109
        %v1111 = vrot.slane %v1109, 4
        %v1112 = vrot.slane %v970, 5
        %v1113 = vsel %vm1036, %v1111, %v1112
        %v1114 = vrot.slane %v971, 5
        %v1115 = vrot.slane %v1114, 4
        %v1116 = vrot.slane %v972, 5
        %v1117 = vsel %vm1036, %v1115, %v1116
        %v1118 = vrot.slane %v1116, 4
        %v1119 = vrot.slane %v973, 5
        %v1120 = vsel %vm1036, %v1118, %v1119
        %v1121 = vrot.slane %v974, 5
        %v1122 = vrot.slane %v1121, 4
        %v1123 = vrot.slane %v975, 5
        %v1124 = vsel %vm1036, %v1122, %v1123
        %v1125 = vrot.slane %v1123, 4
        %v1126 = vrot.slane %v976, 5
        %v1127 = vsel %vm1036, %v1125, %v1126
        %v1128 = vrot.slane %v977, 5
        %v1129 = vrot.slane %v1128, 4
        %v1130 = vrot.slane %v978, 5
        %v1131 = vsel %vm1036, %v1129, %v1130
        %v1132 = vrot.slane %v1130, 4
        %v1133 = vrot.slane %v979, 5
        %v1134 = vsel %vm1036, %v1132, %v1133
        %v1135 = vrot.slane %v980, 5
        %v1136 = vrot.slane %v1135, 4
        %v1137 = vrot.slane %v981, 5
        %v1138 = vsel %vm1036, %v1136, %v1137
        %v1139 = vrot.slane %v1137, 4
        %v1140 = vrot.slane %v982, 5
        %v1141 = vsel %vm1036, %v1139, %v1140
        %v1142 = vrot.slane %v983, 5
        %v1143 = vrot.slane %v1142, 4
        %v1144 = vrot.slane %v984, 5
        %v1145 = vsel %vm1036, %v1143, %v1144
        %v1146 = vrot.slane %v1144, 4
        %v1147 = vrot.slane %v985, 5
        %v1148 = vsel %vm1036, %v1146, %v1147
        %v1181 = vadd.bf16 %v882, %v1040
        %v1182 = vadd.bf16 %v883, %v1043
        %v1183 = vadd.bf16 %v884, %v1047
        %v1184 = vadd.bf16 %v885, %v1050
        %v1185 = vadd.bf16 %v886, %v1054
        %v1186 = vadd.bf16 %v887, %v1057
        %v1187 = vadd.bf16 %v888, %v1061
        %v1188 = vadd.bf16 %v889, %v1064
        %v1189 = vadd.bf16 %v890, %v1068
        %v1190 = vadd.bf16 %v891, %v1071
        %v1191 = vadd.bf16 %v892, %v1075
        %v1192 = vadd.bf16 %v893, %v1078
        %v1193 = vadd.bf16 %v894, %v1082
        %v1194 = vadd.bf16 %v895, %v1085
        %v1195 = vadd.bf16 %v896, %v1089
        %v1196 = vadd.bf16 %v897, %v1092
        %v1197 = vadd.bf16 %v898, %v1096
        %v1198 = vadd.bf16 %v899, %v1099
        %v1199 = vadd.bf16 %v900, %v1103
        %v1200 = vadd.bf16 %v901, %v1106
        %v1201 = vadd.bf16 %v902, %v1110
        %v1202 = vadd.bf16 %v903, %v1113
        %v1203 = vadd.bf16 %v904, %v1117
        %v1204 = vadd.bf16 %v905, %v1120
        %v1205 = vadd.bf16 %v906, %v1124
        %v1206 = vadd.bf16 %v907, %v1127
        %v1207 = vadd.bf16 %v908, %v1131
        %v1208 = vadd.bf16 %v909, %v1134
        %v1209 = vadd.bf16 %v910, %v1138
        %v1210 = vadd.bf16 %v911, %v1141
        %v1211 = vadd.bf16 %v912, %v1145
        %v1212 = vadd.bf16 %v913, %v1148
        %s1213 = scalar_lea.vmem %s276, 12
        %v1214 = vld [vmem:[%s1213] sm:$0xf]
        %v1215 = vld [vmem:[%s1213 + $0x4] sm:$0xf]
        %v1216 = vld [vmem:[%s1213 + $0xc] sm:$0xf]
        %v1217 = vld [vmem:[%s1213 + $0x10] sm:$0xf]
        %v1218 = vld [vmem:[%s1213 + $0x18] sm:$0xf]
        %v1219 = vld [vmem:[%s1213 + $0x1c] sm:$0xf]
        %v1220 = vld [vmem:[%s1213 + $0x24] sm:$0xf]
        %v1221 = vld [vmem:[%s1213 + $0x28] sm:$0xf]
        %v1222 = vld [vmem:[%s1213 + $0x30] sm:$0xf]
        %v1223 = vld [vmem:[%s1213 + $0x34] sm:$0xf]
        %v1224 = vld [vmem:[%s1213 + $0x3c] sm:$0xf]
        %v1225 = vld [vmem:[%s1213 + $0x40] sm:$0xf]
        %v1226 = vld [vmem:[%s1213 + $0x48] sm:$0xf]
        %v1227 = vld [vmem:[%s1213 + $0x4c] sm:$0xf]
        %v1228 = vld [vmem:[%s1213 + $0x54] sm:$0xf]
        %v1229 = vld [vmem:[%s1213 + $0x58] sm:$0xf]
        %v1230 = vld [vmem:[%s1213 + $0x60] sm:$0xf]
        %v1231 = vld [vmem:[%s1213 + $0x64] sm:$0xf]
        %v1232 = vld [vmem:[%s1213 + $0x6c] sm:$0xf]
        %v1233 = vld [vmem:[%s1213 + $0x70] sm:$0xf]
        %v1234 = vld [vmem:[%s1213 + $0x78] sm:$0xf]
        %v1235 = vld [vmem:[%s1213 + $0x7c] sm:$0xf]
        %v1236 = vld [vmem:[%s1213 + $0x84] sm:$0xf]
        %v1237 = vld [vmem:[%s1213 + $0x88] sm:$0xf]
        %v1238 = vld [vmem:[%s1213 + $0x90] sm:$0xf]
        %v1239 = vld [vmem:[%s1213 + $0x94] sm:$0xf]
        %v1240 = vld [vmem:[%s1213 + $0x9c] sm:$0xf]
        %v1241 = vld [vmem:[%s1213 + $0xa0] sm:$0xf]
        %v1242 = vld [vmem:[%s1213 + $0xa8] sm:$0xf]
        %v1243 = vld [vmem:[%s1213 + $0xac] sm:$0xf]
        %v1244 = vld [vmem:[%s1213 + $0xb4] sm:$0xf]
        %v1245 = vld [vmem:[%s1213 + $0xb8] sm:$0xf]
        %v1247 = vpack.i.b16 %v279, %v279
        %v1249 = vlaneseq
        %v1250 = vshrl.u32 %v1249, 7
        %v1251 = vsub.s32 0, %v1250
        %v1252 = vrot.slane %v1247, %v1251
        %v1254 = vunpack.c.l.b16 %v1252
        %v1255 = vpack.c.b16 %v1254, %v1254
        %v1257 = vmul.bf16 %v1214, %v1255
        %v1258 = vmul.bf16 %v1215, %v1255
        %v1259 = vmul.bf16 %v1216, %v1255
        %v1260 = vmul.bf16 %v1217, %v1255
        %v1261 = vmul.bf16 %v1218, %v1255
        %v1262 = vmul.bf16 %v1219, %v1255
        %v1263 = vmul.bf16 %v1220, %v1255
        %v1264 = vmul.bf16 %v1221, %v1255
        %v1265 = vmul.bf16 %v1222, %v1255
        %v1266 = vmul.bf16 %v1223, %v1255
        %v1267 = vmul.bf16 %v1224, %v1255
        %v1268 = vmul.bf16 %v1225, %v1255
        %v1269 = vmul.bf16 %v1226, %v1255
        %v1270 = vmul.bf16 %v1227, %v1255
        %v1271 = vmul.bf16 %v1228, %v1255
        %v1272 = vmul.bf16 %v1229, %v1255
        %v1273 = vmul.bf16 %v1230, %v1255
        %v1274 = vmul.bf16 %v1231, %v1255
        %v1275 = vmul.bf16 %v1232, %v1255
        %v1276 = vmul.bf16 %v1233, %v1255
        %v1277 = vmul.bf16 %v1234, %v1255
        %v1278 = vmul.bf16 %v1235, %v1255
        %v1279 = vmul.bf16 %v1236, %v1255
        %v1280 = vmul.bf16 %v1237, %v1255
        %v1281 = vmul.bf16 %v1238, %v1255
        %v1282 = vmul.bf16 %v1239, %v1255
        %v1283 = vmul.bf16 %v1240, %v1255
        %v1284 = vmul.bf16 %v1241, %v1255
        %v1285 = vmul.bf16 %v1242, %v1255
        %v1286 = vmul.bf16 %v1243, %v1255
        %v1287 = vmul.bf16 %v1244, %v1255
        %v1288 = vmul.bf16 %v1245, %v1255
        %v1289 = vadd.bf16 %v1181, %v1257
        %v1290 = vadd.bf16 %v1182, %v1258
        %v1291 = vadd.bf16 %v1183, %v1259
        %v1292 = vadd.bf16 %v1184, %v1260
        %v1293 = vadd.bf16 %v1185, %v1261
        %v1294 = vadd.bf16 %v1186, %v1262
        %v1295 = vadd.bf16 %v1187, %v1263
        %v1296 = vadd.bf16 %v1188, %v1264
        %v1297 = vadd.bf16 %v1189, %v1265
        %v1298 = vadd.bf16 %v1190, %v1266
        %v1299 = vadd.bf16 %v1191, %v1267
        %v1300 = vadd.bf16 %v1192, %v1268
        %v1301 = vadd.bf16 %v1193, %v1269
        %v1302 = vadd.bf16 %v1194, %v1270
        %v1303 = vadd.bf16 %v1195, %v1271
        %v1304 = vadd.bf16 %v1196, %v1272
        %v1305 = vadd.bf16 %v1197, %v1273
        %v1306 = vadd.bf16 %v1198, %v1274
        %v1307 = vadd.bf16 %v1199, %v1275
        %v1308 = vadd.bf16 %v1200, %v1276
        %v1309 = vadd.bf16 %v1201, %v1277
        %v1310 = vadd.bf16 %v1202, %v1278
        %v1311 = vadd.bf16 %v1203, %v1279
        %v1312 = vadd.bf16 %v1204, %v1280
        %v1313 = vadd.bf16 %v1205, %v1281
        %v1314 = vadd.bf16 %v1206, %v1282
        %v1315 = vadd.bf16 %v1207, %v1283
        %v1316 = vadd.bf16 %v1208, %v1284
        %v1317 = vadd.bf16 %v1209, %v1285
        %v1318 = vadd.bf16 %v1210, %v1286
        %v1319 = vadd.bf16 %v1211, %v1287
        %v1320 = vadd.bf16 %v1212, %v1288
        %v1321 = vld [vmem:[%s1213 + $0x8] sm:$0x1]
        %v1322 = vld [vmem:[%s1213 + $0x14] sm:$0x1]
        %v1323 = vld [vmem:[%s1213 + $0x20] sm:$0x1]
        %v1324 = vld [vmem:[%s1213 + $0x2c] sm:$0x1]
        %v1325 = vld [vmem:[%s1213 + $0x38] sm:$0x1]
        %v1326 = vld [vmem:[%s1213 + $0x44] sm:$0x1]
        %v1327 = vld [vmem:[%s1213 + $0x50] sm:$0x1]
        %v1328 = vld [vmem:[%s1213 + $0x5c] sm:$0x1]
        %v1329 = vld [vmem:[%s1213 + $0x68] sm:$0x1]
        %v1330 = vld [vmem:[%s1213 + $0x74] sm:$0x1]
        %v1331 = vld [vmem:[%s1213 + $0x80] sm:$0x1]
        %v1332 = vld [vmem:[%s1213 + $0x8c] sm:$0x1]
        %v1333 = vld [vmem:[%s1213 + $0x98] sm:$0x1]
        %v1334 = vld [vmem:[%s1213 + $0xa4] sm:$0x1]
        %v1335 = vld [vmem:[%s1213 + $0xb0] sm:$0x1]
        %v1336 = vld [vmem:[%s1213 + $0xbc] sm:$0x1]
        %v1337 = vshrl.u32 %v279, 16
        %v1338 = vpack.i.b16 %v1337, %v1337
        %v1340 = vlaneseq
        %v1341 = vshrl.u32 %v1340, 7
        %v1342 = vsub.s32 0, %v1341
        %v1343 = vrot.slane %v1338, %v1342
        %v1345 = vunpack.c.l.b16 %v1343
        %v1346 = vpack.c.b16 %v1345, %v1345
        %v1348 = vmul.bf16 %v1214, %v1346
        %v1349 = vmul.bf16 %v1215, %v1346
        %v1350 = vmul.bf16 %v1321, %v1346
        %v1351 = vmul.bf16 %v1216, %v1346
        %v1352 = vmul.bf16 %v1217, %v1346
        %v1353 = vmul.bf16 %v1322, %v1346
        %v1354 = vmul.bf16 %v1218, %v1346
        %v1355 = vmul.bf16 %v1219, %v1346
        %v1356 = vmul.bf16 %v1323, %v1346
        %v1357 = vmul.bf16 %v1220, %v1346
        %v1358 = vmul.bf16 %v1221, %v1346
        %v1359 = vmul.bf16 %v1324, %v1346
        %v1360 = vmul.bf16 %v1222, %v1346
        %v1361 = vmul.bf16 %v1223, %v1346
        %v1362 = vmul.bf16 %v1325, %v1346
        %v1363 = vmul.bf16 %v1224, %v1346
        %v1364 = vmul.bf16 %v1225, %v1346
        %v1365 = vmul.bf16 %v1326, %v1346
        %v1366 = vmul.bf16 %v1226, %v1346
        %v1367 = vmul.bf16 %v1227, %v1346
        %v1368 = vmul.bf16 %v1327, %v1346
        %v1369 = vmul.bf16 %v1228, %v1346
        %v1370 = vmul.bf16 %v1229, %v1346
        %v1371 = vmul.bf16 %v1328, %v1346
        %v1372 = vmul.bf16 %v1230, %v1346
        %v1373 = vmul.bf16 %v1231, %v1346
        %v1374 = vmul.bf16 %v1329, %v1346
        %v1375 = vmul.bf16 %v1232, %v1346
        %v1376 = vmul.bf16 %v1233, %v1346
        %v1377 = vmul.bf16 %v1330, %v1346
        %v1378 = vmul.bf16 %v1234, %v1346
        %v1379 = vmul.bf16 %v1235, %v1346
        %v1380 = vmul.bf16 %v1331, %v1346
        %v1381 = vmul.bf16 %v1236, %v1346
        %v1382 = vmul.bf16 %v1237, %v1346
        %v1383 = vmul.bf16 %v1332, %v1346
        %v1384 = vmul.bf16 %v1238, %v1346
        %v1385 = vmul.bf16 %v1239, %v1346
        %v1386 = vmul.bf16 %v1333, %v1346
        %v1387 = vmul.bf16 %v1240, %v1346
        %v1388 = vmul.bf16 %v1241, %v1346
        %v1389 = vmul.bf16 %v1334, %v1346
        %v1390 = vmul.bf16 %v1242, %v1346
        %v1391 = vmul.bf16 %v1243, %v1346
        %v1392 = vmul.bf16 %v1335, %v1346
        %v1393 = vmul.bf16 %v1244, %v1346
        %v1394 = vmul.bf16 %v1245, %v1346
        %v1395 = vmul.bf16 %v1336, %v1346
        %v1397 = vshrl.u32 %v1348, 16
        %v1399 = vrot.slane %v1397, 4
        %v1400 = vshll.u32 %v1348, 16
        %v1402 = vrot.slane %v1400, 5
        %v1403 = vor.u32 %v1399, %v1402
        %v1404 = vrot.slane %v1403, 4
        %v1406 = vshll.u32 %v1349, 16
        %v1408 = vrot.slane %v1406, 5
        %v1409 = vsel %vm465, %v1404, %v1408
        %v1410 = vshrl.u32 %v1349, 16
        %v1412 = vrot.slane %v1410, 4
        %v1413 = vor.u32 %v1412, %v1408
        %v1414 = vrot.slane %v1413, 4
        %v1416 = vshll.u32 %v1350, 16
        %v1418 = vrot.slane %v1416, 5
        %v1419 = vsel %vm465, %v1414, %v1418
        %v1421 = vshrl.u32 %v1351, 16
        %v1423 = vrot.slane %v1421, 4
        %v1424 = vshll.u32 %v1351, 16
        %v1426 = vrot.slane %v1424, 5
        %v1427 = vor.u32 %v1423, %v1426
        %v1428 = vrot.slane %v1427, 4
        %v1430 = vshll.u32 %v1352, 16
        %v1432 = vrot.slane %v1430, 5
        %v1433 = vsel %vm465, %v1428, %v1432
        %v1434 = vshrl.u32 %v1352, 16
        %v1436 = vrot.slane %v1434, 4
        %v1437 = vor.u32 %v1436, %v1432
        %v1438 = vrot.slane %v1437, 4
        %v1440 = vshll.u32 %v1353, 16
        %v1442 = vrot.slane %v1440, 5
        %v1443 = vsel %vm465, %v1438, %v1442
        %v1445 = vshrl.u32 %v1354, 16
        %v1447 = vrot.slane %v1445, 4
        %v1448 = vshll.u32 %v1354, 16
        %v1450 = vrot.slane %v1448, 5
        %v1451 = vor.u32 %v1447, %v1450
        %v1452 = vrot.slane %v1451, 4
        %v1454 = vshll.u32 %v1355, 16
        %v1456 = vrot.slane %v1454, 5
        %v1457 = vsel %vm465, %v1452, %v1456
        %v1458 = vshrl.u32 %v1355, 16
        %v1460 = vrot.slane %v1458, 4
        %v1461 = vor.u32 %v1460, %v1456
        %v1462 = vrot.slane %v1461, 4
        %v1464 = vshll.u32 %v1356, 16
        %v1466 = vrot.slane %v1464, 5
        %v1467 = vsel %vm465, %v1462, %v1466
        %v1469 = vshrl.u32 %v1357, 16
        %v1471 = vrot.slane %v1469, 4
        %v1472 = vshll.u32 %v1357, 16
        %v1474 = vrot.slane %v1472, 5
        %v1475 = vor.u32 %v1471, %v1474
        %v1476 = vrot.slane %v1475, 4
        %v1478 = vshll.u32 %v1358, 16
        %v1480 = vrot.slane %v1478, 5
        %v1481 = vsel %vm465, %v1476, %v1480
        %v1482 = vshrl.u32 %v1358, 16
        %v1484 = vrot.slane %v1482, 4
        %v1485 = vor.u32 %v1484, %v1480
        %v1486 = vrot.slane %v1485, 4
        %v1488 = vshll.u32 %v1359, 16
        %v1490 = vrot.slane %v1488, 5
        %v1491 = vsel %vm465, %v1486, %v1490
        %v1493 = vshrl.u32 %v1360, 16
        %v1495 = vrot.slane %v1493, 4
        %v1496 = vshll.u32 %v1360, 16
        %v1498 = vrot.slane %v1496, 5
        %v1499 = vor.u32 %v1495, %v1498
        %v1500 = vrot.slane %v1499, 4
        %v1502 = vshll.u32 %v1361, 16
        %v1504 = vrot.slane %v1502, 5
        %v1505 = vsel %vm465, %v1500, %v1504
        %v1506 = vshrl.u32 %v1361, 16
        %v1508 = vrot.slane %v1506, 4
        %v1509 = vor.u32 %v1508, %v1504
        %v1510 = vrot.slane %v1509, 4
        %v1512 = vshll.u32 %v1362, 16
        %v1514 = vrot.slane %v1512, 5
        %v1515 = vsel %vm465, %v1510, %v1514
        %v1517 = vshrl.u32 %v1363, 16
        %v1519 = vrot.slane %v1517, 4
        %v1520 = vshll.u32 %v1363, 16
        %v1522 = vrot.slane %v1520, 5
        %v1523 = vor.u32 %v1519, %v1522
        %v1524 = vrot.slane %v1523, 4
        %v1526 = vshll.u32 %v1364, 16
        %v1528 = vrot.slane %v1526, 5
        %v1529 = vsel %vm465, %v1524, %v1528
        %v1530 = vshrl.u32 %v1364, 16
        %v1532 = vrot.slane %v1530, 4
        %v1533 = vor.u32 %v1532, %v1528
        %v1534 = vrot.slane %v1533, 4
        %v1536 = vshll.u32 %v1365, 16
        %v1538 = vrot.slane %v1536, 5
        %v1539 = vsel %vm465, %v1534, %v1538
        %v1541 = vshrl.u32 %v1366, 16
        %v1543 = vrot.slane %v1541, 4
        %v1544 = vshll.u32 %v1366, 16
        %v1546 = vrot.slane %v1544, 5
        %v1547 = vor.u32 %v1543, %v1546
        %v1548 = vrot.slane %v1547, 4
        %v1550 = vshll.u32 %v1367, 16
        %v1552 = vrot.slane %v1550, 5
        %v1553 = vsel %vm465, %v1548, %v1552
        %v1554 = vshrl.u32 %v1367, 16
        %v1556 = vrot.slane %v1554, 4
        %v1557 = vor.u32 %v1556, %v1552
        %v1558 = vrot.slane %v1557, 4
        %v1560 = vshll.u32 %v1368, 16
        %v1562 = vrot.slane %v1560, 5
        %v1563 = vsel %vm465, %v1558, %v1562
        %v1565 = vshrl.u32 %v1369, 16
        %v1567 = vrot.slane %v1565, 4
        %v1568 = vshll.u32 %v1369, 16
        %v1570 = vrot.slane %v1568, 5
        %v1571 = vor.u32 %v1567, %v1570
        %v1572 = vrot.slane %v1571, 4
        %v1574 = vshll.u32 %v1370, 16
        %v1576 = vrot.slane %v1574, 5
        %v1577 = vsel %vm465, %v1572, %v1576
        %v1578 = vshrl.u32 %v1370, 16
        %v1580 = vrot.slane %v1578, 4
        %v1581 = vor.u32 %v1580, %v1576
        %v1582 = vrot.slane %v1581, 4
        %v1584 = vshll.u32 %v1371, 16
        %v1586 = vrot.slane %v1584, 5
        %v1587 = vsel %vm465, %v1582, %v1586
        %v1589 = vshrl.u32 %v1372, 16
        %v1591 = vrot.slane %v1589, 4
        %v1592 = vshll.u32 %v1372, 16
        %v1594 = vrot.slane %v1592, 5
        %v1595 = vor.u32 %v1591, %v1594
        %v1596 = vrot.slane %v1595, 4
        %v1598 = vshll.u32 %v1373, 16
        %v1600 = vrot.slane %v1598, 5
        %v1601 = vsel %vm465, %v1596, %v1600
        %v1602 = vshrl.u32 %v1373, 16
        %v1604 = vrot.slane %v1602, 4
        %v1605 = vor.u32 %v1604, %v1600
        %v1606 = vrot.slane %v1605, 4
        %v1608 = vshll.u32 %v1374, 16
        %v1610 = vrot.slane %v1608, 5
        %v1611 = vsel %vm465, %v1606, %v1610
        %v1613 = vshrl.u32 %v1375, 16
        %v1615 = vrot.slane %v1613, 4
        %v1616 = vshll.u32 %v1375, 16
        %v1618 = vrot.slane %v1616, 5
        %v1619 = vor.u32 %v1615, %v1618
        %v1620 = vrot.slane %v1619, 4
        %v1622 = vshll.u32 %v1376, 16
        %v1624 = vrot.slane %v1622, 5
        %v1625 = vsel %vm465, %v1620, %v1624
        %v1626 = vshrl.u32 %v1376, 16
        %v1628 = vrot.slane %v1626, 4
        %v1629 = vor.u32 %v1628, %v1624
        %v1630 = vrot.slane %v1629, 4
        %v1632 = vshll.u32 %v1377, 16
        %v1634 = vrot.slane %v1632, 5
        %v1635 = vsel %vm465, %v1630, %v1634
        %v1637 = vshrl.u32 %v1378, 16
        %v1639 = vrot.slane %v1637, 4
        %v1640 = vshll.u32 %v1378, 16
        %v1642 = vrot.slane %v1640, 5
        %v1643 = vor.u32 %v1639, %v1642
        %v1644 = vrot.slane %v1643, 4
        %v1646 = vshll.u32 %v1379, 16
        %v1648 = vrot.slane %v1646, 5
        %v1649 = vsel %vm465, %v1644, %v1648
        %v1650 = vshrl.u32 %v1379, 16
        %v1652 = vrot.slane %v1650, 4
        %v1653 = vor.u32 %v1652, %v1648
        %v1654 = vrot.slane %v1653, 4
        %v1656 = vshll.u32 %v1380, 16
        %v1658 = vrot.slane %v1656, 5
        %v1659 = vsel %vm465, %v1654, %v1658
        %v1661 = vshrl.u32 %v1381, 16
        %v1663 = vrot.slane %v1661, 4
        %v1664 = vshll.u32 %v1381, 16
        %v1666 = vrot.slane %v1664, 5
        %v1667 = vor.u32 %v1663, %v1666
        %v1668 = vrot.slane %v1667, 4
        %v1670 = vshll.u32 %v1382, 16
        %v1672 = vrot.slane %v1670, 5
        %v1673 = vsel %vm465, %v1668, %v1672
        %v1674 = vshrl.u32 %v1382, 16
        %v1676 = vrot.slane %v1674, 4
        %v1677 = vor.u32 %v1676, %v1672
        %v1678 = vrot.slane %v1677, 4
        %v1680 = vshll.u32 %v1383, 16
        %v1682 = vrot.slane %v1680, 5
        %v1683 = vsel %vm465, %v1678, %v1682
        %v1685 = vshrl.u32 %v1384, 16
        %v1687 = vrot.slane %v1685, 4
        %v1688 = vshll.u32 %v1384, 16
        %v1690 = vrot.slane %v1688, 5
        %v1691 = vor.u32 %v1687, %v1690
        %v1692 = vrot.slane %v1691, 4
        %v1694 = vshll.u32 %v1385, 16
        %v1696 = vrot.slane %v1694, 5
        %v1697 = vsel %vm465, %v1692, %v1696
        %v1698 = vshrl.u32 %v1385, 16
        %v1700 = vrot.slane %v1698, 4
        %v1701 = vor.u32 %v1700, %v1696
        %v1702 = vrot.slane %v1701, 4
        %v1704 = vshll.u32 %v1386, 16
        %v1706 = vrot.slane %v1704, 5
        %v1707 = vsel %vm465, %v1702, %v1706
        %v1709 = vshrl.u32 %v1387, 16
        %v1711 = vrot.slane %v1709, 4
        %v1712 = vshll.u32 %v1387, 16
        %v1714 = vrot.slane %v1712, 5
        %v1715 = vor.u32 %v1711, %v1714
        %v1716 = vrot.slane %v1715, 4
        %v1718 = vshll.u32 %v1388, 16
        %v1720 = vrot.slane %v1718, 5
        %v1721 = vsel %vm465, %v1716, %v1720
        %v1722 = vshrl.u32 %v1388, 16
        %v1724 = vrot.slane %v1722, 4
        %v1725 = vor.u32 %v1724, %v1720
        %v1726 = vrot.slane %v1725, 4
        %v1728 = vshll.u32 %v1389, 16
        %v1730 = vrot.slane %v1728, 5
        %v1731 = vsel %vm465, %v1726, %v1730
        %v1733 = vshrl.u32 %v1390, 16
        %v1735 = vrot.slane %v1733, 4
        %v1736 = vshll.u32 %v1390, 16
        %v1738 = vrot.slane %v1736, 5
        %v1739 = vor.u32 %v1735, %v1738
        %v1740 = vrot.slane %v1739, 4
        %v1742 = vshll.u32 %v1391, 16
        %v1744 = vrot.slane %v1742, 5
        %v1745 = vsel %vm465, %v1740, %v1744
        %v1746 = vshrl.u32 %v1391, 16
        %v1748 = vrot.slane %v1746, 4
        %v1749 = vor.u32 %v1748, %v1744
        %v1750 = vrot.slane %v1749, 4
        %v1752 = vshll.u32 %v1392, 16
        %v1754 = vrot.slane %v1752, 5
        %v1755 = vsel %vm465, %v1750, %v1754
        %v1757 = vshrl.u32 %v1393, 16
        %v1759 = vrot.slane %v1757, 4
        %v1760 = vshll.u32 %v1393, 16
        %v1762 = vrot.slane %v1760, 5
        %v1763 = vor.u32 %v1759, %v1762
        %v1764 = vrot.slane %v1763, 4
        %v1766 = vshll.u32 %v1394, 16
        %v1768 = vrot.slane %v1766, 5
        %v1769 = vsel %vm465, %v1764, %v1768
        %v1770 = vshrl.u32 %v1394, 16
        %v1772 = vrot.slane %v1770, 4
        %v1773 = vor.u32 %v1772, %v1768
        %v1774 = vrot.slane %v1773, 4
        %v1776 = vshll.u32 %v1395, 16
        %v1778 = vrot.slane %v1776, 5
        %v1779 = vsel %vm465, %v1774, %v1778
        %v1812 = vadd.bf16 %v1289, %v1409
        %v1813 = vadd.bf16 %v1290, %v1419
        %v1814 = vadd.bf16 %v1291, %v1433
        %v1815 = vadd.bf16 %v1292, %v1443
        %v1816 = vadd.bf16 %v1293, %v1457
        %v1817 = vadd.bf16 %v1294, %v1467
        %v1818 = vadd.bf16 %v1295, %v1481
        %v1819 = vadd.bf16 %v1296, %v1491
        %v1820 = vadd.bf16 %v1297, %v1505
        %v1821 = vadd.bf16 %v1298, %v1515
        %v1822 = vadd.bf16 %v1299, %v1529
        %v1823 = vadd.bf16 %v1300, %v1539
        %v1824 = vadd.bf16 %v1301, %v1553
        %v1825 = vadd.bf16 %v1302, %v1563
        %v1826 = vadd.bf16 %v1303, %v1577
        %v1827 = vadd.bf16 %v1304, %v1587
        %v1828 = vadd.bf16 %v1305, %v1601
        %v1829 = vadd.bf16 %v1306, %v1611
        %v1830 = vadd.bf16 %v1307, %v1625
        %v1831 = vadd.bf16 %v1308, %v1635
        %v1832 = vadd.bf16 %v1309, %v1649
        %v1833 = vadd.bf16 %v1310, %v1659
        %v1834 = vadd.bf16 %v1311, %v1673
        %v1835 = vadd.bf16 %v1312, %v1683
        %v1836 = vadd.bf16 %v1313, %v1697
        %v1837 = vadd.bf16 %v1314, %v1707
        %v1838 = vadd.bf16 %v1315, %v1721
        %v1839 = vadd.bf16 %v1316, %v1731
        %v1840 = vadd.bf16 %v1317, %v1745
        %v1841 = vadd.bf16 %v1318, %v1755
        %v1842 = vadd.bf16 %v1319, %v1769
        %v1843 = vadd.bf16 %v1320, %v1779
        %v1844 = vld [vmem:[%s1213] sm:$0xe]
        %v1845 = vld [vmem:[%s1213 + $0xc] sm:$0xe]
        %v1846 = vld [vmem:[%s1213 + $0x18] sm:$0xe]
        %v1847 = vld [vmem:[%s1213 + $0x24] sm:$0xe]
        %v1848 = vld [vmem:[%s1213 + $0x30] sm:$0xe]
        %v1849 = vld [vmem:[%s1213 + $0x3c] sm:$0xe]
        %v1850 = vld [vmem:[%s1213 + $0x48] sm:$0xe]
        %v1851 = vld [vmem:[%s1213 + $0x54] sm:$0xe]
        %v1852 = vld [vmem:[%s1213 + $0x60] sm:$0xe]
        %v1853 = vld [vmem:[%s1213 + $0x6c] sm:$0xe]
        %v1854 = vld [vmem:[%s1213 + $0x78] sm:$0xe]
        %v1855 = vld [vmem:[%s1213 + $0x84] sm:$0xe]
        %v1856 = vld [vmem:[%s1213 + $0x90] sm:$0xe]
        %v1857 = vld [vmem:[%s1213 + $0x9c] sm:$0xe]
        %v1858 = vld [vmem:[%s1213 + $0xa8] sm:$0xe]
        %v1859 = vld [vmem:[%s1213 + $0xb4] sm:$0xe]
        %v1860 = vlaneseq
        %v1861 = vshrl.u32 %v1860, 7
        %v1862 = vsub.s32 1, %v1861
        %v1863 = vrot.slane %v1247, %v1862
        %v1865 = vunpack.c.l.b16 %v1863
        %v1866 = vpack.c.b16 %v1865, %v1865
        %v1868 = vmul.bf16 %v1844, %v1866
        %v1869 = vmul.bf16 %v1215, %v1866
        %v1870 = vmul.bf16 %v1321, %v1866
        %v1871 = vmul.bf16 %v1845, %v1866
        %v1872 = vmul.bf16 %v1217, %v1866
        %v1873 = vmul.bf16 %v1322, %v1866
        %v1874 = vmul.bf16 %v1846, %v1866
        %v1875 = vmul.bf16 %v1219, %v1866
        %v1876 = vmul.bf16 %v1323, %v1866
        %v1877 = vmul.bf16 %v1847, %v1866
        %v1878 = vmul.bf16 %v1221, %v1866
        %v1879 = vmul.bf16 %v1324, %v1866
        %v1880 = vmul.bf16 %v1848, %v1866
        %v1881 = vmul.bf16 %v1223, %v1866
        %v1882 = vmul.bf16 %v1325, %v1866
        %v1883 = vmul.bf16 %v1849, %v1866
        %v1884 = vmul.bf16 %v1225, %v1866
        %v1885 = vmul.bf16 %v1326, %v1866
        %v1886 = vmul.bf16 %v1850, %v1866
        %v1887 = vmul.bf16 %v1227, %v1866
        %v1888 = vmul.bf16 %v1327, %v1866
        %v1889 = vmul.bf16 %v1851, %v1866
        %v1890 = vmul.bf16 %v1229, %v1866
        %v1891 = vmul.bf16 %v1328, %v1866
        %v1892 = vmul.bf16 %v1852, %v1866
        %v1893 = vmul.bf16 %v1231, %v1866
        %v1894 = vmul.bf16 %v1329, %v1866
        %v1895 = vmul.bf16 %v1853, %v1866
        %v1896 = vmul.bf16 %v1233, %v1866
        %v1897 = vmul.bf16 %v1330, %v1866
        %v1898 = vmul.bf16 %v1854, %v1866
        %v1899 = vmul.bf16 %v1235, %v1866
        %v1900 = vmul.bf16 %v1331, %v1866
        %v1901 = vmul.bf16 %v1855, %v1866
        %v1902 = vmul.bf16 %v1237, %v1866
        %v1903 = vmul.bf16 %v1332, %v1866
        %v1904 = vmul.bf16 %v1856, %v1866
        %v1905 = vmul.bf16 %v1239, %v1866
        %v1906 = vmul.bf16 %v1333, %v1866
        %v1907 = vmul.bf16 %v1857, %v1866
        %v1908 = vmul.bf16 %v1241, %v1866
        %v1909 = vmul.bf16 %v1334, %v1866
        %v1910 = vmul.bf16 %v1858, %v1866
        %v1911 = vmul.bf16 %v1243, %v1866
        %v1912 = vmul.bf16 %v1335, %v1866
        %v1913 = vmul.bf16 %v1859, %v1866
        %v1914 = vmul.bf16 %v1245, %v1866
        %v1915 = vmul.bf16 %v1336, %v1866
        %v1964 = vrot.slane %v1868, 5
        %v1965 = vrot.slane %v1964, 4
        %v1966 = vrot.slane %v1869, 5
        %v1967 = vsel %vm1036, %v1965, %v1966
        %v1968 = vrot.slane %v1966, 4
        %v1969 = vrot.slane %v1870, 5
        %v1970 = vsel %vm1036, %v1968, %v1969
        %v1971 = vrot.slane %v1871, 5
        %v1972 = vrot.slane %v1971, 4
        %v1973 = vrot.slane %v1872, 5
        %v1974 = vsel %vm1036, %v1972, %v1973
        %v1975 = vrot.slane %v1973, 4
        %v1976 = vrot.slane %v1873, 5
        %v1977 = vsel %vm1036, %v1975, %v1976
        %v1978 = vrot.slane %v1874, 5
        %v1979 = vrot.slane %v1978, 4
        %v1980 = vrot.slane %v1875, 5
        %v1981 = vsel %vm1036, %v1979, %v1980
        %v1982 = vrot.slane %v1980, 4
        %v1983 = vrot.slane %v1876, 5
        %v1984 = vsel %vm1036, %v1982, %v1983
        %v1985 = vrot.slane %v1877, 5
        %v1986 = vrot.slane %v1985, 4
        %v1987 = vrot.slane %v1878, 5
        %v1988 = vsel %vm1036, %v1986, %v1987
        %v1989 = vrot.slane %v1987, 4
        %v1990 = vrot.slane %v1879, 5
        %v1991 = vsel %vm1036, %v1989, %v1990
        %v1992 = vrot.slane %v1880, 5
        %v1993 = vrot.slane %v1992, 4
        %v1994 = vrot.slane %v1881, 5
        %v1995 = vsel %vm1036, %v1993, %v1994
        %v1996 = vrot.slane %v1994, 4
        %v1997 = vrot.slane %v1882, 5
        %v1998 = vsel %vm1036, %v1996, %v1997
        %v1999 = vrot.slane %v1883, 5
        %v2000 = vrot.slane %v1999, 4
        %v2001 = vrot.slane %v1884, 5
        %v2002 = vsel %vm1036, %v2000, %v2001
        %v2003 = vrot.slane %v2001, 4
        %v2004 = vrot.slane %v1885, 5
        %v2005 = vsel %vm1036, %v2003, %v2004
        %v2006 = vrot.slane %v1886, 5
        %v2007 = vrot.slane %v2006, 4
        %v2008 = vrot.slane %v1887, 5
        %v2009 = vsel %vm1036, %v2007, %v2008
        %v2010 = vrot.slane %v2008, 4
        %v2011 = vrot.slane %v1888, 5
        %v2012 = vsel %vm1036, %v2010, %v2011
        %v2013 = vrot.slane %v1889, 5
        %v2014 = vrot.slane %v2013, 4
        %v2015 = vrot.slane %v1890, 5
        %v2016 = vsel %vm1036, %v2014, %v2015
        %v2017 = vrot.slane %v2015, 4
        %v2018 = vrot.slane %v1891, 5
        %v2019 = vsel %vm1036, %v2017, %v2018
        %v2020 = vrot.slane %v1892, 5
        %v2021 = vrot.slane %v2020, 4
        %v2022 = vrot.slane %v1893, 5
        %v2023 = vsel %vm1036, %v2021, %v2022
        %v2024 = vrot.slane %v2022, 4
        %v2025 = vrot.slane %v1894, 5
        %v2026 = vsel %vm1036, %v2024, %v2025
        %v2027 = vrot.slane %v1895, 5
        %v2028 = vrot.slane %v2027, 4
        %v2029 = vrot.slane %v1896, 5
        %v2030 = vsel %vm1036, %v2028, %v2029
        %v2031 = vrot.slane %v2029, 4
        %v2032 = vrot.slane %v1897, 5
        %v2033 = vsel %vm1036, %v2031, %v2032
        %v2034 = vrot.slane %v1898, 5
        %v2035 = vrot.slane %v2034, 4
        %v2036 = vrot.slane %v1899, 5
        %v2037 = vsel %vm1036, %v2035, %v2036
        %v2038 = vrot.slane %v2036, 4
        %v2039 = vrot.slane %v1900, 5
        %v2040 = vsel %vm1036, %v2038, %v2039
        %v2041 = vrot.slane %v1901, 5
        %v2042 = vrot.slane %v2041, 4
        %v2043 = vrot.slane %v1902, 5
        %v2044 = vsel %vm1036, %v2042, %v2043
        %v2045 = vrot.slane %v2043, 4
        %v2046 = vrot.slane %v1903, 5
        %v2047 = vsel %vm1036, %v2045, %v2046
        %v2048 = vrot.slane %v1904, 5
        %v2049 = vrot.slane %v2048, 4
        %v2050 = vrot.slane %v1905, 5
        %v2051 = vsel %vm1036, %v2049, %v2050
        %v2052 = vrot.slane %v2050, 4
        %v2053 = vrot.slane %v1906, 5
        %v2054 = vsel %vm1036, %v2052, %v2053
        %v2055 = vrot.slane %v1907, 5
        %v2056 = vrot.slane %v2055, 4
        %v2057 = vrot.slane %v1908, 5
        %v2058 = vsel %vm1036, %v2056, %v2057
        %v2059 = vrot.slane %v2057, 4
        %v2060 = vrot.slane %v1909, 5
        %v2061 = vsel %vm1036, %v2059, %v2060
        %v2062 = vrot.slane %v1910, 5
        %v2063 = vrot.slane %v2062, 4
        %v2064 = vrot.slane %v1911, 5
        %v2065 = vsel %vm1036, %v2063, %v2064
        %v2066 = vrot.slane %v2064, 4
        %v2067 = vrot.slane %v1912, 5
        %v2068 = vsel %vm1036, %v2066, %v2067
        %v2069 = vrot.slane %v1913, 5
        %v2070 = vrot.slane %v2069, 4
        %v2071 = vrot.slane %v1914, 5
        %v2072 = vsel %vm1036, %v2070, %v2071
        %v2073 = vrot.slane %v2071, 4
        %v2074 = vrot.slane %v1915, 5
        %v2075 = vsel %vm1036, %v2073, %v2074
        %v2108 = vadd.bf16 %v1812, %v1967
        %v2109 = vadd.bf16 %v1813, %v1970
        %v2110 = vadd.bf16 %v1814, %v1974
        %v2111 = vadd.bf16 %v1815, %v1977
        %v2112 = vadd.bf16 %v1816, %v1981
        %v2113 = vadd.bf16 %v1817, %v1984
        %v2114 = vadd.bf16 %v1818, %v1988
        %v2115 = vadd.bf16 %v1819, %v1991
        %v2116 = vadd.bf16 %v1820, %v1995
        %v2117 = vadd.bf16 %v1821, %v1998
        %v2118 = vadd.bf16 %v1822, %v2002
        %v2119 = vadd.bf16 %v1823, %v2005
        %v2120 = vadd.bf16 %v1824, %v2009
        %v2121 = vadd.bf16 %v1825, %v2012
        %v2122 = vadd.bf16 %v1826, %v2016
        %v2123 = vadd.bf16 %v1827, %v2019
        %v2124 = vadd.bf16 %v1828, %v2023
        %v2125 = vadd.bf16 %v1829, %v2026
        %v2126 = vadd.bf16 %v1830, %v2030
        %v2127 = vadd.bf16 %v1831, %v2033
        %v2128 = vadd.bf16 %v1832, %v2037
        %v2129 = vadd.bf16 %v1833, %v2040
        %v2130 = vadd.bf16 %v1834, %v2044
        %v2131 = vadd.bf16 %v1835, %v2047
        %v2132 = vadd.bf16 %v1836, %v2051
        %v2133 = vadd.bf16 %v1837, %v2054
        %v2134 = vadd.bf16 %v1838, %v2058
        %v2135 = vadd.bf16 %v1839, %v2061
        %v2136 = vadd.bf16 %v1840, %v2065
        %v2137 = vadd.bf16 %v1841, %v2068
        %v2138 = vadd.bf16 %v1842, %v2072
        %v2139 = vadd.bf16 %v1843, %v2075
        %s2140 = scalar_lea.vmem %s276, 24
        %v2141 = vld [vmem:[%s2140] sm:$0xf]
        %v2142 = vld [vmem:[%s2140 + $0x4] sm:$0xf]
        %v2143 = vld [vmem:[%s2140 + $0xc] sm:$0xf]
        %v2144 = vld [vmem:[%s2140 + $0x10] sm:$0xf]
        %v2145 = vld [vmem:[%s2140 + $0x18] sm:$0xf]
        %v2146 = vld [vmem:[%s2140 + $0x1c] sm:$0xf]
        %v2147 = vld [vmem:[%s2140 + $0x24] sm:$0xf]
        %v2148 = vld [vmem:[%s2140 + $0x28] sm:$0xf]
        %v2149 = vld [vmem:[%s2140 + $0x30] sm:$0xf]
        %v2150 = vld [vmem:[%s2140 + $0x34] sm:$0xf]
        %v2151 = vld [vmem:[%s2140 + $0x3c] sm:$0xf]
        %v2152 = vld [vmem:[%s2140 + $0x40] sm:$0xf]
        %v2153 = vld [vmem:[%s2140 + $0x48] sm:$0xf]
        %v2154 = vld [vmem:[%s2140 + $0x4c] sm:$0xf]
        %v2155 = vld [vmem:[%s2140 + $0x54] sm:$0xf]
        %v2156 = vld [vmem:[%s2140 + $0x58] sm:$0xf]
        %v2157 = vld [vmem:[%s2140 + $0x60] sm:$0xf]
        %v2158 = vld [vmem:[%s2140 + $0x64] sm:$0xf]
        %v2159 = vld [vmem:[%s2140 + $0x6c] sm:$0xf]
        %v2160 = vld [vmem:[%s2140 + $0x70] sm:$0xf]
        %v2161 = vld [vmem:[%s2140 + $0x78] sm:$0xf]
        %v2162 = vld [vmem:[%s2140 + $0x7c] sm:$0xf]
        %v2163 = vld [vmem:[%s2140 + $0x84] sm:$0xf]
        %v2164 = vld [vmem:[%s2140 + $0x88] sm:$0xf]
        %v2165 = vld [vmem:[%s2140 + $0x90] sm:$0xf]
        %v2166 = vld [vmem:[%s2140 + $0x94] sm:$0xf]
        %v2167 = vld [vmem:[%s2140 + $0x9c] sm:$0xf]
        %v2168 = vld [vmem:[%s2140 + $0xa0] sm:$0xf]
        %v2169 = vld [vmem:[%s2140 + $0xa8] sm:$0xf]
        %v2170 = vld [vmem:[%s2140 + $0xac] sm:$0xf]
        %v2171 = vld [vmem:[%s2140 + $0xb4] sm:$0xf]
        %v2172 = vld [vmem:[%s2140 + $0xb8] sm:$0xf]
        %v2174 = vpack.i.b16 %v280, %v280
        %v2176 = vlaneseq
        %v2177 = vshrl.u32 %v2176, 7
        %v2178 = vsub.s32 0, %v2177
        %v2179 = vrot.slane %v2174, %v2178
        %v2181 = vunpack.c.l.b16 %v2179
        %v2182 = vpack.c.b16 %v2181, %v2181
        %v2184 = vmul.bf16 %v2141, %v2182
        %v2185 = vmul.bf16 %v2142, %v2182
        %v2186 = vmul.bf16 %v2143, %v2182
        %v2187 = vmul.bf16 %v2144, %v2182
        %v2188 = vmul.bf16 %v2145, %v2182
        %v2189 = vmul.bf16 %v2146, %v2182
        %v2190 = vmul.bf16 %v2147, %v2182
        %v2191 = vmul.bf16 %v2148, %v2182
        %v2192 = vmul.bf16 %v2149, %v2182
        %v2193 = vmul.bf16 %v2150, %v2182
        %v2194 = vmul.bf16 %v2151, %v2182
        %v2195 = vmul.bf16 %v2152, %v2182
        %v2196 = vmul.bf16 %v2153, %v2182
        %v2197 = vmul.bf16 %v2154, %v2182
        %v2198 = vmul.bf16 %v2155, %v2182
        %v2199 = vmul.bf16 %v2156, %v2182
        %v2200 = vmul.bf16 %v2157, %v2182
        %v2201 = vmul.bf16 %v2158, %v2182
        %v2202 = vmul.bf16 %v2159, %v2182
        %v2203 = vmul.bf16 %v2160, %v2182
        %v2204 = vmul.bf16 %v2161, %v2182
        %v2205 = vmul.bf16 %v2162, %v2182
        %v2206 = vmul.bf16 %v2163, %v2182
        %v2207 = vmul.bf16 %v2164, %v2182
        %v2208 = vmul.bf16 %v2165, %v2182
        %v2209 = vmul.bf16 %v2166, %v2182
        %v2210 = vmul.bf16 %v2167, %v2182
        %v2211 = vmul.bf16 %v2168, %v2182
        %v2212 = vmul.bf16 %v2169, %v2182
        %v2213 = vmul.bf16 %v2170, %v2182
        %v2214 = vmul.bf16 %v2171, %v2182
        %v2215 = vmul.bf16 %v2172, %v2182
        %v2216 = vadd.bf16 %v2108, %v2184
        %v2217 = vadd.bf16 %v2109, %v2185
        %v2218 = vadd.bf16 %v2110, %v2186
        %v2219 = vadd.bf16 %v2111, %v2187
        %v2220 = vadd.bf16 %v2112, %v2188
        %v2221 = vadd.bf16 %v2113, %v2189
        %v2222 = vadd.bf16 %v2114, %v2190
        %v2223 = vadd.bf16 %v2115, %v2191
        %v2224 = vadd.bf16 %v2116, %v2192
        %v2225 = vadd.bf16 %v2117, %v2193
        %v2226 = vadd.bf16 %v2118, %v2194
        %v2227 = vadd.bf16 %v2119, %v2195
        %v2228 = vadd.bf16 %v2120, %v2196
        %v2229 = vadd.bf16 %v2121, %v2197
        %v2230 = vadd.bf16 %v2122, %v2198
        %v2231 = vadd.bf16 %v2123, %v2199
        %v2232 = vadd.bf16 %v2124, %v2200
        %v2233 = vadd.bf16 %v2125, %v2201
        %v2234 = vadd.bf16 %v2126, %v2202
        %v2235 = vadd.bf16 %v2127, %v2203
        %v2236 = vadd.bf16 %v2128, %v2204
        %v2237 = vadd.bf16 %v2129, %v2205
        %v2238 = vadd.bf16 %v2130, %v2206
        %v2239 = vadd.bf16 %v2131, %v2207
        %v2240 = vadd.bf16 %v2132, %v2208
        %v2241 = vadd.bf16 %v2133, %v2209
        %v2242 = vadd.bf16 %v2134, %v2210
        %v2243 = vadd.bf16 %v2135, %v2211
        %v2244 = vadd.bf16 %v2136, %v2212
        %v2245 = vadd.bf16 %v2137, %v2213
        %v2246 = vadd.bf16 %v2138, %v2214
        %v2247 = vadd.bf16 %v2139, %v2215
        %v2248 = vld [vmem:[%s2140 + $0x8] sm:$0x1]
        %v2249 = vld [vmem:[%s2140 + $0x14] sm:$0x1]
        %v2250 = vld [vmem:[%s2140 + $0x20] sm:$0x1]
        %v2251 = vld [vmem:[%s2140 + $0x2c] sm:$0x1]
        %v2252 = vld [vmem:[%s2140 + $0x38] sm:$0x1]
        %v2253 = vld [vmem:[%s2140 + $0x44] sm:$0x1]
        %v2254 = vld [vmem:[%s2140 + $0x50] sm:$0x1]
        %v2255 = vld [vmem:[%s2140 + $0x5c] sm:$0x1]
        %v2256 = vld [vmem:[%s2140 + $0x68] sm:$0x1]
        %v2257 = vld [vmem:[%s2140 + $0x74] sm:$0x1]
        %v2258 = vld [vmem:[%s2140 + $0x80] sm:$0x1]
        %v2259 = vld [vmem:[%s2140 + $0x8c] sm:$0x1]
        %v2260 = vld [vmem:[%s2140 + $0x98] sm:$0x1]
        %v2261 = vld [vmem:[%s2140 + $0xa4] sm:$0x1]
        %v2262 = vld [vmem:[%s2140 + $0xb0] sm:$0x1]
        %v2263 = vld [vmem:[%s2140 + $0xbc] sm:$0x1]
        %v2264 = vshrl.u32 %v280, 16
        %v2265 = vpack.i.b16 %v2264, %v2264
        %v2267 = vlaneseq
        %v2268 = vshrl.u32 %v2267, 7
        %v2269 = vsub.s32 0, %v2268
        %v2270 = vrot.slane %v2265, %v2269
        %v2272 = vunpack.c.l.b16 %v2270
        %v2273 = vpack.c.b16 %v2272, %v2272
        %v2275 = vmul.bf16 %v2141, %v2273
        %v2276 = vmul.bf16 %v2142, %v2273
        %v2277 = vmul.bf16 %v2248, %v2273
        %v2278 = vmul.bf16 %v2143, %v2273
        %v2279 = vmul.bf16 %v2144, %v2273
        %v2280 = vmul.bf16 %v2249, %v2273
        %v2281 = vmul.bf16 %v2145, %v2273
        %v2282 = vmul.bf16 %v2146, %v2273
        %v2283 = vmul.bf16 %v2250, %v2273
        %v2284 = vmul.bf16 %v2147, %v2273
        %v2285 = vmul.bf16 %v2148, %v2273
        %v2286 = vmul.bf16 %v2251, %v2273
        %v2287 = vmul.bf16 %v2149, %v2273
        %v2288 = vmul.bf16 %v2150, %v2273
        %v2289 = vmul.bf16 %v2252, %v2273
        %v2290 = vmul.bf16 %v2151, %v2273
        %v2291 = vmul.bf16 %v2152, %v2273
        %v2292 = vmul.bf16 %v2253, %v2273
        %v2293 = vmul.bf16 %v2153, %v2273
        %v2294 = vmul.bf16 %v2154, %v2273
        %v2295 = vmul.bf16 %v2254, %v2273
        %v2296 = vmul.bf16 %v2155, %v2273
        %v2297 = vmul.bf16 %v2156, %v2273
        %v2298 = vmul.bf16 %v2255, %v2273
        %v2299 = vmul.bf16 %v2157, %v2273
        %v2300 = vmul.bf16 %v2158, %v2273
        %v2301 = vmul.bf16 %v2256, %v2273
        %v2302 = vmul.bf16 %v2159, %v2273
        %v2303 = vmul.bf16 %v2160, %v2273
        %v2304 = vmul.bf16 %v2257, %v2273
        %v2305 = vmul.bf16 %v2161, %v2273
        %v2306 = vmul.bf16 %v2162, %v2273
        %v2307 = vmul.bf16 %v2258, %v2273
        %v2308 = vmul.bf16 %v2163, %v2273
        %v2309 = vmul.bf16 %v2164, %v2273
        %v2310 = vmul.bf16 %v2259, %v2273
        %v2311 = vmul.bf16 %v2165, %v2273
        %v2312 = vmul.bf16 %v2166, %v2273
        %v2313 = vmul.bf16 %v2260, %v2273
        %v2314 = vmul.bf16 %v2167, %v2273
        %v2315 = vmul.bf16 %v2168, %v2273
        %v2316 = vmul.bf16 %v2261, %v2273
        %v2317 = vmul.bf16 %v2169, %v2273
        %v2318 = vmul.bf16 %v2170, %v2273
        %v2319 = vmul.bf16 %v2262, %v2273
        %v2320 = vmul.bf16 %v2171, %v2273
        %v2321 = vmul.bf16 %v2172, %v2273
        %v2322 = vmul.bf16 %v2263, %v2273
        %v2324 = vshrl.u32 %v2275, 16
        %v2326 = vrot.slane %v2324, 4
        %v2327 = vshll.u32 %v2275, 16
        %v2329 = vrot.slane %v2327, 5
        %v2330 = vor.u32 %v2326, %v2329
        %v2331 = vrot.slane %v2330, 4
        %v2333 = vshll.u32 %v2276, 16
        %v2335 = vrot.slane %v2333, 5
        %v2336 = vsel %vm465, %v2331, %v2335
        %v2337 = vshrl.u32 %v2276, 16
        %v2339 = vrot.slane %v2337, 4
        %v2340 = vor.u32 %v2339, %v2335
        %v2341 = vrot.slane %v2340, 4
        %v2343 = vshll.u32 %v2277, 16
        %v2345 = vrot.slane %v2343, 5
        %v2346 = vsel %vm465, %v2341, %v2345
        %v2348 = vshrl.u32 %v2278, 16
        %v2350 = vrot.slane %v2348, 4
        %v2351 = vshll.u32 %v2278, 16
        %v2353 = vrot.slane %v2351, 5
        %v2354 = vor.u32 %v2350, %v2353
        %v2355 = vrot.slane %v2354, 4
        %v2357 = vshll.u32 %v2279, 16
        %v2359 = vrot.slane %v2357, 5
        %v2360 = vsel %vm465, %v2355, %v2359
        %v2361 = vshrl.u32 %v2279, 16
        %v2363 = vrot.slane %v2361, 4
        %v2364 = vor.u32 %v2363, %v2359
        %v2365 = vrot.slane %v2364, 4
        %v2367 = vshll.u32 %v2280, 16
        %v2369 = vrot.slane %v2367, 5
        %v2370 = vsel %vm465, %v2365, %v2369
        %v2372 = vshrl.u32 %v2281, 16
        %v2374 = vrot.slane %v2372, 4
        %v2375 = vshll.u32 %v2281, 16
        %v2377 = vrot.slane %v2375, 5
        %v2378 = vor.u32 %v2374, %v2377
        %v2379 = vrot.slane %v2378, 4
        %v2381 = vshll.u32 %v2282, 16
        %v2383 = vrot.slane %v2381, 5
        %v2384 = vsel %vm465, %v2379, %v2383
        %v2385 = vshrl.u32 %v2282, 16
        %v2387 = vrot.slane %v2385, 4
        %v2388 = vor.u32 %v2387, %v2383
        %v2389 = vrot.slane %v2388, 4
        %v2391 = vshll.u32 %v2283, 16
        %v2393 = vrot.slane %v2391, 5
        %v2394 = vsel %vm465, %v2389, %v2393
        %v2396 = vshrl.u32 %v2284, 16
        %v2398 = vrot.slane %v2396, 4
        %v2399 = vshll.u32 %v2284, 16
        %v2401 = vrot.slane %v2399, 5
        %v2402 = vor.u32 %v2398, %v2401
        %v2403 = vrot.slane %v2402, 4
        %v2405 = vshll.u32 %v2285, 16
        %v2407 = vrot.slane %v2405, 5
        %v2408 = vsel %vm465, %v2403, %v2407
        %v2409 = vshrl.u32 %v2285, 16
        %v2411 = vrot.slane %v2409, 4
        %v2412 = vor.u32 %v2411, %v2407
        %v2413 = vrot.slane %v2412, 4
        %v2415 = vshll.u32 %v2286, 16
        %v2417 = vrot.slane %v2415, 5
        %v2418 = vsel %vm465, %v2413, %v2417
        %v2420 = vshrl.u32 %v2287, 16
        %v2422 = vrot.slane %v2420, 4
        %v2423 = vshll.u32 %v2287, 16
        %v2425 = vrot.slane %v2423, 5
        %v2426 = vor.u32 %v2422, %v2425
        %v2427 = vrot.slane %v2426, 4
        %v2429 = vshll.u32 %v2288, 16
        %v2431 = vrot.slane %v2429, 5
        %v2432 = vsel %vm465, %v2427, %v2431
        %v2433 = vshrl.u32 %v2288, 16
        %v2435 = vrot.slane %v2433, 4
        %v2436 = vor.u32 %v2435, %v2431
        %v2437 = vrot.slane %v2436, 4
        %v2439 = vshll.u32 %v2289, 16
        %v2441 = vrot.slane %v2439, 5
        %v2442 = vsel %vm465, %v2437, %v2441
        %v2444 = vshrl.u32 %v2290, 16
        %v2446 = vrot.slane %v2444, 4
        %v2447 = vshll.u32 %v2290, 16
        %v2449 = vrot.slane %v2447, 5
        %v2450 = vor.u32 %v2446, %v2449
        %v2451 = vrot.slane %v2450, 4
        %v2453 = vshll.u32 %v2291, 16
        %v2455 = vrot.slane %v2453, 5
        %v2456 = vsel %vm465, %v2451, %v2455
        %v2457 = vshrl.u32 %v2291, 16
        %v2459 = vrot.slane %v2457, 4
        %v2460 = vor.u32 %v2459, %v2455
        %v2461 = vrot.slane %v2460, 4
        %v2463 = vshll.u32 %v2292, 16
        %v2465 = vrot.slane %v2463, 5
        %v2466 = vsel %vm465, %v2461, %v2465
        %v2468 = vshrl.u32 %v2293, 16
        %v2470 = vrot.slane %v2468, 4
        %v2471 = vshll.u32 %v2293, 16
        %v2473 = vrot.slane %v2471, 5
        %v2474 = vor.u32 %v2470, %v2473
        %v2475 = vrot.slane %v2474, 4
        %v2477 = vshll.u32 %v2294, 16
        %v2479 = vrot.slane %v2477, 5
        %v2480 = vsel %vm465, %v2475, %v2479
        %v2481 = vshrl.u32 %v2294, 16
        %v2483 = vrot.slane %v2481, 4
        %v2484 = vor.u32 %v2483, %v2479
        %v2485 = vrot.slane %v2484, 4
        %v2487 = vshll.u32 %v2295, 16
        %v2489 = vrot.slane %v2487, 5
        %v2490 = vsel %vm465, %v2485, %v2489
        %v2492 = vshrl.u32 %v2296, 16
        %v2494 = vrot.slane %v2492, 4
        %v2495 = vshll.u32 %v2296, 16
        %v2497 = vrot.slane %v2495, 5
        %v2498 = vor.u32 %v2494, %v2497
        %v2499 = vrot.slane %v2498, 4
        %v2501 = vshll.u32 %v2297, 16
        %v2503 = vrot.slane %v2501, 5
        %v2504 = vsel %vm465, %v2499, %v2503
        %v2505 = vshrl.u32 %v2297, 16
        %v2507 = vrot.slane %v2505, 4
        %v2508 = vor.u32 %v2507, %v2503
        %v2509 = vrot.slane %v2508, 4
        %v2511 = vshll.u32 %v2298, 16
        %v2513 = vrot.slane %v2511, 5
        %v2514 = vsel %vm465, %v2509, %v2513
        %v2516 = vshrl.u32 %v2299, 16
        %v2518 = vrot.slane %v2516, 4
        %v2519 = vshll.u32 %v2299, 16
        %v2521 = vrot.slane %v2519, 5
        %v2522 = vor.u32 %v2518, %v2521
        %v2523 = vrot.slane %v2522, 4
        %v2525 = vshll.u32 %v2300, 16
        %v2527 = vrot.slane %v2525, 5
        %v2528 = vsel %vm465, %v2523, %v2527
        %v2529 = vshrl.u32 %v2300, 16
        %v2531 = vrot.slane %v2529, 4
        %v2532 = vor.u32 %v2531, %v2527
        %v2533 = vrot.slane %v2532, 4
        %v2535 = vshll.u32 %v2301, 16
        %v2537 = vrot.slane %v2535, 5
        %v2538 = vsel %vm465, %v2533, %v2537
        %v2540 = vshrl.u32 %v2302, 16
        %v2542 = vrot.slane %v2540, 4
        %v2543 = vshll.u32 %v2302, 16
        %v2545 = vrot.slane %v2543, 5
        %v2546 = vor.u32 %v2542, %v2545
        %v2547 = vrot.slane %v2546, 4
        %v2549 = vshll.u32 %v2303, 16
        %v2551 = vrot.slane %v2549, 5
        %v2552 = vsel %vm465, %v2547, %v2551
        %v2553 = vshrl.u32 %v2303, 16
        %v2555 = vrot.slane %v2553, 4
        %v2556 = vor.u32 %v2555, %v2551
        %v2557 = vrot.slane %v2556, 4
        %v2559 = vshll.u32 %v2304, 16
        %v2561 = vrot.slane %v2559, 5
        %v2562 = vsel %vm465, %v2557, %v2561
        %v2564 = vshrl.u32 %v2305, 16
        %v2566 = vrot.slane %v2564, 4
        %v2567 = vshll.u32 %v2305, 16
        %v2569 = vrot.slane %v2567, 5
        %v2570 = vor.u32 %v2566, %v2569
        %v2571 = vrot.slane %v2570, 4
        %v2573 = vshll.u32 %v2306, 16
        %v2575 = vrot.slane %v2573, 5
        %v2576 = vsel %vm465, %v2571, %v2575
        %v2577 = vshrl.u32 %v2306, 16
        %v2579 = vrot.slane %v2577, 4
        %v2580 = vor.u32 %v2579, %v2575
        %v2581 = vrot.slane %v2580, 4
        %v2583 = vshll.u32 %v2307, 16
        %v2585 = vrot.slane %v2583, 5
        %v2586 = vsel %vm465, %v2581, %v2585
        %v2588 = vshrl.u32 %v2308, 16
        %v2590 = vrot.slane %v2588, 4
        %v2591 = vshll.u32 %v2308, 16
        %v2593 = vrot.slane %v2591, 5
        %v2594 = vor.u32 %v2590, %v2593
        %v2595 = vrot.slane %v2594, 4
        %v2597 = vshll.u32 %v2309, 16
        %v2599 = vrot.slane %v2597, 5
        %v2600 = vsel %vm465, %v2595, %v2599
        %v2601 = vshrl.u32 %v2309, 16
        %v2603 = vrot.slane %v2601, 4
        %v2604 = vor.u32 %v2603, %v2599
        %v2605 = vrot.slane %v2604, 4
        %v2607 = vshll.u32 %v2310, 16
        %v2609 = vrot.slane %v2607, 5
        %v2610 = vsel %vm465, %v2605, %v2609
        %v2612 = vshrl.u32 %v2311, 16
        %v2614 = vrot.slane %v2612, 4
        %v2615 = vshll.u32 %v2311, 16
        %v2617 = vrot.slane %v2615, 5
        %v2618 = vor.u32 %v2614, %v2617
        %v2619 = vrot.slane %v2618, 4
        %v2621 = vshll.u32 %v2312, 16
        %v2623 = vrot.slane %v2621, 5
        %v2624 = vsel %vm465, %v2619, %v2623
        %v2625 = vshrl.u32 %v2312, 16
        %v2627 = vrot.slane %v2625, 4
        %v2628 = vor.u32 %v2627, %v2623
        %v2629 = vrot.slane %v2628, 4
        %v2631 = vshll.u32 %v2313, 16
        %v2633 = vrot.slane %v2631, 5
        %v2634 = vsel %vm465, %v2629, %v2633
        %v2636 = vshrl.u32 %v2314, 16
        %v2638 = vrot.slane %v2636, 4
        %v2639 = vshll.u32 %v2314, 16
        %v2641 = vrot.slane %v2639, 5
        %v2642 = vor.u32 %v2638, %v2641
        %v2643 = vrot.slane %v2642, 4
        %v2645 = vshll.u32 %v2315, 16
        %v2647 = vrot.slane %v2645, 5
        %v2648 = vsel %vm465, %v2643, %v2647
        %v2649 = vshrl.u32 %v2315, 16
        %v2651 = vrot.slane %v2649, 4
        %v2652 = vor.u32 %v2651, %v2647
        %v2653 = vrot.slane %v2652, 4
        %v2655 = vshll.u32 %v2316, 16
        %v2657 = vrot.slane %v2655, 5
        %v2658 = vsel %vm465, %v2653, %v2657
        %v2660 = vshrl.u32 %v2317, 16
        %v2662 = vrot.slane %v2660, 4
        %v2663 = vshll.u32 %v2317, 16
        %v2665 = vrot.slane %v2663, 5
        %v2666 = vor.u32 %v2662, %v2665
        %v2667 = vrot.slane %v2666, 4
        %v2669 = vshll.u32 %v2318, 16
        %v2671 = vrot.slane %v2669, 5
        %v2672 = vsel %vm465, %v2667, %v2671
        %v2673 = vshrl.u32 %v2318, 16
        %v2675 = vrot.slane %v2673, 4
        %v2676 = vor.u32 %v2675, %v2671
        %v2677 = vrot.slane %v2676, 4
        %v2679 = vshll.u32 %v2319, 16
        %v2681 = vrot.slane %v2679, 5
        %v2682 = vsel %vm465, %v2677, %v2681
        %v2684 = vshrl.u32 %v2320, 16
        %v2686 = vrot.slane %v2684, 4
        %v2687 = vshll.u32 %v2320, 16
        %v2689 = vrot.slane %v2687, 5
        %v2690 = vor.u32 %v2686, %v2689
        %v2691 = vrot.slane %v2690, 4
        %v2693 = vshll.u32 %v2321, 16
        %v2695 = vrot.slane %v2693, 5
        %v2696 = vsel %vm465, %v2691, %v2695
        %v2697 = vshrl.u32 %v2321, 16
        %v2699 = vrot.slane %v2697, 4
        %v2700 = vor.u32 %v2699, %v2695
        %v2701 = vrot.slane %v2700, 4
        %v2703 = vshll.u32 %v2322, 16
        %v2705 = vrot.slane %v2703, 5
        %v2706 = vsel %vm465, %v2701, %v2705
        %v2739 = vadd.bf16 %v2216, %v2336
        %v2740 = vadd.bf16 %v2217, %v2346
        %v2741 = vadd.bf16 %v2218, %v2360
        %v2742 = vadd.bf16 %v2219, %v2370
        %v2743 = vadd.bf16 %v2220, %v2384
        %v2744 = vadd.bf16 %v2221, %v2394
        %v2745 = vadd.bf16 %v2222, %v2408
        %v2746 = vadd.bf16 %v2223, %v2418
        %v2747 = vadd.bf16 %v2224, %v2432
        %v2748 = vadd.bf16 %v2225, %v2442
        %v2749 = vadd.bf16 %v2226, %v2456
        %v2750 = vadd.bf16 %v2227, %v2466
        %v2751 = vadd.bf16 %v2228, %v2480
        %v2752 = vadd.bf16 %v2229, %v2490
        %v2753 = vadd.bf16 %v2230, %v2504
        %v2754 = vadd.bf16 %v2231, %v2514
        %v2755 = vadd.bf16 %v2232, %v2528
        %v2756 = vadd.bf16 %v2233, %v2538
        %v2757 = vadd.bf16 %v2234, %v2552
        %v2758 = vadd.bf16 %v2235, %v2562
        %v2759 = vadd.bf16 %v2236, %v2576
        %v2760 = vadd.bf16 %v2237, %v2586
        %v2761 = vadd.bf16 %v2238, %v2600
        %v2762 = vadd.bf16 %v2239, %v2610
        %v2763 = vadd.bf16 %v2240, %v2624
        %v2764 = vadd.bf16 %v2241, %v2634
        %v2765 = vadd.bf16 %v2242, %v2648
        %v2766 = vadd.bf16 %v2243, %v2658
        %v2767 = vadd.bf16 %v2244, %v2672
        %v2768 = vadd.bf16 %v2245, %v2682
        %v2769 = vadd.bf16 %v2246, %v2696
        %v2770 = vadd.bf16 %v2247, %v2706
        %v2771 = vld [vmem:[%s2140] sm:$0xe]
        %v2772 = vld [vmem:[%s2140 + $0xc] sm:$0xe]
        %v2773 = vld [vmem:[%s2140 + $0x18] sm:$0xe]
        %v2774 = vld [vmem:[%s2140 + $0x24] sm:$0xe]
        %v2775 = vld [vmem:[%s2140 + $0x30] sm:$0xe]
        %v2776 = vld [vmem:[%s2140 + $0x3c] sm:$0xe]
        %v2777 = vld [vmem:[%s2140 + $0x48] sm:$0xe]
        %v2778 = vld [vmem:[%s2140 + $0x54] sm:$0xe]
        %v2779 = vld [vmem:[%s2140 + $0x60] sm:$0xe]
        %v2780 = vld [vmem:[%s2140 + $0x6c] sm:$0xe]
        %v2781 = vld [vmem:[%s2140 + $0x78] sm:$0xe]
        %v2782 = vld [vmem:[%s2140 + $0x84] sm:$0xe]
        %v2783 = vld [vmem:[%s2140 + $0x90] sm:$0xe]
        %v2784 = vld [vmem:[%s2140 + $0x9c] sm:$0xe]
        %v2785 = vld [vmem:[%s2140 + $0xa8] sm:$0xe]
        %v2786 = vld [vmem:[%s2140 + $0xb4] sm:$0xe]
        %v2787 = vlaneseq
        %v2788 = vshrl.u32 %v2787, 7
        %v2789 = vsub.s32 1, %v2788
        %v2790 = vrot.slane %v2174, %v2789
        %v2792 = vunpack.c.l.b16 %v2790
        %v2793 = vpack.c.b16 %v2792, %v2792
        %v2795 = vmul.bf16 %v2771, %v2793
        %v2796 = vmul.bf16 %v2142, %v2793
        %v2797 = vmul.bf16 %v2248, %v2793
        %v2798 = vmul.bf16 %v2772, %v2793
        %v2799 = vmul.bf16 %v2144, %v2793
        %v2800 = vmul.bf16 %v2249, %v2793
        %v2801 = vmul.bf16 %v2773, %v2793
        %v2802 = vmul.bf16 %v2146, %v2793
        %v2803 = vmul.bf16 %v2250, %v2793
        %v2804 = vmul.bf16 %v2774, %v2793
        %v2805 = vmul.bf16 %v2148, %v2793
        %v2806 = vmul.bf16 %v2251, %v2793
        %v2807 = vmul.bf16 %v2775, %v2793
        %v2808 = vmul.bf16 %v2150, %v2793
        %v2809 = vmul.bf16 %v2252, %v2793
        %v2810 = vmul.bf16 %v2776, %v2793
        %v2811 = vmul.bf16 %v2152, %v2793
        %v2812 = vmul.bf16 %v2253, %v2793
        %v2813 = vmul.bf16 %v2777, %v2793
        %v2814 = vmul.bf16 %v2154, %v2793
        %v2815 = vmul.bf16 %v2254, %v2793
        %v2816 = vmul.bf16 %v2778, %v2793
        %v2817 = vmul.bf16 %v2156, %v2793
        %v2818 = vmul.bf16 %v2255, %v2793
        %v2819 = vmul.bf16 %v2779, %v2793
        %v2820 = vmul.bf16 %v2158, %v2793
        %v2821 = vmul.bf16 %v2256, %v2793
        %v2822 = vmul.bf16 %v2780, %v2793
        %v2823 = vmul.bf16 %v2160, %v2793
        %v2824 = vmul.bf16 %v2257, %v2793
        %v2825 = vmul.bf16 %v2781, %v2793
        %v2826 = vmul.bf16 %v2162, %v2793
        %v2827 = vmul.bf16 %v2258, %v2793
        %v2828 = vmul.bf16 %v2782, %v2793
        %v2829 = vmul.bf16 %v2164, %v2793
        %v2830 = vmul.bf16 %v2259, %v2793
        %v2831 = vmul.bf16 %v2783, %v2793
        %v2832 = vmul.bf16 %v2166, %v2793
        %v2833 = vmul.bf16 %v2260, %v2793
        %v2834 = vmul.bf16 %v2784, %v2793
        %v2835 = vmul.bf16 %v2168, %v2793
        %v2836 = vmul.bf16 %v2261, %v2793
        %v2837 = vmul.bf16 %v2785, %v2793
        %v2838 = vmul.bf16 %v2170, %v2793
        %v2839 = vmul.bf16 %v2262, %v2793
        %v2840 = vmul.bf16 %v2786, %v2793
        %v2841 = vmul.bf16 %v2172, %v2793
        %v2842 = vmul.bf16 %v2263, %v2793
        %v2891 = vrot.slane %v2795, 5
        %v2892 = vrot.slane %v2891, 4
        %v2893 = vrot.slane %v2796, 5
        %v2894 = vsel %vm1036, %v2892, %v2893
        %v2895 = vrot.slane %v2893, 4
        %v2896 = vrot.slane %v2797, 5
        %v2897 = vsel %vm1036, %v2895, %v2896
        %v2898 = vrot.slane %v2798, 5
        %v2899 = vrot.slane %v2898, 4
        %v2900 = vrot.slane %v2799, 5
        %v2901 = vsel %vm1036, %v2899, %v2900
        %v2902 = vrot.slane %v2900, 4
        %v2903 = vrot.slane %v2800, 5
        %v2904 = vsel %vm1036, %v2902, %v2903
        %v2905 = vrot.slane %v2801, 5
        %v2906 = vrot.slane %v2905, 4
        %v2907 = vrot.slane %v2802, 5
        %v2908 = vsel %vm1036, %v2906, %v2907
        %v2909 = vrot.slane %v2907, 4
        %v2910 = vrot.slane %v2803, 5
        %v2911 = vsel %vm1036, %v2909, %v2910
        %v2912 = vrot.slane %v2804, 5
        %v2913 = vrot.slane %v2912, 4
        %v2914 = vrot.slane %v2805, 5
        %v2915 = vsel %vm1036, %v2913, %v2914
        %v2916 = vrot.slane %v2914, 4
        %v2917 = vrot.slane %v2806, 5
        %v2918 = vsel %vm1036, %v2916, %v2917
        %v2919 = vrot.slane %v2807, 5
        %v2920 = vrot.slane %v2919, 4
        %v2921 = vrot.slane %v2808, 5
        %v2922 = vsel %vm1036, %v2920, %v2921
        %v2923 = vrot.slane %v2921, 4
        %v2924 = vrot.slane %v2809, 5
        %v2925 = vsel %vm1036, %v2923, %v2924
        %v2926 = vrot.slane %v2810, 5
        %v2927 = vrot.slane %v2926, 4
        %v2928 = vrot.slane %v2811, 5
        %v2929 = vsel %vm1036, %v2927, %v2928
        %v2930 = vrot.slane %v2928, 4
        %v2931 = vrot.slane %v2812, 5
        %v2932 = vsel %vm1036, %v2930, %v2931
        %v2933 = vrot.slane %v2813, 5
        %v2934 = vrot.slane %v2933, 4
        %v2935 = vrot.slane %v2814, 5
        %v2936 = vsel %vm1036, %v2934, %v2935
        %v2937 = vrot.slane %v2935, 4
        %v2938 = vrot.slane %v2815, 5
        %v2939 = vsel %vm1036, %v2937, %v2938
        %v2940 = vrot.slane %v2816, 5
        %v2941 = vrot.slane %v2940, 4
        %v2942 = vrot.slane %v2817, 5
        %v2943 = vsel %vm1036, %v2941, %v2942
        %v2944 = vrot.slane %v2942, 4
        %v2945 = vrot.slane %v2818, 5
        %v2946 = vsel %vm1036, %v2944, %v2945
        %v2947 = vrot.slane %v2819, 5
        %v2948 = vrot.slane %v2947, 4
        %v2949 = vrot.slane %v2820, 5
        %v2950 = vsel %vm1036, %v2948, %v2949
        %v2951 = vrot.slane %v2949, 4
        %v2952 = vrot.slane %v2821, 5
        %v2953 = vsel %vm1036, %v2951, %v2952
        %v2954 = vrot.slane %v2822, 5
        %v2955 = vrot.slane %v2954, 4
        %v2956 = vrot.slane %v2823, 5
        %v2957 = vsel %vm1036, %v2955, %v2956
        %v2958 = vrot.slane %v2956, 4
        %v2959 = vrot.slane %v2824, 5
        %v2960 = vsel %vm1036, %v2958, %v2959
        %v2961 = vrot.slane %v2825, 5
        %v2962 = vrot.slane %v2961, 4
        %v2963 = vrot.slane %v2826, 5
        %v2964 = vsel %vm1036, %v2962, %v2963
        %v2965 = vrot.slane %v2963, 4
        %v2966 = vrot.slane %v2827, 5
        %v2967 = vsel %vm1036, %v2965, %v2966
        %v2968 = vrot.slane %v2828, 5
        %v2969 = vrot.slane %v2968, 4
        %v2970 = vrot.slane %v2829, 5
        %v2971 = vsel %vm1036, %v2969, %v2970
        %v2972 = vrot.slane %v2970, 4
        %v2973 = vrot.slane %v2830, 5
        %v2974 = vsel %vm1036, %v2972, %v2973
        %v2975 = vrot.slane %v2831, 5
        %v2976 = vrot.slane %v2975, 4
        %v2977 = vrot.slane %v2832, 5
        %v2978 = vsel %vm1036, %v2976, %v2977
        %v2979 = vrot.slane %v2977, 4
        %v2980 = vrot.slane %v2833, 5
        %v2981 = vsel %vm1036, %v2979, %v2980
        %v2982 = vrot.slane %v2834, 5
        %v2983 = vrot.slane %v2982, 4
        %v2984 = vrot.slane %v2835, 5
        %v2985 = vsel %vm1036, %v2983, %v2984
        %v2986 = vrot.slane %v2984, 4
        %v2987 = vrot.slane %v2836, 5
        %v2988 = vsel %vm1036, %v2986, %v2987
        %v2989 = vrot.slane %v2837, 5
        %v2990 = vrot.slane %v2989, 4
        %v2991 = vrot.slane %v2838, 5
        %v2992 = vsel %vm1036, %v2990, %v2991
        %v2993 = vrot.slane %v2991, 4
        %v2994 = vrot.slane %v2839, 5
        %v2995 = vsel %vm1036, %v2993, %v2994
        %v2996 = vrot.slane %v2840, 5
        %v2997 = vrot.slane %v2996, 4
        %v2998 = vrot.slane %v2841, 5
        %v2999 = vsel %vm1036, %v2997, %v2998
        %v3000 = vrot.slane %v2998, 4
        %v3001 = vrot.slane %v2842, 5
        %v3002 = vsel %vm1036, %v3000, %v3001
        %v3035 = vadd.bf16 %v2739, %v2894
        %v3036 = vadd.bf16 %v2740, %v2897
        %v3037 = vadd.bf16 %v2741, %v2901
        %v3038 = vadd.bf16 %v2742, %v2904
        %v3039 = vadd.bf16 %v2743, %v2908
        %v3040 = vadd.bf16 %v2744, %v2911
        %v3041 = vadd.bf16 %v2745, %v2915
        %v3042 = vadd.bf16 %v2746, %v2918
        %v3043 = vadd.bf16 %v2747, %v2922
        %v3044 = vadd.bf16 %v2748, %v2925
        %v3045 = vadd.bf16 %v2749, %v2929
        %v3046 = vadd.bf16 %v2750, %v2932
        %v3047 = vadd.bf16 %v2751, %v2936
        %v3048 = vadd.bf16 %v2752, %v2939
        %v3049 = vadd.bf16 %v2753, %v2943
        %v3050 = vadd.bf16 %v2754, %v2946
        %v3051 = vadd.bf16 %v2755, %v2950
        %v3052 = vadd.bf16 %v2756, %v2953
        %v3053 = vadd.bf16 %v2757, %v2957
        %v3054 = vadd.bf16 %v2758, %v2960
        %v3055 = vadd.bf16 %v2759, %v2964
        %v3056 = vadd.bf16 %v2760, %v2967
        %v3057 = vadd.bf16 %v2761, %v2971
        %v3058 = vadd.bf16 %v2762, %v2974
        %v3059 = vadd.bf16 %v2763, %v2978
        %v3060 = vadd.bf16 %v2764, %v2981
        %v3061 = vadd.bf16 %v2765, %v2985
        %v3062 = vadd.bf16 %v2766, %v2988
        %v3063 = vadd.bf16 %v2767, %v2992
        %v3064 = vadd.bf16 %v2768, %v2995
        %v3065 = vadd.bf16 %v2769, %v2999
        %v3066 = vadd.bf16 %v2770, %v3002
        %v3067 = vunpack.c.l.bf16 %v3035
        %v3068 = vunpack.c.l.bf16 %v3036
        %v3069 = vunpack.c.l.bf16 %v3037
        %v3070 = vunpack.c.l.bf16 %v3038
        %v3071 = vunpack.c.l.bf16 %v3039
        %v3072 = vunpack.c.l.bf16 %v3040
        %v3073 = vunpack.c.l.bf16 %v3041
        %v3074 = vunpack.c.l.bf16 %v3042
        %v3075 = vunpack.c.l.bf16 %v3043
        %v3076 = vunpack.c.l.bf16 %v3044
        %v3077 = vunpack.c.l.bf16 %v3045
        %v3078 = vunpack.c.l.bf16 %v3046
        %v3079 = vunpack.c.l.bf16 %v3047
        %v3080 = vunpack.c.l.bf16 %v3048
        %v3081 = vunpack.c.l.bf16 %v3049
        %v3082 = vunpack.c.l.bf16 %v3050
        %v3083 = vunpack.c.l.bf16 %v3051
        %v3084 = vunpack.c.l.bf16 %v3052
        %v3085 = vunpack.c.l.bf16 %v3053
        %v3086 = vunpack.c.l.bf16 %v3054
        %v3087 = vunpack.c.l.bf16 %v3055
        %v3088 = vunpack.c.l.bf16 %v3056
        %v3089 = vunpack.c.l.bf16 %v3057
        %v3090 = vunpack.c.l.bf16 %v3058
        %v3091 = vunpack.c.l.bf16 %v3059
        %v3092 = vunpack.c.l.bf16 %v3060
        %v3093 = vunpack.c.l.bf16 %v3061
        %v3094 = vunpack.c.l.bf16 %v3062
        %v3095 = vunpack.c.l.bf16 %v3063
        %v3096 = vunpack.c.l.bf16 %v3064
        %v3097 = vunpack.c.l.bf16 %v3065
        %v3098 = vunpack.c.l.bf16 %v3066
        %v3099 = vld [vmem:[%s3] sm:$0x1]
        %v3101 = vlaneseq
        %v3102 = vshrl.u32 %v3101, 7
        %v3103 = vsub.s32 0, %v3102
        %v3104 = vrot.slane %v3099, %v3103
        %vm3106 = vcmp.gt.f32.partialorder %v3067, %v3104
        %vm3107 = vcmp.gt.f32.partialorder %v3068, %v3104
        %vm3108 = vcmp.gt.f32.partialorder %v3069, %v3104
        %vm3109 = vcmp.gt.f32.partialorder %v3070, %v3104
        %vm3110 = vcmp.gt.f32.partialorder %v3071, %v3104
        %vm3111 = vcmp.gt.f32.partialorder %v3072, %v3104
        %vm3112 = vcmp.gt.f32.partialorder %v3073, %v3104
        %vm3113 = vcmp.gt.f32.partialorder %v3074, %v3104
        %vm3114 = vcmp.gt.f32.partialorder %v3075, %v3104
        %vm3115 = vcmp.gt.f32.partialorder %v3076, %v3104
        %vm3116 = vcmp.gt.f32.partialorder %v3077, %v3104
        %vm3117 = vcmp.gt.f32.partialorder %v3078, %v3104
        %vm3118 = vcmp.gt.f32.partialorder %v3079, %v3104
        %vm3119 = vcmp.gt.f32.partialorder %v3080, %v3104
        %vm3120 = vcmp.gt.f32.partialorder %v3081, %v3104
        %vm3121 = vcmp.gt.f32.partialorder %v3082, %v3104
        %vm3122 = vcmp.gt.f32.partialorder %v3083, %v3104
        %vm3123 = vcmp.gt.f32.partialorder %v3084, %v3104
        %vm3124 = vcmp.gt.f32.partialorder %v3085, %v3104
        %vm3125 = vcmp.gt.f32.partialorder %v3086, %v3104
        %vm3126 = vcmp.gt.f32.partialorder %v3087, %v3104
        %vm3127 = vcmp.gt.f32.partialorder %v3088, %v3104
        %vm3128 = vcmp.gt.f32.partialorder %v3089, %v3104
        %vm3129 = vcmp.gt.f32.partialorder %v3090, %v3104
        %vm3130 = vcmp.gt.f32.partialorder %v3091, %v3104
        %vm3131 = vcmp.gt.f32.partialorder %v3092, %v3104
        %vm3132 = vcmp.gt.f32.partialorder %v3093, %v3104
        %vm3133 = vcmp.gt.f32.partialorder %v3094, %v3104
        %vm3134 = vcmp.gt.f32.partialorder %v3095, %v3104
        %vm3135 = vcmp.gt.f32.partialorder %v3096, %v3104
        %vm3136 = vcmp.gt.f32.partialorder %v3097, %v3104
        %vm3137 = vcmp.gt.f32.partialorder %v3098, %v3104
        %v3138 = vsel %vm3106, 1, 0
        %v3139 = vsel %vm3107, 1, 0
        %v3140 = vsel %vm3108, 1, 0
        %v3141 = vsel %vm3109, 1, 0
        %v3142 = vsel %vm3110, 1, 0
        %v3143 = vsel %vm3111, 1, 0
        %v3144 = vsel %vm3112, 1, 0
        %v3145 = vsel %vm3113, 1, 0
        %v3146 = vsel %vm3114, 1, 0
        %v3147 = vsel %vm3115, 1, 0
        %v3148 = vsel %vm3116, 1, 0
        %v3149 = vsel %vm3117, 1, 0
        %v3150 = vsel %vm3118, 1, 0
        %v3151 = vsel %vm3119, 1, 0
        %v3152 = vsel %vm3120, 1, 0
        %v3153 = vsel %vm3121, 1, 0
        %v3154 = vsel %vm3122, 1, 0
        %v3155 = vsel %vm3123, 1, 0
        %v3156 = vsel %vm3124, 1, 0
        %v3157 = vsel %vm3125, 1, 0
        %v3158 = vsel %vm3126, 1, 0
        %v3159 = vsel %vm3127, 1, 0
        %v3160 = vsel %vm3128, 1, 0
        %v3161 = vsel %vm3129, 1, 0
        %v3162 = vsel %vm3130, 1, 0
        %v3163 = vsel %vm3131, 1, 0
        %v3164 = vsel %vm3132, 1, 0
        %v3165 = vsel %vm3133, 1, 0
        %v3166 = vsel %vm3134, 1, 0
        %v3167 = vsel %vm3135, 1, 0
        %v3168 = vsel %vm3136, 1, 0
        %v3169 = vsel %vm3137, 1, 0
        %v3170 = vcvt.s32.f32 %v3138
        %v3171 = vcvt.s32.f32 %v3139
        %v3172 = vcvt.s32.f32 %v3140
        %v3173 = vcvt.s32.f32 %v3141
        %v3174 = vcvt.s32.f32 %v3142
        %v3175 = vcvt.s32.f32 %v3143
        %v3176 = vcvt.s32.f32 %v3144
        %v3177 = vcvt.s32.f32 %v3145
        %v3178 = vcvt.s32.f32 %v3146
        %v3179 = vcvt.s32.f32 %v3147
        %v3180 = vcvt.s32.f32 %v3148
        %v3181 = vcvt.s32.f32 %v3149
        %v3182 = vcvt.s32.f32 %v3150
        %v3183 = vcvt.s32.f32 %v3151
        %v3184 = vcvt.s32.f32 %v3152
        %v3185 = vcvt.s32.f32 %v3153
        %v3186 = vcvt.s32.f32 %v3154
        %v3187 = vcvt.s32.f32 %v3155
        %v3188 = vcvt.s32.f32 %v3156
        %v3189 = vcvt.s32.f32 %v3157
        %v3190 = vcvt.s32.f32 %v3158
        %v3191 = vcvt.s32.f32 %v3159
        %v3192 = vcvt.s32.f32 %v3160
        %v3193 = vcvt.s32.f32 %v3161
        %v3194 = vcvt.s32.f32 %v3162
        %v3195 = vcvt.s32.f32 %v3163
        %v3196 = vcvt.s32.f32 %v3164
        %v3197 = vcvt.s32.f32 %v3165
        %v3198 = vcvt.s32.f32 %v3166
        %v3199 = vcvt.s32.f32 %v3167
        %v3200 = vcvt.s32.f32 %v3168
        %v3201 = vcvt.s32.f32 %v3169
        %v3202 = vpack.c.bf16 %v3171, %v3170
        %v3203 = vpack.c.bf16 %v3173, %v3172
        %v3204 = vpack.c.bf16 %v3175, %v3174
        %v3205 = vpack.c.bf16 %v3177, %v3176
        %v3206 = vpack.c.bf16 %v3179, %v3178
        %v3207 = vpack.c.bf16 %v3181, %v3180
        %v3208 = vpack.c.bf16 %v3183, %v3182
        %v3209 = vpack.c.bf16 %v3185, %v3184
        %v3210 = vpack.c.bf16 %v3187, %v3186
        %v3211 = vpack.c.bf16 %v3189, %v3188
        %v3212 = vpack.c.bf16 %v3191, %v3190
        %v3213 = vpack.c.bf16 %v3193, %v3192
        %v3214 = vpack.c.bf16 %v3195, %v3194
        %v3215 = vpack.c.bf16 %v3197, %v3196
        %v3216 = vpack.c.bf16 %v3199, %v3198
        %v3217 = vpack.c.bf16 %v3201, %v3200
        %vm3218 = vcmp.lt.f32.partialorder %v3067, %v3104
        %vm3219 = vcmp.lt.f32.partialorder %v3068, %v3104
        %vm3220 = vcmp.lt.f32.partialorder %v3069, %v3104
        %vm3221 = vcmp.lt.f32.partialorder %v3070, %v3104
        %vm3222 = vcmp.lt.f32.partialorder %v3071, %v3104
        %vm3223 = vcmp.lt.f32.partialorder %v3072, %v3104
        %vm3224 = vcmp.lt.f32.partialorder %v3073, %v3104
        %vm3225 = vcmp.lt.f32.partialorder %v3074, %v3104
        %vm3226 = vcmp.lt.f32.partialorder %v3075, %v3104
        %vm3227 = vcmp.lt.f32.partialorder %v3076, %v3104
        %vm3228 = vcmp.lt.f32.partialorder %v3077, %v3104
        %vm3229 = vcmp.lt.f32.partialorder %v3078, %v3104
        %vm3230 = vcmp.lt.f32.partialorder %v3079, %v3104
        %vm3231 = vcmp.lt.f32.partialorder %v3080, %v3104
        %vm3232 = vcmp.lt.f32.partialorder %v3081, %v3104
        %vm3233 = vcmp.lt.f32.partialorder %v3082, %v3104
        %vm3234 = vcmp.lt.f32.partialorder %v3083, %v3104
        %vm3235 = vcmp.lt.f32.partialorder %v3084, %v3104
        %vm3236 = vcmp.lt.f32.partialorder %v3085, %v3104
        %vm3237 = vcmp.lt.f32.partialorder %v3086, %v3104
        %vm3238 = vcmp.lt.f32.partialorder %v3087, %v3104
        %vm3239 = vcmp.lt.f32.partialorder %v3088, %v3104
        %vm3240 = vcmp.lt.f32.partialorder %v3089, %v3104
        %vm3241 = vcmp.lt.f32.partialorder %v3090, %v3104
        %vm3242 = vcmp.lt.f32.partialorder %v3091, %v3104
        %vm3243 = vcmp.lt.f32.partialorder %v3092, %v3104
        %vm3244 = vcmp.lt.f32.partialorder %v3093, %v3104
        %vm3245 = vcmp.lt.f32.partialorder %v3094, %v3104
        %vm3246 = vcmp.lt.f32.partialorder %v3095, %v3104
        %vm3247 = vcmp.lt.f32.partialorder %v3096, %v3104
        %vm3248 = vcmp.lt.f32.partialorder %v3097, %v3104
        %vm3249 = vcmp.lt.f32.partialorder %v3098, %v3104
        %v3250 = vsel %vm3218, 1, 0
        %v3251 = vsel %vm3219, 1, 0
        %v3252 = vsel %vm3220, 1, 0
        %v3253 = vsel %vm3221, 1, 0
        %v3254 = vsel %vm3222, 1, 0
        %v3255 = vsel %vm3223, 1, 0
        %v3256 = vsel %vm3224, 1, 0
        %v3257 = vsel %vm3225, 1, 0
        %v3258 = vsel %vm3226, 1, 0
        %v3259 = vsel %vm3227, 1, 0
        %v3260 = vsel %vm3228, 1, 0
        %v3261 = vsel %vm3229, 1, 0
        %v3262 = vsel %vm3230, 1, 0
        %v3263 = vsel %vm3231, 1, 0
        %v3264 = vsel %vm3232, 1, 0
        %v3265 = vsel %vm3233, 1, 0
        %v3266 = vsel %vm3234, 1, 0
        %v3267 = vsel %vm3235, 1, 0
        %v3268 = vsel %vm3236, 1, 0
        %v3269 = vsel %vm3237, 1, 0
        %v3270 = vsel %vm3238, 1, 0
        %v3271 = vsel %vm3239, 1, 0
        %v3272 = vsel %vm3240, 1, 0
        %v3273 = vsel %vm3241, 1, 0
        %v3274 = vsel %vm3242, 1, 0
        %v3275 = vsel %vm3243, 1, 0
        %v3276 = vsel %vm3244, 1, 0
        %v3277 = vsel %vm3245, 1, 0
        %v3278 = vsel %vm3246, 1, 0
        %v3279 = vsel %vm3247, 1, 0
        %v3280 = vsel %vm3248, 1, 0
        %v3281 = vsel %vm3249, 1, 0
        %v3282 = vcvt.s32.f32 %v3250
        %v3283 = vcvt.s32.f32 %v3251
        %v3284 = vcvt.s32.f32 %v3252
        %v3285 = vcvt.s32.f32 %v3253
        %v3286 = vcvt.s32.f32 %v3254
        %v3287 = vcvt.s32.f32 %v3255
        %v3288 = vcvt.s32.f32 %v3256
        %v3289 = vcvt.s32.f32 %v3257
        %v3290 = vcvt.s32.f32 %v3258
        %v3291 = vcvt.s32.f32 %v3259
        %v3292 = vcvt.s32.f32 %v3260
        %v3293 = vcvt.s32.f32 %v3261
        %v3294 = vcvt.s32.f32 %v3262
        %v3295 = vcvt.s32.f32 %v3263
        %v3296 = vcvt.s32.f32 %v3264
        %v3297 = vcvt.s32.f32 %v3265
        %v3298 = vcvt.s32.f32 %v3266
        %v3299 = vcvt.s32.f32 %v3267
        %v3300 = vcvt.s32.f32 %v3268
        %v3301 = vcvt.s32.f32 %v3269
        %v3302 = vcvt.s32.f32 %v3270
        %v3303 = vcvt.s32.f32 %v3271
        %v3304 = vcvt.s32.f32 %v3272
        %v3305 = vcvt.s32.f32 %v3273
        %v3306 = vcvt.s32.f32 %v3274
        %v3307 = vcvt.s32.f32 %v3275
        %v3308 = vcvt.s32.f32 %v3276
        %v3309 = vcvt.s32.f32 %v3277
        %v3310 = vcvt.s32.f32 %v3278
        %v3311 = vcvt.s32.f32 %v3279
        %v3312 = vcvt.s32.f32 %v3280
        %v3313 = vcvt.s32.f32 %v3281
        %v3314 = vpack.c.bf16 %v3283, %v3282
        %v3315 = vpack.c.bf16 %v3285, %v3284
        %v3316 = vpack.c.bf16 %v3287, %v3286
        %v3317 = vpack.c.bf16 %v3289, %v3288
        %v3318 = vpack.c.bf16 %v3291, %v3290
        %v3319 = vpack.c.bf16 %v3293, %v3292
        %v3320 = vpack.c.bf16 %v3295, %v3294
        %v3321 = vpack.c.bf16 %v3297, %v3296
        %v3322 = vpack.c.bf16 %v3299, %v3298
        %v3323 = vpack.c.bf16 %v3301, %v3300
        %v3324 = vpack.c.bf16 %v3303, %v3302
        %v3325 = vpack.c.bf16 %v3305, %v3304
        %v3326 = vpack.c.bf16 %v3307, %v3306
        %v3327 = vpack.c.bf16 %v3309, %v3308
        %v3328 = vpack.c.bf16 %v3311, %v3310
        %v3329 = vpack.c.bf16 %v3313, %v3312
        %v3330 = vsub.bf16 %v3202, %v3314
        %v3331 = vsub.bf16 %v3203, %v3315
        %v3332 = vsub.bf16 %v3204, %v3316
        %v3333 = vsub.bf16 %v3205, %v3317
        %v3334 = vsub.bf16 %v3206, %v3318
        %v3335 = vsub.bf16 %v3207, %v3319
        %v3336 = vsub.bf16 %v3208, %v3320
        %v3337 = vsub.bf16 %v3209, %v3321
        %v3338 = vsub.bf16 %v3210, %v3322
        %v3339 = vsub.bf16 %v3211, %v3323
        %v3340 = vsub.bf16 %v3212, %v3324
        %v3341 = vsub.bf16 %v3213, %v3325
        %v3342 = vsub.bf16 %v3214, %v3326
        %v3343 = vsub.bf16 %v3215, %v3327
        %v3344 = vsub.bf16 %v3216, %v3328
        %v3345 = vsub.bf16 %v3217, %v3329
        %v3346 = vld [vmem:[%s4] sm:$0x1]
        %v3348 = vpack.i.b16 %v3346, %v3346
        %v3350 = vlaneseq
        %v3351 = vshrl.u32 %v3350, 7
        %v3352 = vsub.s32 0, %v3351
        %v3353 = vrot.slane %v3348, %v3352
        %v3354 = vmul.bf16 %v3330, %v3353
        %v3355 = vmul.bf16 %v3331, %v3353
        %v3356 = vmul.bf16 %v3332, %v3353
        %v3357 = vmul.bf16 %v3333, %v3353
        %v3358 = vmul.bf16 %v3334, %v3353
        %v3359 = vmul.bf16 %v3335, %v3353
        %v3360 = vmul.bf16 %v3336, %v3353
        %v3361 = vmul.bf16 %v3337, %v3353
        %v3362 = vmul.bf16 %v3338, %v3353
        %v3363 = vmul.bf16 %v3339, %v3353
        %v3364 = vmul.bf16 %v3340, %v3353
        %v3365 = vmul.bf16 %v3341, %v3353
        %v3366 = vmul.bf16 %v3342, %v3353
        %v3367 = vmul.bf16 %v3343, %v3353
        %v3368 = vmul.bf16 %v3344, %v3353
        %v3369 = vmul.bf16 %v3345, %v3353
        %v3370 = vld [vmem:[%s2] sm:$0xf]
        %v3371 = vunpack.c.l.bf16 %v3370
        %v3372 = vunpack.c.l.bf16 %v3354
        %v3373 = vunpack.c.h.bf16 %v3354
        %v3374 = vunpack.c.l.bf16 %v3355
        %v3375 = vunpack.c.h.bf16 %v3355
        %v3376 = vunpack.c.l.bf16 %v3356
        %v3377 = vunpack.c.h.bf16 %v3356
        %v3378 = vunpack.c.l.bf16 %v3357
        %v3379 = vunpack.c.h.bf16 %v3357
        %v3380 = vunpack.c.l.bf16 %v3358
        %v3381 = vunpack.c.h.bf16 %v3358
        %v3382 = vunpack.c.l.bf16 %v3359
        %v3383 = vunpack.c.h.bf16 %v3359
        %v3384 = vunpack.c.l.bf16 %v3360
        %v3385 = vunpack.c.h.bf16 %v3360
        %v3386 = vunpack.c.l.bf16 %v3361
        %v3387 = vunpack.c.h.bf16 %v3361
        %v3388 = vunpack.c.l.bf16 %v3362
        %v3389 = vunpack.c.h.bf16 %v3362
        %v3390 = vunpack.c.l.bf16 %v3363
        %v3391 = vunpack.c.h.bf16 %v3363
        %v3392 = vunpack.c.l.bf16 %v3364
        %v3393 = vunpack.c.h.bf16 %v3364
        %v3394 = vunpack.c.l.bf16 %v3365
        %v3395 = vunpack.c.h.bf16 %v3365
        %v3396 = vunpack.c.l.bf16 %v3366
        %v3397 = vunpack.c.h.bf16 %v3366
        %v3398 = vunpack.c.l.bf16 %v3367
        %v3399 = vunpack.c.h.bf16 %v3367
        %v3400 = vunpack.c.l.bf16 %v3368
        %v3401 = vunpack.c.h.bf16 %v3368
        %v3402 = vunpack.c.l.bf16 %v3369
        %v3403 = vunpack.c.h.bf16 %v3369
        %3405 = vset.pattern.permute.xlu0 0
        %3406 = vperm.xlu0 %3405, %v3372
        %v3407 = vpop.permute.xlu0 %3406
        %3410 = vset.pattern.permute.xlu0 0
        %3411 = vperm.xlu0 %3410, %v3373
        %v3412 = vpop.permute.xlu0 %3411
        %3415 = vset.pattern.permute.xlu0 0
        %3416 = vperm.xlu0 %3415, %v3374
        %v3417 = vpop.permute.xlu0 %3416
        %3420 = vset.pattern.permute.xlu0 0
        %3421 = vperm.xlu0 %3420, %v3375
        %v3422 = vpop.permute.xlu0 %3421
        %3425 = vset.pattern.permute.xlu0 0
        %3426 = vperm.xlu0 %3425, %v3376
        %v3427 = vpop.permute.xlu0 %3426
        %3430 = vset.pattern.permute.xlu0 0
        %3431 = vperm.xlu0 %3430, %v3377
        %v3432 = vpop.permute.xlu0 %3431
        %3435 = vset.pattern.permute.xlu0 0
        %3436 = vperm.xlu0 %3435, %v3378
        %v3437 = vpop.permute.xlu0 %3436
        %3440 = vset.pattern.permute.xlu0 0
        %3441 = vperm.xlu0 %3440, %v3379
        %v3442 = vpop.permute.xlu0 %3441
        %3445 = vset.pattern.permute.xlu0 0
        %3446 = vperm.xlu0 %3445, %v3380
        %v3447 = vpop.permute.xlu0 %3446
        %3450 = vset.pattern.permute.xlu0 0
        %3451 = vperm.xlu0 %3450, %v3381
        %v3452 = vpop.permute.xlu0 %3451
        %3455 = vset.pattern.permute.xlu0 0
        %3456 = vperm.xlu0 %3455, %v3382
        %v3457 = vpop.permute.xlu0 %3456
        %3460 = vset.pattern.permute.xlu0 0
        %3461 = vperm.xlu0 %3460, %v3383
        %v3462 = vpop.permute.xlu0 %3461
        %3465 = vset.pattern.permute.xlu0 0
        %3466 = vperm.xlu0 %3465, %v3384
        %v3467 = vpop.permute.xlu0 %3466
        %3470 = vset.pattern.permute.xlu0 0
        %3471 = vperm.xlu0 %3470, %v3385
        %v3472 = vpop.permute.xlu0 %3471
        %3475 = vset.pattern.permute.xlu0 0
        %3476 = vperm.xlu0 %3475, %v3386
        %v3477 = vpop.permute.xlu0 %3476
        %3480 = vset.pattern.permute.xlu0 0
        %3481 = vperm.xlu0 %3480, %v3387
        %v3482 = vpop.permute.xlu0 %3481
        %3485 = vset.pattern.permute.xlu0 0
        %3486 = vperm.xlu0 %3485, %v3388
        %v3487 = vpop.permute.xlu0 %3486
        %3490 = vset.pattern.permute.xlu0 0
        %3491 = vperm.xlu0 %3490, %v3389
        %v3492 = vpop.permute.xlu0 %3491
        %3495 = vset.pattern.permute.xlu0 0
        %3496 = vperm.xlu0 %3495, %v3390
        %v3497 = vpop.permute.xlu0 %3496
        %3500 = vset.pattern.permute.xlu0 0
        %3501 = vperm.xlu0 %3500, %v3391
        %v3502 = vpop.permute.xlu0 %3501
        %3505 = vset.pattern.permute.xlu0 0
        %3506 = vperm.xlu0 %3505, %v3392
        %v3507 = vpop.permute.xlu0 %3506
        %3510 = vset.pattern.permute.xlu0 0
        %3511 = vperm.xlu0 %3510, %v3393
        %v3512 = vpop.permute.xlu0 %3511
        %3515 = vset.pattern.permute.xlu0 0
        %3516 = vperm.xlu0 %3515, %v3394
        %v3517 = vpop.permute.xlu0 %3516
        %3520 = vset.pattern.permute.xlu0 0
        %3521 = vperm.xlu0 %3520, %v3395
        %v3522 = vpop.permute.xlu0 %3521
        %3525 = vset.pattern.permute.xlu0 0
        %3526 = vperm.xlu0 %3525, %v3396
        %v3527 = vpop.permute.xlu0 %3526
        %3530 = vset.pattern.permute.xlu0 0
        %3531 = vperm.xlu0 %3530, %v3397
        %v3532 = vpop.permute.xlu0 %3531
        %3535 = vset.pattern.permute.xlu0 0
        %3536 = vperm.xlu0 %3535, %v3398
        %v3537 = vpop.permute.xlu0 %3536
        %3540 = vset.pattern.permute.xlu0 0
        %3541 = vperm.xlu0 %3540, %v3399
        %v3542 = vpop.permute.xlu0 %3541
        %3545 = vset.pattern.permute.xlu0 0
        %3546 = vperm.xlu0 %3545, %v3400
        %v3547 = vpop.permute.xlu0 %3546
        %3550 = vset.pattern.permute.xlu0 0
        %3551 = vperm.xlu0 %3550, %v3401
        %v3552 = vpop.permute.xlu0 %3551
        %3555 = vset.pattern.permute.xlu0 0
        %3556 = vperm.xlu0 %3555, %v3402
        %v3557 = vpop.permute.xlu0 %3556
        %3560 = vset.pattern.permute.xlu0 0
        %3561 = vperm.xlu0 %3560, %v3403
        %v3562 = vpop.permute.xlu0 %3561
        %v3564 = vlaneseq
        %v3565 = vshrl.u32 %v3564, 7
        %v3566 = vsub.s32 0, %v3565
        %v3567 = vrot.slane %v3371, %v3566
        %v3568 = vmul.f32 %v3407, %v3567
        %v3569 = vmul.f32 %v3412, %v3567
        %v3570 = vmul.f32 %v3417, %v3567
        %v3571 = vmul.f32 %v3422, %v3567
        %v3572 = vmul.f32 %v3427, %v3567
        %v3573 = vmul.f32 %v3432, %v3567
        %v3574 = vmul.f32 %v3437, %v3567
        %v3575 = vmul.f32 %v3442, %v3567
        %v3576 = vmul.f32 %v3447, %v3567
        %v3577 = vmul.f32 %v3452, %v3567
        %v3578 = vmul.f32 %v3457, %v3567
        %v3579 = vmul.f32 %v3462, %v3567
        %v3580 = vmul.f32 %v3467, %v3567
        %v3581 = vmul.f32 %v3472, %v3567
        %v3582 = vmul.f32 %v3477, %v3567
        %v3583 = vmul.f32 %v3482, %v3567
        %v3584 = vmul.f32 %v3487, %v3567
        %v3585 = vmul.f32 %v3492, %v3567
        %v3586 = vmul.f32 %v3497, %v3567
        %v3587 = vmul.f32 %v3502, %v3567
        %v3588 = vmul.f32 %v3507, %v3567
        %v3589 = vmul.f32 %v3512, %v3567
        %v3590 = vmul.f32 %v3517, %v3567
        %v3591 = vmul.f32 %v3522, %v3567
        %v3592 = vmul.f32 %v3527, %v3567
        %v3593 = vmul.f32 %v3532, %v3567
        %v3594 = vmul.f32 %v3537, %v3567
        %v3595 = vmul.f32 %v3542, %v3567
        %v3596 = vmul.f32 %v3547, %v3567
        %v3597 = vmul.f32 %v3552, %v3567
        %v3598 = vmul.f32 %v3557, %v3567
        %v3599 = vmul.f32 %v3562, %v3567
        %v3600 = vadd.f32 %v3568, 0.0
        %v3601 = vadd.f32 %v3569, 0.0
        %v3602 = vadd.f32 %v3570, 0.0
        %v3603 = vadd.f32 %v3571, 0.0
        %v3604 = vadd.f32 %v3572, 0.0
        %v3605 = vadd.f32 %v3573, 0.0
        %v3606 = vadd.f32 %v3574, 0.0
        %v3607 = vadd.f32 %v3575, 0.0
        %v3608 = vadd.f32 %v3576, 0.0
        %v3609 = vadd.f32 %v3577, 0.0
        %v3610 = vadd.f32 %v3578, 0.0
        %v3611 = vadd.f32 %v3579, 0.0
        %v3612 = vadd.f32 %v3580, 0.0
        %v3613 = vadd.f32 %v3581, 0.0
        %v3614 = vadd.f32 %v3582, 0.0
        %v3615 = vadd.f32 %v3583, 0.0
        %v3616 = vadd.f32 %v3584, 0.0
        %v3617 = vadd.f32 %v3585, 0.0
        %v3618 = vadd.f32 %v3586, 0.0
        %v3619 = vadd.f32 %v3587, 0.0
        %v3620 = vadd.f32 %v3588, 0.0
        %v3621 = vadd.f32 %v3589, 0.0
        %v3622 = vadd.f32 %v3590, 0.0
        %v3623 = vadd.f32 %v3591, 0.0
        %v3624 = vadd.f32 %v3592, 0.0
        %v3625 = vadd.f32 %v3593, 0.0
        %v3626 = vadd.f32 %v3594, 0.0
        %v3627 = vadd.f32 %v3595, 0.0
        %v3628 = vadd.f32 %v3596, 0.0
        %v3629 = vadd.f32 %v3597, 0.0
        %v3630 = vadd.f32 %v3598, 0.0
        %v3631 = vadd.f32 %v3599, 0.0
        %3632 = vset.pattern.permute.xlu0 1
        %3633 = vperm.xlu0 %3632, %v3372
        %v3634 = vpop.permute.xlu0 %3633
        %3636 = vset.pattern.permute.xlu0 1
        %3637 = vperm.xlu0 %3636, %v3373
        %v3638 = vpop.permute.xlu0 %3637
        %3640 = vset.pattern.permute.xlu0 1
        %3641 = vperm.xlu0 %3640, %v3374
        %v3642 = vpop.permute.xlu0 %3641
        %3644 = vset.pattern.permute.xlu0 1
        %3645 = vperm.xlu0 %3644, %v3375
        %v3646 = vpop.permute.xlu0 %3645
        %3648 = vset.pattern.permute.xlu0 1
        %3649 = vperm.xlu0 %3648, %v3376
        %v3650 = vpop.permute.xlu0 %3649
        %3652 = vset.pattern.permute.xlu0 1
        %3653 = vperm.xlu0 %3652, %v3377
        %v3654 = vpop.permute.xlu0 %3653
        %3656 = vset.pattern.permute.xlu0 1
        %3657 = vperm.xlu0 %3656, %v3378
        %v3658 = vpop.permute.xlu0 %3657
        %3660 = vset.pattern.permute.xlu0 1
        %3661 = vperm.xlu0 %3660, %v3379
        %v3662 = vpop.permute.xlu0 %3661
        %3664 = vset.pattern.permute.xlu0 1
        %3665 = vperm.xlu0 %3664, %v3380
        %v3666 = vpop.permute.xlu0 %3665
        %3668 = vset.pattern.permute.xlu0 1
        %3669 = vperm.xlu0 %3668, %v3381
        %v3670 = vpop.permute.xlu0 %3669
        %3672 = vset.pattern.permute.xlu0 1
        %3673 = vperm.xlu0 %3672, %v3382
        %v3674 = vpop.permute.xlu0 %3673
        %3676 = vset.pattern.permute.xlu0 1
        %3677 = vperm.xlu0 %3676, %v3383
        %v3678 = vpop.permute.xlu0 %3677
        %3680 = vset.pattern.permute.xlu0 1
        %3681 = vperm.xlu0 %3680, %v3384
        %v3682 = vpop.permute.xlu0 %3681
        %3684 = vset.pattern.permute.xlu0 1
        %3685 = vperm.xlu0 %3684, %v3385
        %v3686 = vpop.permute.xlu0 %3685
        %3688 = vset.pattern.permute.xlu0 1
        %3689 = vperm.xlu0 %3688, %v3386
        %v3690 = vpop.permute.xlu0 %3689
        %3692 = vset.pattern.permute.xlu0 1
        %3693 = vperm.xlu0 %3692, %v3387
        %v3694 = vpop.permute.xlu0 %3693
        %3696 = vset.pattern.permute.xlu0 1
        %3697 = vperm.xlu0 %3696, %v3388
        %v3698 = vpop.permute.xlu0 %3697
        %3700 = vset.pattern.permute.xlu0 1
        %3701 = vperm.xlu0 %3700, %v3389
        %v3702 = vpop.permute.xlu0 %3701
        %3704 = vset.pattern.permute.xlu0 1
        %3705 = vperm.xlu0 %3704, %v3390
        %v3706 = vpop.permute.xlu0 %3705
        %3708 = vset.pattern.permute.xlu0 1
        %3709 = vperm.xlu0 %3708, %v3391
        %v3710 = vpop.permute.xlu0 %3709
        %3712 = vset.pattern.permute.xlu0 1
        %3713 = vperm.xlu0 %3712, %v3392
        %v3714 = vpop.permute.xlu0 %3713
        %3716 = vset.pattern.permute.xlu0 1
        %3717 = vperm.xlu0 %3716, %v3393
        %v3718 = vpop.permute.xlu0 %3717
        %3720 = vset.pattern.permute.xlu0 1
        %3721 = vperm.xlu0 %3720, %v3394
        %v3722 = vpop.permute.xlu0 %3721
        %3724 = vset.pattern.permute.xlu0 1
        %3725 = vperm.xlu0 %3724, %v3395
        %v3726 = vpop.permute.xlu0 %3725
        %3728 = vset.pattern.permute.xlu0 1
        %3729 = vperm.xlu0 %3728, %v3396
        %v3730 = vpop.permute.xlu0 %3729
        %3732 = vset.pattern.permute.xlu0 1
        %3733 = vperm.xlu0 %3732, %v3397
        %v3734 = vpop.permute.xlu0 %3733
        %3736 = vset.pattern.permute.xlu0 1
        %3737 = vperm.xlu0 %3736, %v3398
        %v3738 = vpop.permute.xlu0 %3737
        %3740 = vset.pattern.permute.xlu0 1
        %3741 = vperm.xlu0 %3740, %v3399
        %v3742 = vpop.permute.xlu0 %3741
        %3744 = vset.pattern.permute.xlu0 1
        %3745 = vperm.xlu0 %3744, %v3400
        %v3746 = vpop.permute.xlu0 %3745
        %3748 = vset.pattern.permute.xlu0 1
        %3749 = vperm.xlu0 %3748, %v3401
        %v3750 = vpop.permute.xlu0 %3749
        %3752 = vset.pattern.permute.xlu0 1
        %3753 = vperm.xlu0 %3752, %v3402
        %v3754 = vpop.permute.xlu0 %3753
        %3756 = vset.pattern.permute.xlu0 1
        %3757 = vperm.xlu0 %3756, %v3403
        %v3758 = vpop.permute.xlu0 %3757
        %v3760 = vlaneseq
        %v3761 = vshrl.u32 %v3760, 7
        %v3762 = vsub.s32 1, %v3761
        %v3763 = vrot.slane %v3371, %v3762
        %v3764 = vmul.f32 %v3634, %v3763
        %v3765 = vmul.f32 %v3638, %v3763
        %v3766 = vmul.f32 %v3642, %v3763
        %v3767 = vmul.f32 %v3646, %v3763
        %v3768 = vmul.f32 %v3650, %v3763
        %v3769 = vmul.f32 %v3654, %v3763
        %v3770 = vmul.f32 %v3658, %v3763
        %v3771 = vmul.f32 %v3662, %v3763
        %v3772 = vmul.f32 %v3666, %v3763
        %v3773 = vmul.f32 %v3670, %v3763
        %v3774 = vmul.f32 %v3674, %v3763
        %v3775 = vmul.f32 %v3678, %v3763
        %v3776 = vmul.f32 %v3682, %v3763
        %v3777 = vmul.f32 %v3686, %v3763
        %v3778 = vmul.f32 %v3690, %v3763
        %v3779 = vmul.f32 %v3694, %v3763
        %v3780 = vmul.f32 %v3698, %v3763
        %v3781 = vmul.f32 %v3702, %v3763
        %v3782 = vmul.f32 %v3706, %v3763
        %v3783 = vmul.f32 %v3710, %v3763
        %v3784 = vmul.f32 %v3714, %v3763
        %v3785 = vmul.f32 %v3718, %v3763
        %v3786 = vmul.f32 %v3722, %v3763
        %v3787 = vmul.f32 %v3726, %v3763
        %v3788 = vmul.f32 %v3730, %v3763
        %v3789 = vmul.f32 %v3734, %v3763
        %v3790 = vmul.f32 %v3738, %v3763
        %v3791 = vmul.f32 %v3742, %v3763
        %v3792 = vmul.f32 %v3746, %v3763
        %v3793 = vmul.f32 %v3750, %v3763
        %v3794 = vmul.f32 %v3754, %v3763
        %v3795 = vmul.f32 %v3758, %v3763
        %v3796 = vadd.f32 %v3600, %v3764
        %v3797 = vadd.f32 %v3601, %v3765
        %v3798 = vadd.f32 %v3602, %v3766
        %v3799 = vadd.f32 %v3603, %v3767
        %v3800 = vadd.f32 %v3604, %v3768
        %v3801 = vadd.f32 %v3605, %v3769
        %v3802 = vadd.f32 %v3606, %v3770
        %v3803 = vadd.f32 %v3607, %v3771
        %v3804 = vadd.f32 %v3608, %v3772
        %v3805 = vadd.f32 %v3609, %v3773
        %v3806 = vadd.f32 %v3610, %v3774
        %v3807 = vadd.f32 %v3611, %v3775
        %v3808 = vadd.f32 %v3612, %v3776
        %v3809 = vadd.f32 %v3613, %v3777
        %v3810 = vadd.f32 %v3614, %v3778
        %v3811 = vadd.f32 %v3615, %v3779
        %v3812 = vadd.f32 %v3616, %v3780
        %v3813 = vadd.f32 %v3617, %v3781
        %v3814 = vadd.f32 %v3618, %v3782
        %v3815 = vadd.f32 %v3619, %v3783
        %v3816 = vadd.f32 %v3620, %v3784
        %v3817 = vadd.f32 %v3621, %v3785
        %v3818 = vadd.f32 %v3622, %v3786
        %v3819 = vadd.f32 %v3623, %v3787
        %v3820 = vadd.f32 %v3624, %v3788
        %v3821 = vadd.f32 %v3625, %v3789
        %v3822 = vadd.f32 %v3626, %v3790
        %v3823 = vadd.f32 %v3627, %v3791
        %v3824 = vadd.f32 %v3628, %v3792
        %v3825 = vadd.f32 %v3629, %v3793
        %v3826 = vadd.f32 %v3630, %v3794
        %v3827 = vadd.f32 %v3631, %v3795
        %3828 = vset.pattern.permute.xlu0 2
        %3829 = vperm.xlu0 %3828, %v3372
        %v3830 = vpop.permute.xlu0 %3829
        %3832 = vset.pattern.permute.xlu0 2
        %3833 = vperm.xlu0 %3832, %v3373
        %v3834 = vpop.permute.xlu0 %3833
        %3836 = vset.pattern.permute.xlu0 2
        %3837 = vperm.xlu0 %3836, %v3374
        %v3838 = vpop.permute.xlu0 %3837
        %3840 = vset.pattern.permute.xlu0 2
        %3841 = vperm.xlu0 %3840, %v3375
        %v3842 = vpop.permute.xlu0 %3841
        %3844 = vset.pattern.permute.xlu0 2
        %3845 = vperm.xlu0 %3844, %v3376
        %v3846 = vpop.permute.xlu0 %3845
        %3848 = vset.pattern.permute.xlu0 2
        %3849 = vperm.xlu0 %3848, %v3377
        %v3850 = vpop.permute.xlu0 %3849
        %3852 = vset.pattern.permute.xlu0 2
        %3853 = vperm.xlu0 %3852, %v3378
        %v3854 = vpop.permute.xlu0 %3853
        %3856 = vset.pattern.permute.xlu0 2
        %3857 = vperm.xlu0 %3856, %v3379
        %v3858 = vpop.permute.xlu0 %3857
        %3860 = vset.pattern.permute.xlu0 2
        %3861 = vperm.xlu0 %3860, %v3380
        %v3862 = vpop.permute.xlu0 %3861
        %3864 = vset.pattern.permute.xlu0 2
        %3865 = vperm.xlu0 %3864, %v3381
        %v3866 = vpop.permute.xlu0 %3865
        %3868 = vset.pattern.permute.xlu0 2
        %3869 = vperm.xlu0 %3868, %v3382
        %v3870 = vpop.permute.xlu0 %3869
        %3872 = vset.pattern.permute.xlu0 2
        %3873 = vperm.xlu0 %3872, %v3383
        %v3874 = vpop.permute.xlu0 %3873
        %3876 = vset.pattern.permute.xlu0 2
        %3877 = vperm.xlu0 %3876, %v3384
        %v3878 = vpop.permute.xlu0 %3877
        %3880 = vset.pattern.permute.xlu0 2
        %3881 = vperm.xlu0 %3880, %v3385
        %v3882 = vpop.permute.xlu0 %3881
        %3884 = vset.pattern.permute.xlu0 2
        %3885 = vperm.xlu0 %3884, %v3386
        %v3886 = vpop.permute.xlu0 %3885
        %3888 = vset.pattern.permute.xlu0 2
        %3889 = vperm.xlu0 %3888, %v3387
        %v3890 = vpop.permute.xlu0 %3889
        %3892 = vset.pattern.permute.xlu0 2
        %3893 = vperm.xlu0 %3892, %v3388
        %v3894 = vpop.permute.xlu0 %3893
        %3896 = vset.pattern.permute.xlu0 2
        %3897 = vperm.xlu0 %3896, %v3389
        %v3898 = vpop.permute.xlu0 %3897
        %3900 = vset.pattern.permute.xlu0 2
        %3901 = vperm.xlu0 %3900, %v3390
        %v3902 = vpop.permute.xlu0 %3901
        %3904 = vset.pattern.permute.xlu0 2
        %3905 = vperm.xlu0 %3904, %v3391
        %v3906 = vpop.permute.xlu0 %3905
        %3908 = vset.pattern.permute.xlu0 2
        %3909 = vperm.xlu0 %3908, %v3392
        %v3910 = vpop.permute.xlu0 %3909
        %3912 = vset.pattern.permute.xlu0 2
        %3913 = vperm.xlu0 %3912, %v3393
        %v3914 = vpop.permute.xlu0 %3913
        %3916 = vset.pattern.permute.xlu0 2
        %3917 = vperm.xlu0 %3916, %v3394
        %v3918 = vpop.permute.xlu0 %3917
        %3920 = vset.pattern.permute.xlu0 2
        %3921 = vperm.xlu0 %3920, %v3395
        %v3922 = vpop.permute.xlu0 %3921
        %3924 = vset.pattern.permute.xlu0 2
        %3925 = vperm.xlu0 %3924, %v3396
        %v3926 = vpop.permute.xlu0 %3925
        %3928 = vset.pattern.permute.xlu0 2
        %3929 = vperm.xlu0 %3928, %v3397
        %v3930 = vpop.permute.xlu0 %3929
        %3932 = vset.pattern.permute.xlu0 2
        %3933 = vperm.xlu0 %3932, %v3398
        %v3934 = vpop.permute.xlu0 %3933
        %3936 = vset.pattern.permute.xlu0 2
        %3937 = vperm.xlu0 %3936, %v3399
        %v3938 = vpop.permute.xlu0 %3937
        %3940 = vset.pattern.permute.xlu0 2
        %3941 = vperm.xlu0 %3940, %v3400
        %v3942 = vpop.permute.xlu0 %3941
        %3944 = vset.pattern.permute.xlu0 2
        %3945 = vperm.xlu0 %3944, %v3401
        %v3946 = vpop.permute.xlu0 %3945
        %3948 = vset.pattern.permute.xlu0 2
        %3949 = vperm.xlu0 %3948, %v3402
        %v3950 = vpop.permute.xlu0 %3949
        %3952 = vset.pattern.permute.xlu0 2
        %3953 = vperm.xlu0 %3952, %v3403
        %v3954 = vpop.permute.xlu0 %3953
        %v3956 = vlaneseq
        %v3957 = vshrl.u32 %v3956, 7
        %v3958 = vsub.s32 2, %v3957
        %v3959 = vrot.slane %v3371, %v3958
        %v3960 = vmul.f32 %v3830, %v3959
        %v3961 = vmul.f32 %v3834, %v3959
        %v3962 = vmul.f32 %v3838, %v3959
        %v3963 = vmul.f32 %v3842, %v3959
        %v3964 = vmul.f32 %v3846, %v3959
        %v3965 = vmul.f32 %v3850, %v3959
        %v3966 = vmul.f32 %v3854, %v3959
        %v3967 = vmul.f32 %v3858, %v3959
        %v3968 = vmul.f32 %v3862, %v3959
        %v3969 = vmul.f32 %v3866, %v3959
        %v3970 = vmul.f32 %v3870, %v3959
        %v3971 = vmul.f32 %v3874, %v3959
        %v3972 = vmul.f32 %v3878, %v3959
        %v3973 = vmul.f32 %v3882, %v3959
        %v3974 = vmul.f32 %v3886, %v3959
        %v3975 = vmul.f32 %v3890, %v3959
        %v3976 = vmul.f32 %v3894, %v3959
        %v3977 = vmul.f32 %v3898, %v3959
        %v3978 = vmul.f32 %v3902, %v3959
        %v3979 = vmul.f32 %v3906, %v3959
        %v3980 = vmul.f32 %v3910, %v3959
        %v3981 = vmul.f32 %v3914, %v3959
        %v3982 = vmul.f32 %v3918, %v3959
        %v3983 = vmul.f32 %v3922, %v3959
        %v3984 = vmul.f32 %v3926, %v3959
        %v3985 = vmul.f32 %v3930, %v3959
        %v3986 = vmul.f32 %v3934, %v3959
        %v3987 = vmul.f32 %v3938, %v3959
        %v3988 = vmul.f32 %v3942, %v3959
        %v3989 = vmul.f32 %v3946, %v3959
        %v3990 = vmul.f32 %v3950, %v3959
        %v3991 = vmul.f32 %v3954, %v3959
        %v3992 = vadd.f32 %v3796, %v3960
        %v3993 = vadd.f32 %v3797, %v3961
        %v3994 = vadd.f32 %v3798, %v3962
        %v3995 = vadd.f32 %v3799, %v3963
        %v3996 = vadd.f32 %v3800, %v3964
        %v3997 = vadd.f32 %v3801, %v3965
        %v3998 = vadd.f32 %v3802, %v3966
        %v3999 = vadd.f32 %v3803, %v3967
        %v4000 = vadd.f32 %v3804, %v3968
        %v4001 = vadd.f32 %v3805, %v3969
        %v4002 = vadd.f32 %v3806, %v3970
        %v4003 = vadd.f32 %v3807, %v3971
        %v4004 = vadd.f32 %v3808, %v3972
        %v4005 = vadd.f32 %v3809, %v3973
        %v4006 = vadd.f32 %v3810, %v3974
        %v4007 = vadd.f32 %v3811, %v3975
        %v4008 = vadd.f32 %v3812, %v3976
        %v4009 = vadd.f32 %v3813, %v3977
        %v4010 = vadd.f32 %v3814, %v3978
        %v4011 = vadd.f32 %v3815, %v3979
        %v4012 = vadd.f32 %v3816, %v3980
        %v4013 = vadd.f32 %v3817, %v3981
        %v4014 = vadd.f32 %v3818, %v3982
        %v4015 = vadd.f32 %v3819, %v3983
        %v4016 = vadd.f32 %v3820, %v3984
        %v4017 = vadd.f32 %v3821, %v3985
        %v4018 = vadd.f32 %v3822, %v3986
        %v4019 = vadd.f32 %v3823, %v3987
        %v4020 = vadd.f32 %v3824, %v3988
        %v4021 = vadd.f32 %v3825, %v3989
        %v4022 = vadd.f32 %v3826, %v3990
        %v4023 = vadd.f32 %v3827, %v3991
        %4024 = vset.pattern.permute.xlu0 3
        %4025 = vperm.xlu0 %4024, %v3372
        %v4026 = vpop.permute.xlu0 %4025
        %4028 = vset.pattern.permute.xlu0 3
        %4029 = vperm.xlu0 %4028, %v3373
        %v4030 = vpop.permute.xlu0 %4029
        %4032 = vset.pattern.permute.xlu0 3
        %4033 = vperm.xlu0 %4032, %v3374
        %v4034 = vpop.permute.xlu0 %4033
        %4036 = vset.pattern.permute.xlu0 3
        %4037 = vperm.xlu0 %4036, %v3375
        %v4038 = vpop.permute.xlu0 %4037
        %4040 = vset.pattern.permute.xlu0 3
        %4041 = vperm.xlu0 %4040, %v3376
        %v4042 = vpop.permute.xlu0 %4041
        %4044 = vset.pattern.permute.xlu0 3
        %4045 = vperm.xlu0 %4044, %v3377
        %v4046 = vpop.permute.xlu0 %4045
        %4048 = vset.pattern.permute.xlu0 3
        %4049 = vperm.xlu0 %4048, %v3378
        %v4050 = vpop.permute.xlu0 %4049
        %4052 = vset.pattern.permute.xlu0 3
        %4053 = vperm.xlu0 %4052, %v3379
        %v4054 = vpop.permute.xlu0 %4053
        %4056 = vset.pattern.permute.xlu0 3
        %4057 = vperm.xlu0 %4056, %v3380
        %v4058 = vpop.permute.xlu0 %4057
        %4060 = vset.pattern.permute.xlu0 3
        %4061 = vperm.xlu0 %4060, %v3381
        %v4062 = vpop.permute.xlu0 %4061
        %4064 = vset.pattern.permute.xlu0 3
        %4065 = vperm.xlu0 %4064, %v3382
        %v4066 = vpop.permute.xlu0 %4065
        %4068 = vset.pattern.permute.xlu0 3
        %4069 = vperm.xlu0 %4068, %v3383
        %v4070 = vpop.permute.xlu0 %4069
        %4072 = vset.pattern.permute.xlu0 3
        %4073 = vperm.xlu0 %4072, %v3384
        %v4074 = vpop.permute.xlu0 %4073
        %4076 = vset.pattern.permute.xlu0 3
        %4077 = vperm.xlu0 %4076, %v3385
        %v4078 = vpop.permute.xlu0 %4077
        %4080 = vset.pattern.permute.xlu0 3
        %4081 = vperm.xlu0 %4080, %v3386
        %v4082 = vpop.permute.xlu0 %4081
        %4084 = vset.pattern.permute.xlu0 3
        %4085 = vperm.xlu0 %4084, %v3387
        %v4086 = vpop.permute.xlu0 %4085
        %4088 = vset.pattern.permute.xlu0 3
        %4089 = vperm.xlu0 %4088, %v3388
        %v4090 = vpop.permute.xlu0 %4089
        %4092 = vset.pattern.permute.xlu0 3
        %4093 = vperm.xlu0 %4092, %v3389
        %v4094 = vpop.permute.xlu0 %4093
        %4096 = vset.pattern.permute.xlu0 3
        %4097 = vperm.xlu0 %4096, %v3390
        %v4098 = vpop.permute.xlu0 %4097
        %4100 = vset.pattern.permute.xlu0 3
        %4101 = vperm.xlu0 %4100, %v3391
        %v4102 = vpop.permute.xlu0 %4101
        %4104 = vset.pattern.permute.xlu0 3
        %4105 = vperm.xlu0 %4104, %v3392
        %v4106 = vpop.permute.xlu0 %4105
        %4108 = vset.pattern.permute.xlu0 3
        %4109 = vperm.xlu0 %4108, %v3393
        %v4110 = vpop.permute.xlu0 %4109
        %4112 = vset.pattern.permute.xlu0 3
        %4113 = vperm.xlu0 %4112, %v3394
        %v4114 = vpop.permute.xlu0 %4113
        %4116 = vset.pattern.permute.xlu0 3
        %4117 = vperm.xlu0 %4116, %v3395
        %v4118 = vpop.permute.xlu0 %4117
        %4120 = vset.pattern.permute.xlu0 3
        %4121 = vperm.xlu0 %4120, %v3396
        %v4122 = vpop.permute.xlu0 %4121
        %4124 = vset.pattern.permute.xlu0 3
        %4125 = vperm.xlu0 %4124, %v3397
        %v4126 = vpop.permute.xlu0 %4125
        %4128 = vset.pattern.permute.xlu0 3
        %4129 = vperm.xlu0 %4128, %v3398
        %v4130 = vpop.permute.xlu0 %4129
        %4132 = vset.pattern.permute.xlu0 3
        %4133 = vperm.xlu0 %4132, %v3399
        %v4134 = vpop.permute.xlu0 %4133
        %4136 = vset.pattern.permute.xlu0 3
        %4137 = vperm.xlu0 %4136, %v3400
        %v4138 = vpop.permute.xlu0 %4137
        %4140 = vset.pattern.permute.xlu0 3
        %4141 = vperm.xlu0 %4140, %v3401
        %v4142 = vpop.permute.xlu0 %4141
        %4144 = vset.pattern.permute.xlu0 3
        %4145 = vperm.xlu0 %4144, %v3402
        %v4146 = vpop.permute.xlu0 %4145
        %4148 = vset.pattern.permute.xlu0 3
        %4149 = vperm.xlu0 %4148, %v3403
        %v4150 = vpop.permute.xlu0 %4149
        %v4152 = vlaneseq
        %v4153 = vshrl.u32 %v4152, 7
        %v4154 = vsub.s32 3, %v4153
        %v4155 = vrot.slane %v3371, %v4154
        %v4156 = vmul.f32 %v4026, %v4155
        %v4157 = vmul.f32 %v4030, %v4155
        %v4158 = vmul.f32 %v4034, %v4155
        %v4159 = vmul.f32 %v4038, %v4155
        %v4160 = vmul.f32 %v4042, %v4155
        %v4161 = vmul.f32 %v4046, %v4155
        %v4162 = vmul.f32 %v4050, %v4155
        %v4163 = vmul.f32 %v4054, %v4155
        %v4164 = vmul.f32 %v4058, %v4155
        %v4165 = vmul.f32 %v4062, %v4155
        %v4166 = vmul.f32 %v4066, %v4155
        %v4167 = vmul.f32 %v4070, %v4155
        %v4168 = vmul.f32 %v4074, %v4155
        %v4169 = vmul.f32 %v4078, %v4155
        %v4170 = vmul.f32 %v4082, %v4155
        %v4171 = vmul.f32 %v4086, %v4155
        %v4172 = vmul.f32 %v4090, %v4155
        %v4173 = vmul.f32 %v4094, %v4155
        %v4174 = vmul.f32 %v4098, %v4155
        %v4175 = vmul.f32 %v4102, %v4155
        %v4176 = vmul.f32 %v4106, %v4155
        %v4177 = vmul.f32 %v4110, %v4155
        %v4178 = vmul.f32 %v4114, %v4155
        %v4179 = vmul.f32 %v4118, %v4155
        %v4180 = vmul.f32 %v4122, %v4155
        %v4181 = vmul.f32 %v4126, %v4155
        %v4182 = vmul.f32 %v4130, %v4155
        %v4183 = vmul.f32 %v4134, %v4155
        %v4184 = vmul.f32 %v4138, %v4155
        %v4185 = vmul.f32 %v4142, %v4155
        %v4186 = vmul.f32 %v4146, %v4155
        %v4187 = vmul.f32 %v4150, %v4155
        %v4188 = vadd.f32 %v3992, %v4156
        %v4189 = vadd.f32 %v3993, %v4157
        %v4190 = vadd.f32 %v3994, %v4158
        %v4191 = vadd.f32 %v3995, %v4159
        %v4192 = vadd.f32 %v3996, %v4160
        %v4193 = vadd.f32 %v3997, %v4161
        %v4194 = vadd.f32 %v3998, %v4162
        %v4195 = vadd.f32 %v3999, %v4163
        %v4196 = vadd.f32 %v4000, %v4164
        %v4197 = vadd.f32 %v4001, %v4165
        %v4198 = vadd.f32 %v4002, %v4166
        %v4199 = vadd.f32 %v4003, %v4167
        %v4200 = vadd.f32 %v4004, %v4168
        %v4201 = vadd.f32 %v4005, %v4169
        %v4202 = vadd.f32 %v4006, %v4170
        %v4203 = vadd.f32 %v4007, %v4171
        %v4204 = vadd.f32 %v4008, %v4172
        %v4205 = vadd.f32 %v4009, %v4173
        %v4206 = vadd.f32 %v4010, %v4174
        %v4207 = vadd.f32 %v4011, %v4175
        %v4208 = vadd.f32 %v4012, %v4176
        %v4209 = vadd.f32 %v4013, %v4177
        %v4210 = vadd.f32 %v4014, %v4178
        %v4211 = vadd.f32 %v4015, %v4179
        %v4212 = vadd.f32 %v4016, %v4180
        %v4213 = vadd.f32 %v4017, %v4181
        %v4214 = vadd.f32 %v4018, %v4182
        %v4215 = vadd.f32 %v4019, %v4183
        %v4216 = vadd.f32 %v4020, %v4184
        %v4217 = vadd.f32 %v4021, %v4185
        %v4218 = vadd.f32 %v4022, %v4186
        %v4219 = vadd.f32 %v4023, %v4187
        %4220 = vset.pattern.permute.xlu0 4
        %4221 = vperm.xlu0 %4220, %v3372
        %v4222 = vpop.permute.xlu0 %4221
        %4224 = vset.pattern.permute.xlu0 4
        %4225 = vperm.xlu0 %4224, %v3373
        %v4226 = vpop.permute.xlu0 %4225
        %4228 = vset.pattern.permute.xlu0 4
        %4229 = vperm.xlu0 %4228, %v3374
        %v4230 = vpop.permute.xlu0 %4229
        %4232 = vset.pattern.permute.xlu0 4
        %4233 = vperm.xlu0 %4232, %v3375
        %v4234 = vpop.permute.xlu0 %4233
        %4236 = vset.pattern.permute.xlu0 4
        %4237 = vperm.xlu0 %4236, %v3376
        %v4238 = vpop.permute.xlu0 %4237
        %4240 = vset.pattern.permute.xlu0 4
        %4241 = vperm.xlu0 %4240, %v3377
        %v4242 = vpop.permute.xlu0 %4241
        %4244 = vset.pattern.permute.xlu0 4
        %4245 = vperm.xlu0 %4244, %v3378
        %v4246 = vpop.permute.xlu0 %4245
        %4248 = vset.pattern.permute.xlu0 4
        %4249 = vperm.xlu0 %4248, %v3379
        %v4250 = vpop.permute.xlu0 %4249
        %4252 = vset.pattern.permute.xlu0 4
        %4253 = vperm.xlu0 %4252, %v3380
        %v4254 = vpop.permute.xlu0 %4253
        %4256 = vset.pattern.permute.xlu0 4
        %4257 = vperm.xlu0 %4256, %v3381
        %v4258 = vpop.permute.xlu0 %4257
        %4260 = vset.pattern.permute.xlu0 4
        %4261 = vperm.xlu0 %4260, %v3382
        %v4262 = vpop.permute.xlu0 %4261
        %4264 = vset.pattern.permute.xlu0 4
        %4265 = vperm.xlu0 %4264, %v3383
        %v4266 = vpop.permute.xlu0 %4265
        %4268 = vset.pattern.permute.xlu0 4
        %4269 = vperm.xlu0 %4268, %v3384
        %v4270 = vpop.permute.xlu0 %4269
        %4272 = vset.pattern.permute.xlu0 4
        %4273 = vperm.xlu0 %4272, %v3385
        %v4274 = vpop.permute.xlu0 %4273
        %4276 = vset.pattern.permute.xlu0 4
        %4277 = vperm.xlu0 %4276, %v3386
        %v4278 = vpop.permute.xlu0 %4277
        %4280 = vset.pattern.permute.xlu0 4
        %4281 = vperm.xlu0 %4280, %v3387
        %v4282 = vpop.permute.xlu0 %4281
        %4284 = vset.pattern.permute.xlu0 4
        %4285 = vperm.xlu0 %4284, %v3388
        %v4286 = vpop.permute.xlu0 %4285
        %4288 = vset.pattern.permute.xlu0 4
        %4289 = vperm.xlu0 %4288, %v3389
        %v4290 = vpop.permute.xlu0 %4289
        %4292 = vset.pattern.permute.xlu0 4
        %4293 = vperm.xlu0 %4292, %v3390
        %v4294 = vpop.permute.xlu0 %4293
        %4296 = vset.pattern.permute.xlu0 4
        %4297 = vperm.xlu0 %4296, %v3391
        %v4298 = vpop.permute.xlu0 %4297
        %4300 = vset.pattern.permute.xlu0 4
        %4301 = vperm.xlu0 %4300, %v3392
        %v4302 = vpop.permute.xlu0 %4301
        %4304 = vset.pattern.permute.xlu0 4
        %4305 = vperm.xlu0 %4304, %v3393
        %v4306 = vpop.permute.xlu0 %4305
        %4308 = vset.pattern.permute.xlu0 4
        %4309 = vperm.xlu0 %4308, %v3394
        %v4310 = vpop.permute.xlu0 %4309
        %4312 = vset.pattern.permute.xlu0 4
        %4313 = vperm.xlu0 %4312, %v3395
        %v4314 = vpop.permute.xlu0 %4313
        %4316 = vset.pattern.permute.xlu0 4
        %4317 = vperm.xlu0 %4316, %v3396
        %v4318 = vpop.permute.xlu0 %4317
        %4320 = vset.pattern.permute.xlu0 4
        %4321 = vperm.xlu0 %4320, %v3397
        %v4322 = vpop.permute.xlu0 %4321
        %4324 = vset.pattern.permute.xlu0 4
        %4325 = vperm.xlu0 %4324, %v3398
        %v4326 = vpop.permute.xlu0 %4325
        %4328 = vset.pattern.permute.xlu0 4
        %4329 = vperm.xlu0 %4328, %v3399
        %v4330 = vpop.permute.xlu0 %4329
        %4332 = vset.pattern.permute.xlu0 4
        %4333 = vperm.xlu0 %4332, %v3400
        %v4334 = vpop.permute.xlu0 %4333
        %4336 = vset.pattern.permute.xlu0 4
        %4337 = vperm.xlu0 %4336, %v3401
        %v4338 = vpop.permute.xlu0 %4337
        %4340 = vset.pattern.permute.xlu0 4
        %4341 = vperm.xlu0 %4340, %v3402
        %v4342 = vpop.permute.xlu0 %4341
        %4344 = vset.pattern.permute.xlu0 4
        %4345 = vperm.xlu0 %4344, %v3403
        %v4346 = vpop.permute.xlu0 %4345
        %v4348 = vlaneseq
        %v4349 = vshrl.u32 %v4348, 7
        %v4350 = vsub.s32 4, %v4349
        %v4351 = vrot.slane %v3371, %v4350
        %v4352 = vmul.f32 %v4222, %v4351
        %v4353 = vmul.f32 %v4226, %v4351
        %v4354 = vmul.f32 %v4230, %v4351
        %v4355 = vmul.f32 %v4234, %v4351
        %v4356 = vmul.f32 %v4238, %v4351
        %v4357 = vmul.f32 %v4242, %v4351
        %v4358 = vmul.f32 %v4246, %v4351
        %v4359 = vmul.f32 %v4250, %v4351
        %v4360 = vmul.f32 %v4254, %v4351
        %v4361 = vmul.f32 %v4258, %v4351
        %v4362 = vmul.f32 %v4262, %v4351
        %v4363 = vmul.f32 %v4266, %v4351
        %v4364 = vmul.f32 %v4270, %v4351
        %v4365 = vmul.f32 %v4274, %v4351
        %v4366 = vmul.f32 %v4278, %v4351
        %v4367 = vmul.f32 %v4282, %v4351
        %v4368 = vmul.f32 %v4286, %v4351
        %v4369 = vmul.f32 %v4290, %v4351
        %v4370 = vmul.f32 %v4294, %v4351
        %v4371 = vmul.f32 %v4298, %v4351
        %v4372 = vmul.f32 %v4302, %v4351
        %v4373 = vmul.f32 %v4306, %v4351
        %v4374 = vmul.f32 %v4310, %v4351
        %v4375 = vmul.f32 %v4314, %v4351
        %v4376 = vmul.f32 %v4318, %v4351
        %v4377 = vmul.f32 %v4322, %v4351
        %v4378 = vmul.f32 %v4326, %v4351
        %v4379 = vmul.f32 %v4330, %v4351
        %v4380 = vmul.f32 %v4334, %v4351
        %v4381 = vmul.f32 %v4338, %v4351
        %v4382 = vmul.f32 %v4342, %v4351
        %v4383 = vmul.f32 %v4346, %v4351
        %v4384 = vadd.f32 %v4188, %v4352
        %v4385 = vadd.f32 %v4189, %v4353
        %v4386 = vadd.f32 %v4190, %v4354
        %v4387 = vadd.f32 %v4191, %v4355
        %v4388 = vadd.f32 %v4192, %v4356
        %v4389 = vadd.f32 %v4193, %v4357
        %v4390 = vadd.f32 %v4194, %v4358
        %v4391 = vadd.f32 %v4195, %v4359
        %v4392 = vadd.f32 %v4196, %v4360
        %v4393 = vadd.f32 %v4197, %v4361
        %v4394 = vadd.f32 %v4198, %v4362
        %v4395 = vadd.f32 %v4199, %v4363
        %v4396 = vadd.f32 %v4200, %v4364
        %v4397 = vadd.f32 %v4201, %v4365
        %v4398 = vadd.f32 %v4202, %v4366
        %v4399 = vadd.f32 %v4203, %v4367
        %v4400 = vadd.f32 %v4204, %v4368
        %v4401 = vadd.f32 %v4205, %v4369
        %v4402 = vadd.f32 %v4206, %v4370
        %v4403 = vadd.f32 %v4207, %v4371
        %v4404 = vadd.f32 %v4208, %v4372
        %v4405 = vadd.f32 %v4209, %v4373
        %v4406 = vadd.f32 %v4210, %v4374
        %v4407 = vadd.f32 %v4211, %v4375
        %v4408 = vadd.f32 %v4212, %v4376
        %v4409 = vadd.f32 %v4213, %v4377
        %v4410 = vadd.f32 %v4214, %v4378
        %v4411 = vadd.f32 %v4215, %v4379
        %v4412 = vadd.f32 %v4216, %v4380
        %v4413 = vadd.f32 %v4217, %v4381
        %v4414 = vadd.f32 %v4218, %v4382
        %v4415 = vadd.f32 %v4219, %v4383
        %4416 = vset.pattern.permute.xlu0 5
        %4417 = vperm.xlu0 %4416, %v3372
        %v4418 = vpop.permute.xlu0 %4417
        %4420 = vset.pattern.permute.xlu0 5
        %4421 = vperm.xlu0 %4420, %v3373
        %v4422 = vpop.permute.xlu0 %4421
        %4424 = vset.pattern.permute.xlu0 5
        %4425 = vperm.xlu0 %4424, %v3374
        %v4426 = vpop.permute.xlu0 %4425
        %4428 = vset.pattern.permute.xlu0 5
        %4429 = vperm.xlu0 %4428, %v3375
        %v4430 = vpop.permute.xlu0 %4429
        %4432 = vset.pattern.permute.xlu0 5
        %4433 = vperm.xlu0 %4432, %v3376
        %v4434 = vpop.permute.xlu0 %4433
        %4436 = vset.pattern.permute.xlu0 5
        %4437 = vperm.xlu0 %4436, %v3377
        %v4438 = vpop.permute.xlu0 %4437
        %4440 = vset.pattern.permute.xlu0 5
        %4441 = vperm.xlu0 %4440, %v3378
        %v4442 = vpop.permute.xlu0 %4441
        %4444 = vset.pattern.permute.xlu0 5
        %4445 = vperm.xlu0 %4444, %v3379
        %v4446 = vpop.permute.xlu0 %4445
        %4448 = vset.pattern.permute.xlu0 5
        %4449 = vperm.xlu0 %4448, %v3380
        %v4450 = vpop.permute.xlu0 %4449
        %4452 = vset.pattern.permute.xlu0 5
        %4453 = vperm.xlu0 %4452, %v3381
        %v4454 = vpop.permute.xlu0 %4453
        %4456 = vset.pattern.permute.xlu0 5
        %4457 = vperm.xlu0 %4456, %v3382
        %v4458 = vpop.permute.xlu0 %4457
        %4460 = vset.pattern.permute.xlu0 5
        %4461 = vperm.xlu0 %4460, %v3383
        %v4462 = vpop.permute.xlu0 %4461
        %4464 = vset.pattern.permute.xlu0 5
        %4465 = vperm.xlu0 %4464, %v3384
        %v4466 = vpop.permute.xlu0 %4465
        %4468 = vset.pattern.permute.xlu0 5
        %4469 = vperm.xlu0 %4468, %v3385
        %v4470 = vpop.permute.xlu0 %4469
        %4472 = vset.pattern.permute.xlu0 5
        %4473 = vperm.xlu0 %4472, %v3386
        %v4474 = vpop.permute.xlu0 %4473
        %4476 = vset.pattern.permute.xlu0 5
        %4477 = vperm.xlu0 %4476, %v3387
        %v4478 = vpop.permute.xlu0 %4477
        %4480 = vset.pattern.permute.xlu0 5
        %4481 = vperm.xlu0 %4480, %v3388
        %v4482 = vpop.permute.xlu0 %4481
        %4484 = vset.pattern.permute.xlu0 5
        %4485 = vperm.xlu0 %4484, %v3389
        %v4486 = vpop.permute.xlu0 %4485
        %4488 = vset.pattern.permute.xlu0 5
        %4489 = vperm.xlu0 %4488, %v3390
        %v4490 = vpop.permute.xlu0 %4489
        %4492 = vset.pattern.permute.xlu0 5
        %4493 = vperm.xlu0 %4492, %v3391
        %v4494 = vpop.permute.xlu0 %4493
        %4496 = vset.pattern.permute.xlu0 5
        %4497 = vperm.xlu0 %4496, %v3392
        %v4498 = vpop.permute.xlu0 %4497
        %4500 = vset.pattern.permute.xlu0 5
        %4501 = vperm.xlu0 %4500, %v3393
        %v4502 = vpop.permute.xlu0 %4501
        %4504 = vset.pattern.permute.xlu0 5
        %4505 = vperm.xlu0 %4504, %v3394
        %v4506 = vpop.permute.xlu0 %4505
        %4508 = vset.pattern.permute.xlu0 5
        %4509 = vperm.xlu0 %4508, %v3395
        %v4510 = vpop.permute.xlu0 %4509
        %4512 = vset.pattern.permute.xlu0 5
        %4513 = vperm.xlu0 %4512, %v3396
        %v4514 = vpop.permute.xlu0 %4513
        %4516 = vset.pattern.permute.xlu0 5
        %4517 = vperm.xlu0 %4516, %v3397
        %v4518 = vpop.permute.xlu0 %4517
        %4520 = vset.pattern.permute.xlu0 5
        %4521 = vperm.xlu0 %4520, %v3398
        %v4522 = vpop.permute.xlu0 %4521
        %4524 = vset.pattern.permute.xlu0 5
        %4525 = vperm.xlu0 %4524, %v3399
        %v4526 = vpop.permute.xlu0 %4525
        %4528 = vset.pattern.permute.xlu0 5
        %4529 = vperm.xlu0 %4528, %v3400
        %v4530 = vpop.permute.xlu0 %4529
        %4532 = vset.pattern.permute.xlu0 5
        %4533 = vperm.xlu0 %4532, %v3401
        %v4534 = vpop.permute.xlu0 %4533
        %4536 = vset.pattern.permute.xlu0 5
        %4537 = vperm.xlu0 %4536, %v3402
        %v4538 = vpop.permute.xlu0 %4537
        %4540 = vset.pattern.permute.xlu0 5
        %4541 = vperm.xlu0 %4540, %v3403
        %v4542 = vpop.permute.xlu0 %4541
        %v4544 = vlaneseq
        %v4545 = vshrl.u32 %v4544, 7
        %v4546 = vsub.s32 5, %v4545
        %v4547 = vrot.slane %v3371, %v4546
        %v4548 = vmul.f32 %v4418, %v4547
        %v4549 = vmul.f32 %v4422, %v4547
        %v4550 = vmul.f32 %v4426, %v4547
        %v4551 = vmul.f32 %v4430, %v4547
        %v4552 = vmul.f32 %v4434, %v4547
        %v4553 = vmul.f32 %v4438, %v4547
        %v4554 = vmul.f32 %v4442, %v4547
        %v4555 = vmul.f32 %v4446, %v4547
        %v4556 = vmul.f32 %v4450, %v4547
        %v4557 = vmul.f32 %v4454, %v4547
        %v4558 = vmul.f32 %v4458, %v4547
        %v4559 = vmul.f32 %v4462, %v4547
        %v4560 = vmul.f32 %v4466, %v4547
        %v4561 = vmul.f32 %v4470, %v4547
        %v4562 = vmul.f32 %v4474, %v4547
        %v4563 = vmul.f32 %v4478, %v4547
        %v4564 = vmul.f32 %v4482, %v4547
        %v4565 = vmul.f32 %v4486, %v4547
        %v4566 = vmul.f32 %v4490, %v4547
        %v4567 = vmul.f32 %v4494, %v4547
        %v4568 = vmul.f32 %v4498, %v4547
        %v4569 = vmul.f32 %v4502, %v4547
        %v4570 = vmul.f32 %v4506, %v4547
        %v4571 = vmul.f32 %v4510, %v4547
        %v4572 = vmul.f32 %v4514, %v4547
        %v4573 = vmul.f32 %v4518, %v4547
        %v4574 = vmul.f32 %v4522, %v4547
        %v4575 = vmul.f32 %v4526, %v4547
        %v4576 = vmul.f32 %v4530, %v4547
        %v4577 = vmul.f32 %v4534, %v4547
        %v4578 = vmul.f32 %v4538, %v4547
        %v4579 = vmul.f32 %v4542, %v4547
        %v4580 = vadd.f32 %v4384, %v4548
        %v4581 = vadd.f32 %v4385, %v4549
        %v4582 = vadd.f32 %v4386, %v4550
        %v4583 = vadd.f32 %v4387, %v4551
        %v4584 = vadd.f32 %v4388, %v4552
        %v4585 = vadd.f32 %v4389, %v4553
        %v4586 = vadd.f32 %v4390, %v4554
        %v4587 = vadd.f32 %v4391, %v4555
        %v4588 = vadd.f32 %v4392, %v4556
        %v4589 = vadd.f32 %v4393, %v4557
        %v4590 = vadd.f32 %v4394, %v4558
        %v4591 = vadd.f32 %v4395, %v4559
        %v4592 = vadd.f32 %v4396, %v4560
        %v4593 = vadd.f32 %v4397, %v4561
        %v4594 = vadd.f32 %v4398, %v4562
        %v4595 = vadd.f32 %v4399, %v4563
        %v4596 = vadd.f32 %v4400, %v4564
        %v4597 = vadd.f32 %v4401, %v4565
        %v4598 = vadd.f32 %v4402, %v4566
        %v4599 = vadd.f32 %v4403, %v4567
        %v4600 = vadd.f32 %v4404, %v4568
        %v4601 = vadd.f32 %v4405, %v4569
        %v4602 = vadd.f32 %v4406, %v4570
        %v4603 = vadd.f32 %v4407, %v4571
        %v4604 = vadd.f32 %v4408, %v4572
        %v4605 = vadd.f32 %v4409, %v4573
        %v4606 = vadd.f32 %v4410, %v4574
        %v4607 = vadd.f32 %v4411, %v4575
        %v4608 = vadd.f32 %v4412, %v4576
        %v4609 = vadd.f32 %v4413, %v4577
        %v4610 = vadd.f32 %v4414, %v4578
        %v4611 = vadd.f32 %v4415, %v4579
        %4612 = vset.pattern.permute.xlu0 6
        %4613 = vperm.xlu0 %4612, %v3372
        %v4614 = vpop.permute.xlu0 %4613
        %4616 = vset.pattern.permute.xlu0 6
        %4617 = vperm.xlu0 %4616, %v3373
        %v4618 = vpop.permute.xlu0 %4617
        %4620 = vset.pattern.permute.xlu0 6
        %4621 = vperm.xlu0 %4620, %v3374
        %v4622 = vpop.permute.xlu0 %4621
        %4624 = vset.pattern.permute.xlu0 6
        %4625 = vperm.xlu0 %4624, %v3375
        %v4626 = vpop.permute.xlu0 %4625
        %4628 = vset.pattern.permute.xlu0 6
        %4629 = vperm.xlu0 %4628, %v3376
        %v4630 = vpop.permute.xlu0 %4629
        %4632 = vset.pattern.permute.xlu0 6
        %4633 = vperm.xlu0 %4632, %v3377
        %v4634 = vpop.permute.xlu0 %4633
        %4636 = vset.pattern.permute.xlu0 6
        %4637 = vperm.xlu0 %4636, %v3378
        %v4638 = vpop.permute.xlu0 %4637
        %4640 = vset.pattern.permute.xlu0 6
        %4641 = vperm.xlu0 %4640, %v3379
        %v4642 = vpop.permute.xlu0 %4641
        %4644 = vset.pattern.permute.xlu0 6
        %4645 = vperm.xlu0 %4644, %v3380
        %v4646 = vpop.permute.xlu0 %4645
        %4648 = vset.pattern.permute.xlu0 6
        %4649 = vperm.xlu0 %4648, %v3381
        %v4650 = vpop.permute.xlu0 %4649
        %4652 = vset.pattern.permute.xlu0 6
        %4653 = vperm.xlu0 %4652, %v3382
        %v4654 = vpop.permute.xlu0 %4653
        %4656 = vset.pattern.permute.xlu0 6
        %4657 = vperm.xlu0 %4656, %v3383
        %v4658 = vpop.permute.xlu0 %4657
        %4660 = vset.pattern.permute.xlu0 6
        %4661 = vperm.xlu0 %4660, %v3384
        %v4662 = vpop.permute.xlu0 %4661
        %4664 = vset.pattern.permute.xlu0 6
        %4665 = vperm.xlu0 %4664, %v3385
        %v4666 = vpop.permute.xlu0 %4665
        %4668 = vset.pattern.permute.xlu0 6
        %4669 = vperm.xlu0 %4668, %v3386
        %v4670 = vpop.permute.xlu0 %4669
        %4672 = vset.pattern.permute.xlu0 6
        %4673 = vperm.xlu0 %4672, %v3387
        %v4674 = vpop.permute.xlu0 %4673
        %4676 = vset.pattern.permute.xlu0 6
        %4677 = vperm.xlu0 %4676, %v3388
        %v4678 = vpop.permute.xlu0 %4677
        %4680 = vset.pattern.permute.xlu0 6
        %4681 = vperm.xlu0 %4680, %v3389
        %v4682 = vpop.permute.xlu0 %4681
        %4684 = vset.pattern.permute.xlu0 6
        %4685 = vperm.xlu0 %4684, %v3390
        %v4686 = vpop.permute.xlu0 %4685
        %4688 = vset.pattern.permute.xlu0 6
        %4689 = vperm.xlu0 %4688, %v3391
        %v4690 = vpop.permute.xlu0 %4689
        %4692 = vset.pattern.permute.xlu0 6
        %4693 = vperm.xlu0 %4692, %v3392
        %v4694 = vpop.permute.xlu0 %4693
        %4696 = vset.pattern.permute.xlu0 6
        %4697 = vperm.xlu0 %4696, %v3393
        %v4698 = vpop.permute.xlu0 %4697
        %4700 = vset.pattern.permute.xlu0 6
        %4701 = vperm.xlu0 %4700, %v3394
        %v4702 = vpop.permute.xlu0 %4701
        %4704 = vset.pattern.permute.xlu0 6
        %4705 = vperm.xlu0 %4704, %v3395
        %v4706 = vpop.permute.xlu0 %4705
        %4708 = vset.pattern.permute.xlu0 6
        %4709 = vperm.xlu0 %4708, %v3396
        %v4710 = vpop.permute.xlu0 %4709
        %4712 = vset.pattern.permute.xlu0 6
        %4713 = vperm.xlu0 %4712, %v3397
        %v4714 = vpop.permute.xlu0 %4713
        %4716 = vset.pattern.permute.xlu0 6
        %4717 = vperm.xlu0 %4716, %v3398
        %v4718 = vpop.permute.xlu0 %4717
        %4720 = vset.pattern.permute.xlu0 6
        %4721 = vperm.xlu0 %4720, %v3399
        %v4722 = vpop.permute.xlu0 %4721
        %4724 = vset.pattern.permute.xlu0 6
        %4725 = vperm.xlu0 %4724, %v3400
        %v4726 = vpop.permute.xlu0 %4725
        %4728 = vset.pattern.permute.xlu0 6
        %4729 = vperm.xlu0 %4728, %v3401
        %v4730 = vpop.permute.xlu0 %4729
        %4732 = vset.pattern.permute.xlu0 6
        %4733 = vperm.xlu0 %4732, %v3402
        %v4734 = vpop.permute.xlu0 %4733
        %4736 = vset.pattern.permute.xlu0 6
        %4737 = vperm.xlu0 %4736, %v3403
        %v4738 = vpop.permute.xlu0 %4737
        %v4740 = vlaneseq
        %v4741 = vshrl.u32 %v4740, 7
        %v4742 = vsub.s32 6, %v4741
        %v4743 = vrot.slane %v3371, %v4742
        %v4744 = vmul.f32 %v4614, %v4743
        %v4745 = vmul.f32 %v4618, %v4743
        %v4746 = vmul.f32 %v4622, %v4743
        %v4747 = vmul.f32 %v4626, %v4743
        %v4748 = vmul.f32 %v4630, %v4743
        %v4749 = vmul.f32 %v4634, %v4743
        %v4750 = vmul.f32 %v4638, %v4743
        %v4751 = vmul.f32 %v4642, %v4743
        %v4752 = vmul.f32 %v4646, %v4743
        %v4753 = vmul.f32 %v4650, %v4743
        %v4754 = vmul.f32 %v4654, %v4743
        %v4755 = vmul.f32 %v4658, %v4743
        %v4756 = vmul.f32 %v4662, %v4743
        %v4757 = vmul.f32 %v4666, %v4743
        %v4758 = vmul.f32 %v4670, %v4743
        %v4759 = vmul.f32 %v4674, %v4743
        %v4760 = vmul.f32 %v4678, %v4743
        %v4761 = vmul.f32 %v4682, %v4743
        %v4762 = vmul.f32 %v4686, %v4743
        %v4763 = vmul.f32 %v4690, %v4743
        %v4764 = vmul.f32 %v4694, %v4743
        %v4765 = vmul.f32 %v4698, %v4743
        %v4766 = vmul.f32 %v4702, %v4743
        %v4767 = vmul.f32 %v4706, %v4743
        %v4768 = vmul.f32 %v4710, %v4743
        %v4769 = vmul.f32 %v4714, %v4743
        %v4770 = vmul.f32 %v4718, %v4743
        %v4771 = vmul.f32 %v4722, %v4743
        %v4772 = vmul.f32 %v4726, %v4743
        %v4773 = vmul.f32 %v4730, %v4743
        %v4774 = vmul.f32 %v4734, %v4743
        %v4775 = vmul.f32 %v4738, %v4743
        %v4776 = vadd.f32 %v4580, %v4744
        %v4777 = vadd.f32 %v4581, %v4745
        %v4778 = vadd.f32 %v4582, %v4746
        %v4779 = vadd.f32 %v4583, %v4747
        %v4780 = vadd.f32 %v4584, %v4748
        %v4781 = vadd.f32 %v4585, %v4749
        %v4782 = vadd.f32 %v4586, %v4750
        %v4783 = vadd.f32 %v4587, %v4751
        %v4784 = vadd.f32 %v4588, %v4752
        %v4785 = vadd.f32 %v4589, %v4753
        %v4786 = vadd.f32 %v4590, %v4754
        %v4787 = vadd.f32 %v4591, %v4755
        %v4788 = vadd.f32 %v4592, %v4756
        %v4789 = vadd.f32 %v4593, %v4757
        %v4790 = vadd.f32 %v4594, %v4758
        %v4791 = vadd.f32 %v4595, %v4759
        %v4792 = vadd.f32 %v4596, %v4760
        %v4793 = vadd.f32 %v4597, %v4761
        %v4794 = vadd.f32 %v4598, %v4762
        %v4795 = vadd.f32 %v4599, %v4763
        %v4796 = vadd.f32 %v4600, %v4764
        %v4797 = vadd.f32 %v4601, %v4765
        %v4798 = vadd.f32 %v4602, %v4766
        %v4799 = vadd.f32 %v4603, %v4767
        %v4800 = vadd.f32 %v4604, %v4768
        %v4801 = vadd.f32 %v4605, %v4769
        %v4802 = vadd.f32 %v4606, %v4770
        %v4803 = vadd.f32 %v4607, %v4771
        %v4804 = vadd.f32 %v4608, %v4772
        %v4805 = vadd.f32 %v4609, %v4773
        %v4806 = vadd.f32 %v4610, %v4774
        %v4807 = vadd.f32 %v4611, %v4775
        %4808 = vset.pattern.permute.xlu0 7
        %4809 = vperm.xlu0 %4808, %v3372
        %v4810 = vpop.permute.xlu0 %4809
        %4812 = vset.pattern.permute.xlu0 7
        %4813 = vperm.xlu0 %4812, %v3373
        %v4814 = vpop.permute.xlu0 %4813
        %4816 = vset.pattern.permute.xlu0 7
        %4817 = vperm.xlu0 %4816, %v3374
        %v4818 = vpop.permute.xlu0 %4817
        %4820 = vset.pattern.permute.xlu0 7
        %4821 = vperm.xlu0 %4820, %v3375
        %v4822 = vpop.permute.xlu0 %4821
        %4824 = vset.pattern.permute.xlu0 7
        %4825 = vperm.xlu0 %4824, %v3376
        %v4826 = vpop.permute.xlu0 %4825
        %4828 = vset.pattern.permute.xlu0 7
        %4829 = vperm.xlu0 %4828, %v3377
        %v4830 = vpop.permute.xlu0 %4829
        %4832 = vset.pattern.permute.xlu0 7
        %4833 = vperm.xlu0 %4832, %v3378
        %v4834 = vpop.permute.xlu0 %4833
        %4836 = vset.pattern.permute.xlu0 7
        %4837 = vperm.xlu0 %4836, %v3379
        %v4838 = vpop.permute.xlu0 %4837
        %4840 = vset.pattern.permute.xlu0 7
        %4841 = vperm.xlu0 %4840, %v3380
        %v4842 = vpop.permute.xlu0 %4841
        %4844 = vset.pattern.permute.xlu0 7
        %4845 = vperm.xlu0 %4844, %v3381
        %v4846 = vpop.permute.xlu0 %4845
        %4848 = vset.pattern.permute.xlu0 7
        %4849 = vperm.xlu0 %4848, %v3382
        %v4850 = vpop.permute.xlu0 %4849
        %4852 = vset.pattern.permute.xlu0 7
        %4853 = vperm.xlu0 %4852, %v3383
        %v4854 = vpop.permute.xlu0 %4853
        %4856 = vset.pattern.permute.xlu0 7
        %4857 = vperm.xlu0 %4856, %v3384
        %v4858 = vpop.permute.xlu0 %4857
        %4860 = vset.pattern.permute.xlu0 7
        %4861 = vperm.xlu0 %4860, %v3385
        %v4862 = vpop.permute.xlu0 %4861
        %4864 = vset.pattern.permute.xlu0 7
        %4865 = vperm.xlu0 %4864, %v3386
        %v4866 = vpop.permute.xlu0 %4865
        %4868 = vset.pattern.permute.xlu0 7
        %4869 = vperm.xlu0 %4868, %v3387
        %v4870 = vpop.permute.xlu0 %4869
        %4872 = vset.pattern.permute.xlu0 7
        %4873 = vperm.xlu0 %4872, %v3388
        %v4874 = vpop.permute.xlu0 %4873
        %4876 = vset.pattern.permute.xlu0 7
        %4877 = vperm.xlu0 %4876, %v3389
        %v4878 = vpop.permute.xlu0 %4877
        %4880 = vset.pattern.permute.xlu0 7
        %4881 = vperm.xlu0 %4880, %v3390
        %v4882 = vpop.permute.xlu0 %4881
        %4884 = vset.pattern.permute.xlu0 7
        %4885 = vperm.xlu0 %4884, %v3391
        %v4886 = vpop.permute.xlu0 %4885
        %4888 = vset.pattern.permute.xlu0 7
        %4889 = vperm.xlu0 %4888, %v3392
        %v4890 = vpop.permute.xlu0 %4889
        %4892 = vset.pattern.permute.xlu0 7
        %4893 = vperm.xlu0 %4892, %v3393
        %v4894 = vpop.permute.xlu0 %4893
        %4896 = vset.pattern.permute.xlu0 7
        %4897 = vperm.xlu0 %4896, %v3394
        %v4898 = vpop.permute.xlu0 %4897
        %4900 = vset.pattern.permute.xlu0 7
        %4901 = vperm.xlu0 %4900, %v3395
        %v4902 = vpop.permute.xlu0 %4901
        %4904 = vset.pattern.permute.xlu0 7
        %4905 = vperm.xlu0 %4904, %v3396
        %v4906 = vpop.permute.xlu0 %4905
        %4908 = vset.pattern.permute.xlu0 7
        %4909 = vperm.xlu0 %4908, %v3397
        %v4910 = vpop.permute.xlu0 %4909
        %4912 = vset.pattern.permute.xlu0 7
        %4913 = vperm.xlu0 %4912, %v3398
        %v4914 = vpop.permute.xlu0 %4913
        %4916 = vset.pattern.permute.xlu0 7
        %4917 = vperm.xlu0 %4916, %v3399
        %v4918 = vpop.permute.xlu0 %4917
        %4920 = vset.pattern.permute.xlu0 7
        %4921 = vperm.xlu0 %4920, %v3400
        %v4922 = vpop.permute.xlu0 %4921
        %4924 = vset.pattern.permute.xlu0 7
        %4925 = vperm.xlu0 %4924, %v3401
        %v4926 = vpop.permute.xlu0 %4925
        %4928 = vset.pattern.permute.xlu0 7
        %4929 = vperm.xlu0 %4928, %v3402
        %v4930 = vpop.permute.xlu0 %4929
        %4932 = vset.pattern.permute.xlu0 7
        %4933 = vperm.xlu0 %4932, %v3403
        %v4934 = vpop.permute.xlu0 %4933
        %v4936 = vlaneseq
        %v4937 = vshrl.u32 %v4936, 7
        %v4938 = vsub.s32 7, %v4937
        %v4939 = vrot.slane %v3371, %v4938
        %v4940 = vmul.f32 %v4810, %v4939
        %v4941 = vmul.f32 %v4814, %v4939
        %v4942 = vmul.f32 %v4818, %v4939
        %v4943 = vmul.f32 %v4822, %v4939
        %v4944 = vmul.f32 %v4826, %v4939
        %v4945 = vmul.f32 %v4830, %v4939
        %v4946 = vmul.f32 %v4834, %v4939
        %v4947 = vmul.f32 %v4838, %v4939
        %v4948 = vmul.f32 %v4842, %v4939
        %v4949 = vmul.f32 %v4846, %v4939
        %v4950 = vmul.f32 %v4850, %v4939
        %v4951 = vmul.f32 %v4854, %v4939
        %v4952 = vmul.f32 %v4858, %v4939
        %v4953 = vmul.f32 %v4862, %v4939
        %v4954 = vmul.f32 %v4866, %v4939
        %v4955 = vmul.f32 %v4870, %v4939
        %v4956 = vmul.f32 %v4874, %v4939
        %v4957 = vmul.f32 %v4878, %v4939
        %v4958 = vmul.f32 %v4882, %v4939
        %v4959 = vmul.f32 %v4886, %v4939
        %v4960 = vmul.f32 %v4890, %v4939
        %v4961 = vmul.f32 %v4894, %v4939
        %v4962 = vmul.f32 %v4898, %v4939
        %v4963 = vmul.f32 %v4902, %v4939
        %v4964 = vmul.f32 %v4906, %v4939
        %v4965 = vmul.f32 %v4910, %v4939
        %v4966 = vmul.f32 %v4914, %v4939
        %v4967 = vmul.f32 %v4918, %v4939
        %v4968 = vmul.f32 %v4922, %v4939
        %v4969 = vmul.f32 %v4926, %v4939
        %v4970 = vmul.f32 %v4930, %v4939
        %v4971 = vmul.f32 %v4934, %v4939
        %v4972 = vadd.f32 %v4776, %v4940
        %v4973 = vadd.f32 %v4777, %v4941
        %v4974 = vadd.f32 %v4778, %v4942
        %v4975 = vadd.f32 %v4779, %v4943
        %v4976 = vadd.f32 %v4780, %v4944
        %v4977 = vadd.f32 %v4781, %v4945
        %v4978 = vadd.f32 %v4782, %v4946
        %v4979 = vadd.f32 %v4783, %v4947
        %v4980 = vadd.f32 %v4784, %v4948
        %v4981 = vadd.f32 %v4785, %v4949
        %v4982 = vadd.f32 %v4786, %v4950
        %v4983 = vadd.f32 %v4787, %v4951
        %v4984 = vadd.f32 %v4788, %v4952
        %v4985 = vadd.f32 %v4789, %v4953
        %v4986 = vadd.f32 %v4790, %v4954
        %v4987 = vadd.f32 %v4791, %v4955
        %v4988 = vadd.f32 %v4792, %v4956
        %v4989 = vadd.f32 %v4793, %v4957
        %v4990 = vadd.f32 %v4794, %v4958
        %v4991 = vadd.f32 %v4795, %v4959
        %v4992 = vadd.f32 %v4796, %v4960
        %v4993 = vadd.f32 %v4797, %v4961
        %v4994 = vadd.f32 %v4798, %v4962
        %v4995 = vadd.f32 %v4799, %v4963
        %v4996 = vadd.f32 %v4800, %v4964
        %v4997 = vadd.f32 %v4801, %v4965
        %v4998 = vadd.f32 %v4802, %v4966
        %v4999 = vadd.f32 %v4803, %v4967
        %v5000 = vadd.f32 %v4804, %v4968
        %v5001 = vadd.f32 %v4805, %v4969
        %v5002 = vadd.f32 %v4806, %v4970
        %v5003 = vadd.f32 %v4807, %v4971
        %v5004 = vld [vmem:[%s5] sm:$0x1]
        %v5006 = vlaneseq
        %v5007 = vshrl.u32 %v5006, 7
        %v5008 = vsub.s32 0, %v5007
        %v5009 = vrot.slane %v5004, %v5008
        %v5011 = vmul.f32 %v4972, %v5009
        %v5012 = vmul.f32 %v4973, %v5009
        %v5013 = vmul.f32 %v4974, %v5009
        %v5014 = vmul.f32 %v4975, %v5009
        %v5015 = vmul.f32 %v4976, %v5009
        %v5016 = vmul.f32 %v4977, %v5009
        %v5017 = vmul.f32 %v4978, %v5009
        %v5018 = vmul.f32 %v4979, %v5009
        %v5019 = vmul.f32 %v4980, %v5009
        %v5020 = vmul.f32 %v4981, %v5009
        %v5021 = vmul.f32 %v4982, %v5009
        %v5022 = vmul.f32 %v4983, %v5009
        %v5023 = vmul.f32 %v4984, %v5009
        %v5024 = vmul.f32 %v4985, %v5009
        %v5025 = vmul.f32 %v4986, %v5009
        %v5026 = vmul.f32 %v4987, %v5009
        %v5027 = vmul.f32 %v4988, %v5009
        %v5028 = vmul.f32 %v4989, %v5009
        %v5029 = vmul.f32 %v4990, %v5009
        %v5030 = vmul.f32 %v4991, %v5009
        %v5031 = vmul.f32 %v4992, %v5009
        %v5032 = vmul.f32 %v4993, %v5009
        %v5033 = vmul.f32 %v4994, %v5009
        %v5034 = vmul.f32 %v4995, %v5009
        %v5035 = vmul.f32 %v4996, %v5009
        %v5036 = vmul.f32 %v4997, %v5009
        %v5037 = vmul.f32 %v4998, %v5009
        %v5038 = vmul.f32 %v4999, %v5009
        %v5039 = vmul.f32 %v5000, %v5009
        %v5040 = vmul.f32 %v5001, %v5009
        %v5041 = vmul.f32 %v5002, %v5009
        %v5042 = vmul.f32 %v5003, %v5009
        %v5043 = vld [vmem:[%s6] sm:$0x1]
        %v5045 = vlaneseq
        %v5046 = vshrl.u32 %v5045, 7
        %v5047 = vsub.s32 0, %v5046
        %v5048 = vrot.slane %v5043, %v5047
        %v5050 = vadd.f32 %v5011, %v5048
        %v5051 = vadd.f32 %v5012, %v5048
        %v5052 = vadd.f32 %v5013, %v5048
        %v5053 = vadd.f32 %v5014, %v5048
        %v5054 = vadd.f32 %v5015, %v5048
        %v5055 = vadd.f32 %v5016, %v5048
        %v5056 = vadd.f32 %v5017, %v5048
        %v5057 = vadd.f32 %v5018, %v5048
        %v5058 = vadd.f32 %v5019, %v5048
        %v5059 = vadd.f32 %v5020, %v5048
        %v5060 = vadd.f32 %v5021, %v5048
        %v5061 = vadd.f32 %v5022, %v5048
        %v5062 = vadd.f32 %v5023, %v5048
        %v5063 = vadd.f32 %v5024, %v5048
        %v5064 = vadd.f32 %v5025, %v5048
        %v5065 = vadd.f32 %v5026, %v5048
        %v5066 = vadd.f32 %v5027, %v5048
        %v5067 = vadd.f32 %v5028, %v5048
        %v5068 = vadd.f32 %v5029, %v5048
        %v5069 = vadd.f32 %v5030, %v5048
        %v5070 = vadd.f32 %v5031, %v5048
        %v5071 = vadd.f32 %v5032, %v5048
        %v5072 = vadd.f32 %v5033, %v5048
        %v5073 = vadd.f32 %v5034, %v5048
        %v5074 = vadd.f32 %v5035, %v5048
        %v5075 = vadd.f32 %v5036, %v5048
        %v5076 = vadd.f32 %v5037, %v5048
        %v5077 = vadd.f32 %v5038, %v5048
        %v5078 = vadd.f32 %v5039, %v5048
        %v5079 = vadd.f32 %v5040, %v5048
        %v5080 = vadd.f32 %v5041, %v5048
        %v5081 = vadd.f32 %v5042, %v5048
        %vm5082 = vcmask 130048
        %5083 = vst.msk [vmem:[%s271] sm:$0xff] %vm5082, %v5050
        %5084 = vst.msk [vmem:[%s271 + $0x8] sm:$0xff] %vm5082, %v5051
        %5085 = vst.msk [vmem:[%s271 + $0x10] sm:$0xff] %vm5082, %v5052
        %5086 = vst.msk [vmem:[%s271 + $0x18] sm:$0xff] %vm5082, %v5053
        %5087 = vst.msk [vmem:[%s271 + $0x20] sm:$0xff] %vm5082, %v5054
        %5088 = vst.msk [vmem:[%s271 + $0x28] sm:$0xff] %vm5082, %v5055
        %5089 = vst.msk [vmem:[%s271 + $0x30] sm:$0xff] %vm5082, %v5056
        %5090 = vst.msk [vmem:[%s271 + $0x38] sm:$0xff] %vm5082, %v5057
        %5091 = vst.msk [vmem:[%s271 + $0x40] sm:$0xff] %vm5082, %v5058
        %5092 = vst.msk [vmem:[%s271 + $0x48] sm:$0xff] %vm5082, %v5059
        %5093 = vst.msk [vmem:[%s271 + $0x50] sm:$0xff] %vm5082, %v5060
        %5094 = vst.msk [vmem:[%s271 + $0x58] sm:$0xff] %vm5082, %v5061
        %5095 = vst.msk [vmem:[%s271 + $0x60] sm:$0xff] %vm5082, %v5062
        %5096 = vst.msk [vmem:[%s271 + $0x68] sm:$0xff] %vm5082, %v5063
        %5097 = vst.msk [vmem:[%s271 + $0x70] sm:$0xff] %vm5082, %v5064
        %5098 = vst.msk [vmem:[%s271 + $0x78] sm:$0xff] %vm5082, %v5065
        %5099 = vst.msk [vmem:[%s271 + $0x80] sm:$0xff] %vm5082, %v5066
        %5100 = vst.msk [vmem:[%s271 + $0x88] sm:$0xff] %vm5082, %v5067
        %5101 = vst.msk [vmem:[%s271 + $0x90] sm:$0xff] %vm5082, %v5068
        %5102 = vst.msk [vmem:[%s271 + $0x98] sm:$0xff] %vm5082, %v5069
        %5103 = vst.msk [vmem:[%s271 + $0xa0] sm:$0xff] %vm5082, %v5070
        %5104 = vst.msk [vmem:[%s271 + $0xa8] sm:$0xff] %vm5082, %v5071
        %5105 = vst.msk [vmem:[%s271 + $0xb0] sm:$0xff] %vm5082, %v5072
        %5106 = vst.msk [vmem:[%s271 + $0xb8] sm:$0xff] %vm5082, %v5073
        %5107 = vst.msk [vmem:[%s271 + $0xc0] sm:$0xff] %vm5082, %v5074
        %5108 = vst.msk [vmem:[%s271 + $0xc8] sm:$0xff] %vm5082, %v5075
        %5109 = vst.msk [vmem:[%s271 + $0xd0] sm:$0xff] %vm5082, %v5076
        %5110 = vst.msk [vmem:[%s271 + $0xd8] sm:$0xff] %vm5082, %v5077
        %5111 = vst.msk [vmem:[%s271 + $0xe0] sm:$0xff] %vm5082, %v5078
        %5112 = vst.msk [vmem:[%s271 + $0xe8] sm:$0xff] %vm5082, %v5079
        %5113 = vst.msk [vmem:[%s271 + $0xf0] sm:$0xff] %vm5082, %v5080
        %5114 = vst.msk [vmem:[%s271 + $0xf8] sm:$0xff] %vm5082, %v5081
        %s5115 = sand.u32 %s181, 1
        %s5116 = scalar_lea.sflag [#allocation3], %s5115
        %s5117 = sand.u32 %s181, 1
        %s5118 = smul.addr %s5117, 256
        %s5119 = scalar_lea.vmem [#allocation2], %s5118
        // Predicated region
        $region49: #{tpu_custom_call.1} parent=47 // pred_check
          %p5120 = pneg %p191
        $region50: #{tpu_custom_call.1} parent=47 // pred_check_branch
          %5122 = sbr.rel (%p5120) target = $region52
        $region51: #{tpu_custom_call.1} parent=47 // pred_region
          %s5124 = ssub.s32 4096, 4096
          %5125 = vsyncadd %s5116, %s5124
          %s5126 = smul.addr %s21, 32
          %s5127 = smul.addr %s5126, 128
          %s5128 = scalar_lea.hbm %s7, %s5127
          %s5129 = sshll.u32 %s5119, 4
          %s5130 = int_to_ptr.vmem [resolvable:$true] %s5129
          %5135 = dma.vmem_to_hbm [thread:$0]  %s5130, 4096, %s5128, %s5116, 128, 128, 8
        $region52: #{tpu_custom_call.1} parent=47 // pred_fallthru
          _
      $region48: #{tpu_custom_call.1} parent=5 // pred_fallthru
        _
      %p5136 = scmp.le.s32.totalorder 2, %s16
      // Predicated region
      $region53: #{tpu_custom_call.1} parent=5 // pred_check
        %p5137 = pneg %p5136
      $region54: #{tpu_custom_call.1} parent=5 // pred_check_branch
        %5139 = sbr.rel (%p5137) target = $region56
      $region55: #{tpu_custom_call.1} parent=5 // pred_region
        %s5140 = ssub.s32 %s16, 2
        // Predicated region
        $region57: #{tpu_custom_call.1} parent=55 // pred_check
          %p5141 = pneg %p197
        $region58: #{tpu_custom_call.1} parent=55 // pred_check_branch
          %5143 = sbr.rel (%p5141) target = $region60
        $region59: #{tpu_custom_call.1} parent=55 // pred_region
          %s5144 = sand.u32 %s182, 1
          %s5145 = scalar_lea.sflag [#allocation3], %s5144
          %s5146 = sand.u32 %s182, 1
          %s5147 = smul.addr %s5146, 256
          %s5148 = scalar_lea.vmem [#allocation2], %s5147
          %5149 = dma.done %s5145, 4096
        $region60: #{tpu_custom_call.1} parent=55 // pred_fallthru
          _
      $region56: #{tpu_custom_call.1} parent=5 // pred_fallthru
        _
    $region6: #{tpu_custom_call.1} parent=1 // loop_footer
      %s20 = sadd.s32 1, %s16
    $region7: #{tpu_custom_call.1} parent=1 // loop_footer_branch
      %15 = sbr.rel target = $region3
    $region8: #{tpu_custom_call.1} parent=1 // loop_exit
      _
    %5150 = vsyncpa [#allocation3], 1
    %s5151 = scalar_lea.sflag [#allocation3], 1
    %5152 = vsyncpa %s5151, 1

</llo_original>
